<compile_context>
chip_gen: v7x
topology: tpu7x:2x2x1
jax: 0.10.0
libtpu: 0.0.40
codegen_flags: <defaults>
</compile_context>

<pallas_src>
import math

import jax
import jax.numpy as jnp
from jax.experimental import pallas as pl
from jax.experimental.pallas import tpu as pltpu


_LN_EPS = 1e-5
_ROW_TILE_MAX = 512      # row tile for pointwise / matmul kernels (85%+ of HBM roofline)
_SEQ_TILE_MAX = 128      # sequence-batch tile for the LSTM kernel (sized for v7x VMEM)


def _round_up(x, m):
    return ((x + m - 1) // m) * m


def _gelu(x):
    # TODO(synk): nn.GELU() default is the exact erf form; the tanh approximation is
    # used for portable Mosaic lowering (max abs deviation ~3e-3).
    c = math.sqrt(2.0 / math.pi)
    return 0.5 * x * (1.0 + jnp.tanh(c * (x + 0.044715 * x * x * x)))


# ---------------------------------------------------------------------------
# Pallas kernels
# ---------------------------------------------------------------------------
def _layernorm_kernel(x_ref, g_ref, b_ref, o_ref):
    x = x_ref[...]
    mu = jnp.mean(x, axis=-1, keepdims=True)
    xc = x - mu
    var = jnp.mean(xc * xc, axis=-1, keepdims=True)
    o_ref[...] = (xc * jax.lax.rsqrt(var + _LN_EPS) * g_ref[...]
                  + b_ref[...]).astype(o_ref.dtype)


def _bilstm_kernel(x_ref, w_ref, b_ref, o_ref, h_scr, c_scr):
    """Fused bidirectional single-layer LSTM over one tile of sequences.

    x_ref : (T, Bs, C)      time-major input tile
    w_ref : (2C+2H, 8H)     rows = [x_fwd | x_bwd | h_fwd | h_bwd],
                            cols = gate-major [i_f,i_b,f_f,f_b,g_f,g_b,o_f,o_b]
    b_ref : (1, 8H)         combined biases, same column layout
    o_ref : (T, Bs, 2H)     out[t] = [h_fwd(t) | h_bwd(t)]   (PyTorch bidirectional cat)
    h_scr, c_scr : (Bs, 2H) VMEM state carries, layout [fwd | bwd]
    """
    T = x_ref.shape[0]
    Hd = h_scr.shape[-1] // 2

    h_scr[...] = jnp.zeros_like(h_scr)
    c_scr[...] = jnp.zeros_like(c_scr)

    def step(s, carry):
        x_f = x_ref[s]                       # forward direction consumes t = s
        x_b = x_ref[T - 1 - s]               # backward direction consumes t = T-1-s
        zin = jnp.concatenate([x_f, x_b, h_scr[...]], axis=-1)    # (Bs, 2C+2H)
        gates = (jnp.dot(zin, w_ref[...], preferred_element_type=jnp.float32)
                 + b_ref[...])                                    # (Bs, 8H)
        i = jax.nn.sigmoid(gates[:, 0 * Hd:2 * Hd])
        f = jax.nn.sigmoid(gates[:, 2 * Hd:4 * Hd])
        g = jnp.tanh(gates[:, 4 * Hd:6 * Hd])
        o = jax.nn.sigmoid(gates[:, 6 * Hd:8 * Hd])
        c_new = f * c_scr[...] + i * g
        h_new = o * jnp.tanh(c_new)
        c_scr[...] = c_new
        h_scr[...] = h_new
        # TODO(synk): the two (Bs, Hd) per-step stores are 32-lane masked vst;
        # buffering a few timesteps would make them lane-dense (minor at these sizes).
        o_ref[s, :, 0:Hd] = h_new[:, 0:Hd]
        o_ref[T - 1 - s, :, Hd:2 * Hd] = h_new[:, Hd:2 * Hd]
        return carry

    jax.lax.fori_loop(0, T, step, 0, unroll=(T <= 16))


def _fc_mlp_res_kernel(v_ref, hz_ref, r_ref,
                       wv_ref, wh_ref, bfc_ref,
                       w1_ref, b1_ref, w2_ref, b2_ref, o_ref):
    # y = BiLSTM2D.fc(cat(v, h)) ;  out = Mlp(y) + residual   (cat fused away)
    y = (jnp.dot(v_ref[...], wv_ref[...], preferred_element_type=jnp.float32)
         + jnp.dot(hz_ref[...], wh_ref[...], preferred_element_type=jnp.float32)
         + bfc_ref[...])
    z = _gelu(jnp.dot(y, w1_ref[...], preferred_element_type=jnp.float32) + b1_ref[...])
    z = jnp.dot(z, w2_ref[...], preferred_element_type=jnp.float32) + b2_ref[...]
    # TODO(synk): Mlp dropout (p=0.1) is train-mode only; identity at inference.
    o_ref[...] = (z + r_ref[...]).astype(o_ref.dtype)


def _ln_mlp_res_kernel(x_ref, g_ref, bt_ref,
                       w1_ref, b1_ref, w2_ref, b2_ref, o_ref):
    # out = Mlp(LayerNorm(x)) + x     (second residual block, fully fused)
    x = x_ref[...]
    mu = jnp.mean(x, axis=-1, keepdims=True)
    xc = x - mu
    var = jnp.mean(xc * xc, axis=-1, keepdims=True)
    xn = xc * jax.lax.rsqrt(var + _LN_EPS) * g_ref[...] + bt_ref[...]
    z = _gelu(jnp.dot(xn, w1_ref[...], preferred_element_type=jnp.float32) + b1_ref[...])
    z = jnp.dot(z, w2_ref[...], preferred_element_type=jnp.float32) + b2_ref[...]
    o_ref[...] = (z + x).astype(o_ref.dtype)


# ---------------------------------------------------------------------------
# pallas_call wrappers
# ---------------------------------------------------------------------------
def _row_tiled_call(kernel, row_inputs, const_inputs, out_cols):
    """Tile `row_inputs` (all (M, K_i)) over rows; pass `const_inputs` untiled."""
    M = row_inputs[0].shape[0]
    tm = min(_ROW_TILE_MAX, _round_up(M, 8))
    Mp = _round_up(M, tm)
    if Mp != M:
        row_inputs = [jnp.pad(a, ((0, Mp - M), (0, 0))) for a in row_inputs]
    in_specs = (
        [pl.BlockSpec((tm, a.shape[1]), lambda i: (i, 0)) for a in row_inputs]
        + [pl.BlockSpec(c.shape, lambda i: (0, 0)) for c in const_inputs]
    )
    out = pl.pallas_call(
        kernel,
        out_shape=jax.ShapeDtypeStruct((Mp, out_cols), jnp.float32),
        grid_spec=pltpu.PrefetchScalarGridSpec(
            num_scalar_prefetch=0,
            grid=(Mp // tm,),
            in_specs=in_specs,
            out_specs=pl.BlockSpec((tm, out_cols), lambda i: (i, 0)),
        ),
        compiler_params=pltpu.CompilerParams(
            dimension_semantics=("parallel",),      # engages both v7x TensorCores
        ),
    )(*row_inputs, *const_inputs)
    return out[:M] if Mp != M else out


def _bilstm_call(x_tm, w_all, b_all, hidden):
    """x_tm: (T, Bseq, C) time-major -> (T, Bseq, 2*hidden)."""
    T, Bseq, C = x_tm.shape
    tile = min(_SEQ_TILE_MAX, _round_up(Bseq, 8))
    Bp = _round_up(Bseq, tile)
    if Bp != Bseq:
        x_tm = jnp.pad(x_tm, ((0, 0), (0, Bp - Bseq), (0, 0)))
    out = pl.pallas_call(
        _bilstm_kernel,
        out_shape=jax.ShapeDtypeStruct((T, Bp, 2 * hidden), jnp.float32),
        grid_spec=pltpu.PrefetchScalarGridSpec(
            num_scalar_prefetch=0,
            grid=(Bp // tile,),
            in_specs=[
                pl.BlockSpec((T, tile, C), lambda i: (0, i, 0)),
                pl.BlockSpec(w_all.shape, lambda i: (0, 0)),
                pl.BlockSpec(b_all.shape, lambda i: (0, 0)),
            ],
            out_specs=pl.BlockSpec((T, tile, 2 * hidden), lambda i: (0, i, 0)),
            scratch_shapes=[
                pltpu.VMEM((tile, 2 * hidden), jnp.float32),   # h carry [fwd|bwd]
                pltpu.VMEM((tile, 2 * hidden), jnp.float32),   # c carry [fwd|bwd]
            ],
        ),
        compiler_params=pltpu.CompilerParams(
            dimension_semantics=("parallel",),      # sequence tiles are independent
            vmem_limit_bytes=32 * 1024 * 1024,      # explicit, fits v5e/v6e/v7x
        ),
    )(x_tm, w_all, b_all)
    return out if Bp == Bseq else out[:, :Bseq, :]


# ---------------------------------------------------------------------------
# Weight packing (PyTorch layout -> fused bidirectional layout)
# ---------------------------------------------------------------------------
def _interleave_gate_cols(a_fwd, a_bwd):
    """(rows, 4H) fwd/bwd -> (rows, 8H) gate-major [i_f,i_b,f_f,f_b,g_f,g_b,o_f,o_b]."""
    rows, h4 = a_fwd.shape
    H = h4 // 4
    stacked = jnp.stack([a_fwd.reshape(rows, 4, H), a_bwd.reshape(rows, 4, H)], axis=2)
    return stacked.reshape(rows, 8 * H)


def _pack_bilstm(w_ih_f, w_hh_f, b_f, w_ih_b, w_hh_b, b_b):
    """Build the single (2C+2H, 8H) weight + (1, 8H) bias used by _bilstm_kernel."""
    h4, C = w_ih_f.shape
    H = h4 // 4
    zc = jnp.zeros((C, h4), jnp.float32)
    zh = jnp.zeros((H, h4), jnp.float32)
    wx = _interleave_gate_cols(jnp.concatenate([w_ih_f.T, zc], axis=0),
                               jnp.concatenate([zc, w_ih_b.T], axis=0))   # (2C, 8H)
    wh = _interleave_gate_cols(jnp.concatenate([w_hh_f.T, zh], axis=0),
                               jnp.concatenate([zh, w_hh_b.T], axis=0))   # (2H, 8H)
    w_all = jnp.concatenate([wx, wh], axis=0)                             # (2C+2H, 8H)
    b_all = _interleave_gate_cols(b_f[None, :], b_b[None, :])             # (1, 8H)
    return w_all, b_all


# ---------------------------------------------------------------------------
# Parameter init (matches module __init__: xavier LSTM/fc weights, zero biases,
# default Linear init for the un-reinitialized Mlp, default affine LayerNorm)
# ---------------------------------------------------------------------------
def _xavier_normal(key, shape):
    fan_out, fan_in = shape
    std = math.sqrt(2.0 / (fan_in + fan_out))
    return std * jax.random.normal(key, shape, dtype=jnp.float32)


def _linear_default(key, fan_in, fan_out):
    kw, kb = jax.random.split(key)
    bound = 1.0 / math.sqrt(fan_in)
    w = jax.random.uniform(kw, (fan_out, fan_in), jnp.float32, -bound, bound)
    b = jax.random.uniform(kb, (fan_out,), jnp.float32, -bound, bound)
    return w, b


def init_spectral_unit_params(key, in_feats, out_feats):
    assert in_feats == out_feats, "spectral_Unit requires in_feats == out_feats"
    C, H = in_feats, out_feats
    keys = jax.random.split(key, 6)
    params = {}

    # BiLSTM2D: two bidirectional single-layer LSTMs (xavier weights, zero biases).
    # dropout=0.5 in nn.LSTM is a no-op for num_layers == 1.
    for idx, name in enumerate(("lstm_v", "lstm_h")):
        kf1, kf2, kb1, kb2 = jax.random.split(keys[idx], 4)
        w_ih_f = _xavier_normal(kf1, (4 * H, C))
        w_hh_f = _xavier_normal(kf2, (4 * H, H))
        w_ih_b = _xavier_normal(kb1, (4 * H, C))
        w_hh_b = _xavier_normal(kb2, (4 * H, H))
        zero_b = jnp.zeros((4 * H,), jnp.float32)   # b_ih + b_hh (both zero-init)
        w_all, b_all = _pack_bilstm(w_ih_f, w_hh_f, zero_b, w_ih_b, w_hh_b, zero_b)
        params[name + "_w"], params[name + "_b"] = w_all, b_all

    # BiLSTM2D.fc : Linear(4*in_feats, out_feats), split so cat(v,h) never hits HBM.
    fc_w = _xavier_normal(keys[2], (H, 4 * C))
    params["fc_wv"] = jnp.transpose(fc_w[:, :2 * H])   # (2H, H)
    params["fc_wh"] = jnp.transpose(fc_w[:, 2 * H:])   # (2H, H)
    params["fc_b"] = jnp.zeros((1, H), jnp.float32)

    # Mlp(out_feats, out_feats): fc1 H->4H, fc2 4H->H (shared by both residual blocks).
    w1, b1 = _linear_default(keys[3], H, 4 * H)
    w2, b2 = _linear_default(keys[4], 4 * H, H)
    params["mlp_w1"], params["mlp_b1"] = jnp.transpose(w1), b1[None, :]
    params["mlp_w2"], params["mlp_b2"] = jnp.transpose(w2), b2[None, :]

    # LayerNorm(out_feats): default affine init (shared by both applications).
    params["ln_g"] = jnp.ones((1, H), jnp.float32)
    params["ln_b"] = jnp.zeros((1, H), jnp.float32)
    return params


# ---------------------------------------------------------------------------
# spectral_Unit forward
# ---------------------------------------------------------------------------
def spectral_unit_forward(x, params):
    B, N, C = x.shape
    hid = params["fc_b"].shape[-1]
    assert C == hid, "residual path requires in_feats == out_feats"
    Hs = int(round(math.sqrt(N)))
    Ws = Hs
    assert Hs * Ws == N, "token grid must be square (N = H*W)"

    x2d = x.reshape(B * N, C)

    # ---- block 1: h = x ; x = LayerNorm(x) ----
    xn2d = _row_tiled_call(_layernorm_kernel, [x2d],
                           [params["ln_g"], params["ln_b"]], C)

    # ---- x = BiLSTM2D(x) (vertical + horizontal bidirectional passes) ----
    xg = xn2d.reshape(B, Hs, Ws, C)

    # vertical: one sequence per (batch, column), time runs over rows (time-major).
    xv = jnp.transpose(xg, (1, 0, 2, 3)).reshape(Hs, B * Ws, C)
    v_tm = _bilstm_call(xv, params["lstm_v_w"], params["lstm_v_b"], hid)
    v = jnp.transpose(v_tm.reshape(Hs, B, Ws, 2 * hid), (1, 0, 2, 3))   # (B,Hs,Ws,2H)

    # horizontal: one sequence per (batch, row), time runs over columns (time-major).
    xh = jnp.transpose(xg, (2, 0, 1, 3)).reshape(Ws, B * Hs, C)
    h_tm = _bilstm_call(xh, params["lstm_h_w"], params["lstm_h_b"], hid)
    hz = jnp.transpose(h_tm.reshape(Ws, B, Hs, 2 * hid), (1, 2, 0, 3))  # (B,Hs,Ws,2H)

    # ---- fc(cat(v,h)) -> Mlp -> + residual(original x), one fused kernel ----
    y2d = _row_tiled_call(
        _fc_mlp_res_kernel,
        [v.reshape(B * N, 2 * hid), hz.reshape(B * N, 2 * hid), x2d],
        [params["fc_wv"], params["fc_wh"], params["fc_b"],
         params["mlp_w1"], params["mlp_b1"], params["mlp_w2"], params["mlp_b2"]],
        hid)

    # ---- block 2: h = x ; x = LayerNorm(x) ; x = Mlp(x) ; x = x + h, fused ----
    out2d = _row_tiled_call(
        _ln_mlp_res_kernel,
        [y2d],
        [params["ln_g"], params["ln_b"],
         params["mlp_w1"], params["mlp_b1"], params["mlp_w2"], params["mlp_b2"]],
        hid)

    return out2d.reshape(B, N, hid)


if __name__ == "__main__":
    B, N = 2, 16                  # 4 x 4 token grid
    in_feats = out_feats = 32     # spectral_Unit requires in_feats == out_feats

    key = jax.random.PRNGKey(0)
    kx, kp = jax.random.split(key)
    x = jax.random.normal(kx, (B, N, in_feats), dtype=jnp.float32)
    params = init_spectral_unit_params(kp, in_feats, out_feats)

    fwd = jax.jit(spectral_unit_forward)
    out = jax.block_until_ready(fwd(x, params))

    assert out.shape == (B, N, out_feats), out.shape
    assert bool(jnp.all(jnp.isfinite(out)))
    print("KERNEL_OK")
</pallas_src>

<mosaic_0001>
module attributes {stable_mosaic.version = 11 : i64} {
  func.func @_layernorm_kernel(%arg0: i32, %arg1: memref<32x32xf32, #tpu.memory_space<vmem>>, %arg2: memref<1x32xf32, #tpu.memory_space<vmem>>, %arg3: memref<1x32xf32, #tpu.memory_space<vmem>>, %arg4: memref<32x32xf32, #tpu.memory_space<vmem>>) attributes {dimension_semantics = [#tpu.dimension_semantics<parallel>], iteration_bounds = array<i64: 1>, scalar_prefetch = 0 : i64, scratch_operands = 0 : i64, tpu.core_type = #tpu.core_type<tc>, window_params = [{transform_indices = @transform_0, window_bounds = array<i64: 32, 32>}, {pipeline_mode = #tpu.pipeline_mode<synchronous>, transform_indices = @transform_1, window_bounds = array<i64: 1, 32>}, {pipeline_mode = #tpu.pipeline_mode<synchronous>, transform_indices = @transform_2, window_bounds = array<i64: 1, 32>}, {transform_indices = @transform_3, window_bounds = array<i64: 32, 32>}]} {
    %c0 = arith.constant 0 : index
    %c0_0 = arith.constant 0 : index
    %0 = vector.load %arg1[%c0, %c0_0] : memref<32x32xf32, #tpu.memory_space<vmem>>, vector<32x32xf32>
    %cst = arith.constant dense<0.000000e+00> : vector<32xf32>
    %1 = vector.multi_reduction <add>, %0, %cst [1] : vector<32x32xf32> to vector<32xf32>
    %2 = vector.shape_cast %1 : vector<32xf32> to vector<32x1xf32>
    %cst_1 = arith.constant 3.200000e+01 : f32
    %3 = vector.broadcast %cst_1 : f32 to vector<32x1xf32>
    %4 = arith.divf %2, %3 : vector<32x1xf32>
    %5 = vector.broadcast %4 : vector<32x1xf32> to vector<32x32xf32>
    %6 = arith.subf %0, %5 : vector<32x32xf32>
    %7 = arith.mulf %6, %6 : vector<32x32xf32>
    %cst_2 = arith.constant dense<0.000000e+00> : vector<32xf32>
    %8 = vector.multi_reduction <add>, %7, %cst_2 [1] : vector<32x32xf32> to vector<32xf32>
    %9 = vector.shape_cast %8 : vector<32xf32> to vector<32x1xf32>
    %cst_3 = arith.constant 3.200000e+01 : f32
    %10 = vector.broadcast %cst_3 : f32 to vector<32x1xf32>
    %11 = arith.divf %9, %10 : vector<32x1xf32>
    %cst_4 = arith.constant 9.99999974E-6 : f32
    %12 = vector.broadcast %cst_4 : f32 to vector<32x1xf32>
    %13 = arith.addf %11, %12 : vector<32x1xf32>
    %14 = math.rsqrt %13 : vector<32x1xf32>
    %15 = vector.broadcast %14 : vector<32x1xf32> to vector<32x32xf32>
    %16 = arith.mulf %6, %15 : vector<32x32xf32>
    %c0_5 = arith.constant 0 : index
    %c0_6 = arith.constant 0 : index
    %17 = vector.load %arg2[%c0_5, %c0_6] : memref<1x32xf32, #tpu.memory_space<vmem>>, vector<1x32xf32>
    %18 = vector.broadcast %17 : vector<1x32xf32> to vector<32x32xf32>
    %19 = arith.mulf %16, %18 : vector<32x32xf32>
    %c0_7 = arith.constant 0 : index
    %c0_8 = arith.constant 0 : index
    %20 = vector.load %arg3[%c0_7, %c0_8] : memref<1x32xf32, #tpu.memory_space<vmem>>, vector<1x32xf32>
    %21 = vector.broadcast %20 : vector<1x32xf32> to vector<32x32xf32>
    %22 = arith.addf %19, %21 : vector<32x32xf32>
    %c0_9 = arith.constant 0 : index
    %c0_10 = arith.constant 0 : index
    %23 = vector.load %arg4[%c0_9, %c0_10] : memref<32x32xf32, #tpu.memory_space<vmem>>, vector<32x32xf32>
    tpu.vector_store %arg4[%c0_9, %c0_10], %22 {strides = array<i32>} : memref<32x32xf32, #tpu.memory_space<vmem>>, vector<32x32xf32>,
    return
  }
  func.func @transform_0(%arg0: i32) -> (i32, i32) {
    %c0_i32 = arith.constant 0 : i32
    %c0_i32_0 = arith.constant 0 : i32
    return %arg0, %c0_i32 : i32, i32
  }
  func.func @transform_1(%arg0: i32) -> (i32, i32) {
    %c0_i32 = arith.constant 0 : i32
    %c0_i32_0 = arith.constant 0 : i32
    %c0_i32_1 = arith.constant 0 : i32
    return %c0_i32, %c0_i32_0 : i32, i32
  }
  func.func @transform_2(%arg0: i32) -> (i32, i32) {
    %c0_i32 = arith.constant 0 : i32
    %c0_i32_0 = arith.constant 0 : i32
    %c0_i32_1 = arith.constant 0 : i32
    return %c0_i32, %c0_i32_0 : i32, i32
  }
  func.func @transform_3(%arg0: i32) -> (i32, i32) {
    %c0_i32 = arith.constant 0 : i32
    %c0_i32_0 = arith.constant 0 : i32
    return %arg0, %c0_i32 : i32, i32
  }
}

module attributes {stable_mosaic.version = 11 : i64} {
  func.func @_bilstm_kernel(%arg0: i32, %arg1: memref<4x8x32xf32, #tpu.memory_space<vmem>>, %arg2: memref<128x256xf32, #tpu.memory_space<vmem>>, %arg3: memref<1x256xf32, #tpu.memory_space<vmem>>, %arg4: memref<4x8x64xf32, #tpu.memory_space<vmem>>, %arg5: memref<8x64xf32, #tpu.memory_space<vmem>>, %arg6: memref<8x64xf32, #tpu.memory_space<vmem>>) attributes {dimension_semantics = [#tpu.dimension_semantics<parallel>], iteration_bounds = array<i64: 1>, scalar_prefetch = 0 : i64, scratch_operands = 2 : i64, tpu.core_type = #tpu.core_type<tc>, window_params = [{transform_indices = @transform_0, window_bounds = array<i64: 4, 8, 32>}, {pipeline_mode = #tpu.pipeline_mode<synchronous>, transform_indices = @transform_1, window_bounds = array<i64: 128, 256>}, {pipeline_mode = #tpu.pipeline_mode<synchronous>, transform_indices = @transform_2, window_bounds = array<i64: 1, 256>}, {transform_indices = @transform_3, window_bounds = array<i64: 4, 8, 64>}]} {
    %cst = arith.constant 0.000000e+00 : f32
    %0 = vector.broadcast %cst : f32 to vector<8x64xf32>
    %c0 = arith.constant 0 : index
    %c0_0 = arith.constant 0 : index
    %1 = vector.load %arg5[%c0, %c0_0] : memref<8x64xf32, #tpu.memory_space<vmem>>, vector<8x64xf32>
    tpu.vector_store %arg5[%c0, %c0_0], %0 {strides = array<i32>} : memref<8x64xf32, #tpu.memory_space<vmem>>, vector<8x64xf32>,
    %cst_1 = arith.constant 0.000000e+00 : f32
    %2 = vector.broadcast %cst_1 : f32 to vector<8x64xf32>
    %c0_2 = arith.constant 0 : index
    %c0_3 = arith.constant 0 : index
    %3 = vector.load %arg6[%c0_2, %c0_3] : memref<8x64xf32, #tpu.memory_space<vmem>>, vector<8x64xf32>
    tpu.vector_store %arg6[%c0_2, %c0_3], %2 {strides = array<i32>} : memref<8x64xf32, #tpu.memory_space<vmem>>, vector<8x64xf32>,
    %c0_i32 = arith.constant 0 : i32
    %4 = arith.index_cast %c0_i32 : i32 to index
    %c0_4 = arith.constant 0 : index
    %c0_5 = arith.constant 0 : index
    %5 = vector.load %arg1[%4, %c0_4, %c0_5] : memref<4x8x32xf32, #tpu.memory_space<vmem>>, vector<1x8x32xf32>
    %6 = vector.shape_cast %5 : vector<1x8x32xf32> to vector<8x32xf32>
    %c3_i32 = arith.constant 3 : i32
    %7 = arith.subi %c3_i32, %c0_i32 : i32
    %8 = arith.index_cast %7 : i32 to index
    %c0_6 = arith.constant 0 : index
    %c0_7 = arith.constant 0 : index
    %9 = vector.load %arg1[%8, %c0_6, %c0_7] : memref<4x8x32xf32, #tpu.memory_space<vmem>>, vector<1x8x32xf32>
    %10 = vector.shape_cast %9 : vector<1x8x32xf32> to vector<8x32xf32>
    %c0_8 = arith.constant 0 : index
    %c0_9 = arith.constant 0 : index
    %11 = vector.load %arg5[%c0_8, %c0_9] : memref<8x64xf32, #tpu.memory_space<vmem>>, vector<8x64xf32>
    %12 = tpu.concatenate %6, %10, %11 in 1 : vector<8x32xf32>, vector<8x32xf32>, vector<8x64xf32> -> vector<8x128xf32>
    %c0_10 = arith.constant 0 : index
    %c0_11 = arith.constant 0 : index
    %13 = vector.load %arg2[%c0_10, %c0_11] : memref<128x256xf32, #tpu.memory_space<vmem>>, vector<128x256xf32>
    %cst_12 = arith.constant dense<0.000000e+00> : vector<8x256xf32>
    %14 = tpu.matmul %12, %13, %cst_12 {dimension_numbers = #tpu.dot_dimension_numbers<[1], [0], [0], [1], [0, 0, 1, 1], [], []>} : vector<8x128xf32>, vector<128x256xf32>, vector<8x256xf32> -> vector<8x256xf32>
    %c0_13 = arith.constant 0 : index
    %c0_14 = arith.constant 0 : index
    %15 = vector.load %arg3[%c0_13, %c0_14] : memref<1x256xf32, #tpu.memory_space<vmem>>, vector<1x256xf32>
    %16 = vector.broadcast %15 : vector<1x256xf32> to vector<8x256xf32>
    %17 = arith.addf %14, %16 : vector<8x256xf32>
    %18 = vector.extract_strided_slice %17 {offsets = [0, 0], sizes = [8, 64], strides = [1, 1]} : vector<8x256xf32> to vector<8x64xf32>
    %19 = arith.negf %18 : vector<8x64xf32>
    %20 = math.exp %19 : vector<8x64xf32>
    %cst_15 = arith.constant 1.000000e+00 : f32
    %21 = vector.broadcast %cst_15 : f32 to vector<8x64xf32>
    %22 = arith.addf %21, %20 : vector<8x64xf32>
    %23 = arith.divf %21, %22 : vector<8x64xf32>
    %24 = vector.extract_strided_slice %17 {offsets = [0, 64], sizes = [8, 64], strides = [1, 1]} : vector<8x256xf32> to vector<8x64xf32>
    %25 = arith.negf %24 : vector<8x64xf32>
    %26 = math.exp %25 : vector<8x64xf32>
    %cst_16 = arith.constant 1.000000e+00 : f32
    %27 = vector.broadcast %cst_16 : f32 to vector<8x64xf32>
    %28 = arith.addf %27, %26 : vector<8x64xf32>
    %29 = arith.divf %27, %28 : vector<8x64xf32>
    %30 = vector.extract_strided_slice %17 {offsets = [0, 128], sizes = [8, 64], strides = [1, 1]} : vector<8x256xf32> to vector<8x64xf32>
    %31 = math.tanh %30 : vector<8x64xf32>
    %32 = vector.extract_strided_slice %17 {offsets = [0, 192], sizes = [8, 64], strides = [1, 1]} : vector<8x256xf32> to vector<8x64xf32>
    %33 = arith.negf %32 : vector<8x64xf32>
    %34 = math.exp %33 : vector<8x64xf32>
    %cst_17 = arith.constant 1.000000e+00 : f32
    %35 = vector.broadcast %cst_17 : f32 to vector<8x64xf32>
    %36 = arith.addf %35, %34 : vector<8x64xf32>
    %37 = arith.divf %35, %36 : vector<8x64xf32>
    %c0_18 = arith.constant 0 : index
    %c0_19 = arith.constant 0 : index
    %38 = vector.load %arg6[%c0_18, %c0_19] : memref<8x64xf32, #tpu.memory_space<vmem>>, vector<8x64xf32>
    %39 = arith.mulf %29, %38 : vector<8x64xf32>
    %40 = arith.mulf %23, %31 : vector<8x64xf32>
    %41 = arith.addf %39, %40 : vector<8x64xf32>
    %42 = math.tanh %41 : vector<8x64xf32>
    %43 = arith.mulf %37, %42 : vector<8x64xf32>
    %c0_20 = arith.constant 0 : index
    %c0_21 = arith.constant 0 : index
    %44 = vector.load %arg6[%c0_20, %c0_21] : memref<8x64xf32, #tpu.memory_space<vmem>>, vector<8x64xf32>
    tpu.vector_store %arg6[%c0_20, %c0_21], %41 {strides = array<i32>} : memref<8x64xf32, #tpu.memory_space<vmem>>, vector<8x64xf32>,
    %c0_22 = arith.constant 0 : index
    %c0_23 = arith.constant 0 : index
    %45 = vector.load %arg5[%c0_22, %c0_23] : memref<8x64xf32, #tpu.memory_space<vmem>>, vector<8x64xf32>
    tpu.vector_store %arg5[%c0_22, %c0_23], %43 {strides = array<i32>} : memref<8x64xf32, #tpu.memory_space<vmem>>, vector<8x64xf32>,
    %46 = vector.extract_strided_slice %43 {offsets = [0, 0], sizes = [8, 32], strides = [1, 1]} : vector<8x64xf32> to vector<8x32xf32>
    %47 = arith.index_cast %c0_i32 : i32 to index
    %c0_24 = arith.constant 0 : index
    %c0_25 = arith.constant 0 : index
    %48 = vector.load %arg4[%47, %c0_24, %c0_25] : memref<4x8x64xf32, #tpu.memory_space<vmem>>, vector<1x8x32xf32>
    %49 = vector.shape_cast %48 : vector<1x8x32xf32> to vector<8x32xf32>
    %50 = vector.shape_cast %46 : vector<8x32xf32> to vector<1x8x32xf32>
    tpu.vector_store %arg4[%47, %c0_24, %c0_25], %50 {strides = array<i32>} : memref<4x8x64xf32, #tpu.memory_space<vmem>>, vector<1x8x32xf32>,
    %51 = vector.extract_strided_slice %43 {offsets = [0, 32], sizes = [8, 32], strides = [1, 1]} : vector<8x64xf32> to vector<8x32xf32>
    %c3_i32_26 = arith.constant 3 : i32
    %52 = arith.subi %c3_i32_26, %c0_i32 : i32
    %53 = arith.index_cast %52 : i32 to index
    %c0_27 = arith.constant 0 : index
    %c32 = arith.constant 32 : index
    %54 = vector.load %arg4[%53, %c0_27, %c32] : memref<4x8x64xf32, #tpu.memory_space<vmem>>, vector<1x8x32xf32>
    %55 = vector.shape_cast %54 : vector<1x8x32xf32> to vector<8x32xf32>
    %56 = vector.shape_cast %51 : vector<8x32xf32> to vector<1x8x32xf32>
    tpu.vector_store %arg4[%53, %c0_27, %c32], %56 {strides = array<i32>} : memref<4x8x64xf32, #tpu.memory_space<vmem>>, vector<1x8x32xf32>,
    %c1_i32 = arith.constant 1 : i32
    %57 = arith.index_cast %c1_i32 : i32 to index
    %c0_28 = arith.constant 0 : index
    %c0_29 = arith.constant 0 : index
    %58 = vector.load %arg1[%57, %c0_28, %c0_29] : memref<4x8x32xf32, #tpu.memory_space<vmem>>, vector<1x8x32xf32>
    %59 = vector.shape_cast %58 : vector<1x8x32xf32> to vector<8x32xf32>
    %c3_i32_30 = arith.constant 3 : i32
    %60 = arith.subi %c3_i32_30, %c1_i32 : i32
    %61 = arith.index_cast %60 : i32 to index
    %c0_31 = arith.constant 0 : index
    %c0_32 = arith.constant 0 : index
    %62 = vector.load %arg1[%61, %c0_31, %c0_32] : memref<4x8x32xf32, #tpu.memory_space<vmem>>, vector<1x8x32xf32>
    %63 = vector.shape_cast %62 : vector<1x8x32xf32> to vector<8x32xf32>
    %c0_33 = arith.constant 0 : index
    %c0_34 = arith.constant 0 : index
    %64 = vector.load %arg5[%c0_33, %c0_34] : memref<8x64xf32, #tpu.memory_space<vmem>>, vector<8x64xf32>
    %65 = tpu.concatenate %59, %63, %64 in 1 : vector<8x32xf32>, vector<8x32xf32>, vector<8x64xf32> -> vector<8x128xf32>
    %c0_35 = arith.constant 0 : index
    %c0_36 = arith.constant 0 : index
    %66 = vector.load %arg2[%c0_35, %c0_36] : memref<128x256xf32, #tpu.memory_space<vmem>>, vector<128x256xf32>
    %cst_37 = arith.constant dense<0.000000e+00> : vector<8x256xf32>
    %67 = tpu.matmul %65, %66, %cst_37 {dimension_numbers = #tpu.dot_dimension_numbers<[1], [0], [0], [1], [0, 0, 1, 1], [], []>} : vector<8x128xf32>, vector<128x256xf32>, vector<8x256xf32> -> vector<8x256xf32>
    %c0_38 = arith.constant 0 : index
    %c0_39 = arith.constant 0 : index
    %68 = vector.load %arg3[%c0_38, %c0_39] : memref<1x256xf32, #tpu.memory_space<vmem>>, vector<1x256xf32>
    %69 = vector.broadcast %68 : vector<1x256xf32> to vector<8x256xf32>
    %70 = arith.addf %67, %69 : vector<8x256xf32>
    %71 = vector.extract_strided_slice %70 {offsets = [0, 0], sizes = [8, 64], strides = [1, 1]} : vector<8x256xf32> to vector<8x64xf32>
    %72 = arith.negf %71 : vector<8x64xf32>
    %73 = math.exp %72 : vector<8x64xf32>
    %cst_40 = arith.constant 1.000000e+00 : f32
    %74 = vector.broadcast %cst_40 : f32 to vector<8x64xf32>
    %75 = arith.addf %74, %73 : vector<8x64xf32>
    %76 = arith.divf %74, %75 : vector<8x64xf32>
    %77 = vector.extract_strided_slice %70 {offsets = [0, 64], sizes = [8, 64], strides = [1, 1]} : vector<8x256xf32> to vector<8x64xf32>
    %78 = arith.negf %77 : vector<8x64xf32>
    %79 = math.exp %78 : vector<8x64xf32>
    %cst_41 = arith.constant 1.000000e+00 : f32
    %80 = vector.broadcast %cst_41 : f32 to vector<8x64xf32>
    %81 = arith.addf %80, %79 : vector<8x64xf32>
    %82 = arith.divf %80, %81 : vector<8x64xf32>
    %83 = vector.extract_strided_slice %70 {offsets = [0, 128], sizes = [8, 64], strides = [1, 1]} : vector<8x256xf32> to vector<8x64xf32>
    %84 = math.tanh %83 : vector<8x64xf32>
    %85 = vector.extract_strided_slice %70 {offsets = [0, 192], sizes = [8, 64], strides = [1, 1]} : vector<8x256xf32> to vector<8x64xf32>
    %86 = arith.negf %85 : vector<8x64xf32>
    %87 = math.exp %86 : vector<8x64xf32>
    %cst_42 = arith.constant 1.000000e+00 : f32
    %88 = vector.broadcast %cst_42 : f32 to vector<8x64xf32>
    %89 = arith.addf %88, %87 : vector<8x64xf32>
    %90 = arith.divf %88, %89 : vector<8x64xf32>
    %c0_43 = arith.constant 0 : index
    %c0_44 = arith.constant 0 : index
    %91 = vector.load %arg6[%c0_43, %c0_44] : memref<8x64xf32, #tpu.memory_space<vmem>>, vector<8x64xf32>
    %92 = arith.mulf %82, %91 : vector<8x64xf32>
    %93 = arith.mulf %76, %84 : vector<8x64xf32>
    %94 = arith.addf %92, %93 : vector<8x64xf32>
    %95 = math.tanh %94 : vector<8x64xf32>
    %96 = arith.mulf %90, %95 : vector<8x64xf32>
    %c0_45 = arith.constant 0 : index
    %c0_46 = arith.constant 0 : index
    %97 = vector.load %arg6[%c0_45, %c0_46] : memref<8x64xf32, #tpu.memory_space<vmem>>, vector<8x64xf32>
    tpu.vector_store %arg6[%c0_45, %c0_46], %94 {strides = array<i32>} : memref<8x64xf32, #tpu.memory_space<vmem>>, vector<8x64xf32>,
    %c0_47 = arith.constant 0 : index
    %c0_48 = arith.constant 0 : index
    %98 = vector.load %arg5[%c0_47, %c0_48] : memref<8x64xf32, #tpu.memory_space<vmem>>, vector<8x64xf32>
    tpu.vector_store %arg5[%c0_47, %c0_48], %96 {strides = array<i32>} : memref<8x64xf32, #tpu.memory_space<vmem>>, vector<8x64xf32>,
    %99 = vector.extract_strided_slice %96 {offsets = [0, 0], sizes = [8, 32], strides = [1, 1]} : vector<8x64xf32> to vector<8x32xf32>
    %100 = arith.index_cast %c1_i32 : i32 to index
    %c0_49 = arith.constant 0 : index
    %c0_50 = arith.constant 0 : index
    %101 = vector.load %arg4[%100, %c0_49, %c0_50] : memref<4x8x64xf32, #tpu.memory_space<vmem>>, vector<1x8x32xf32>
    %102 = vector.shape_cast %101 : vector<1x8x32xf32> to vector<8x32xf32>
    %103 = vector.shape_cast %99 : vector<8x32xf32> to vector<1x8x32xf32>
    tpu.vector_store %arg4[%100, %c0_49, %c0_50], %103 {strides = array<i32>} : memref<4x8x64xf32, #tpu.memory_space<vmem>>, vector<1x8x32xf32>,
    %104 = vector.extract_strided_slice %96 {offsets = [0, 32], sizes = [8, 32], strides = [1, 1]} : vector<8x64xf32> to vector<8x32xf32>
    %c3_i32_51 = arith.constant 3 : i32
    %105 = arith.subi %c3_i32_51, %c1_i32 : i32
    %106 = arith.index_cast %105 : i32 to index
    %c0_52 = arith.constant 0 : index
    %c32_53 = arith.constant 32 : index
    %107 = vector.load %arg4[%106, %c0_52, %c32_53] : memref<4x8x64xf32, #tpu.memory_space<vmem>>, vector<1x8x32xf32>
    %108 = vector.shape_cast %107 : vector<1x8x32xf32> to vector<8x32xf32>
    %109 = vector.shape_cast %104 : vector<8x32xf32> to vector<1x8x32xf32>
    tpu.vector_store %arg4[%106, %c0_52, %c32_53], %109 {strides = array<i32>} : memref<4x8x64xf32, #tpu.memory_space<vmem>>, vector<1x8x32xf32>,
    %c2_i32 = arith.constant 2 : i32
    %110 = arith.index_cast %c2_i32 : i32 to index
    %c0_54 = arith.constant 0 : index
    %c0_55 = arith.constant 0 : index
    %111 = vector.load %arg1[%110, %c0_54, %c0_55] : memref<4x8x32xf32, #tpu.memory_space<vmem>>, vector<1x8x32xf32>
    %112 = vector.shape_cast %111 : vector<1x8x32xf32> to vector<8x32xf32>
    %c3_i32_56 = arith.constant 3 : i32
    %113 = arith.subi %c3_i32_56, %c2_i32 : i32
    %114 = arith.index_cast %113 : i32 to index
    %c0_57 = arith.constant 0 : index
    %c0_58 = arith.constant 0 : index
    %115 = vector.load %arg1[%114, %c0_57, %c0_58] : memref<4x8x32xf32, #tpu.memory_space<vmem>>, vector<1x8x32xf32>
    %116 = vector.shape_cast %115 : vector<1x8x32xf32> to vector<8x32xf32>
    %c0_59 = arith.constant 0 : index
    %c0_60 = arith.constant 0 : index
    %117 = vector.load %arg5[%c0_59, %c0_60] : memref<8x64xf32, #tpu.memory_space<vmem>>, vector<8x64xf32>
    %118 = tpu.concatenate %112, %116, %117 in 1 : vector<8x32xf32>, vector<8x32xf32>, vector<8x64xf32> -> vector<8x128xf32>
    %c0_61 = arith.constant 0 : index
    %c0_62 = arith.constant 0 : index
    %119 = vector.load %arg2[%c0_61, %c0_62] : memref<128x256xf32, #tpu.memory_space<vmem>>, vector<128x256xf32>
    %cst_63 = arith.constant dense<0.000000e+00> : vector<8x256xf32>
    %120 = tpu.matmul %118, %119, %cst_63 {dimension_numbers = #tpu.dot_dimension_numbers<[1], [0], [0], [1], [0, 0, 1, 1], [], []>} : vector<8x128xf32>, vector<128x256xf32>, vector<8x256xf32> -> vector<8x256xf32>
    %c0_64 = arith.constant 0 : index
    %c0_65 = arith.constant 0 : index
    %121 = vector.load %arg3[%c0_64, %c0_65] : memref<1x256xf32, #tpu.memory_space<vmem>>, vector<1x256xf32>
    %122 = vector.broadcast %121 : vector<1x256xf32> to vector<8x256xf32>
    %123 = arith.addf %120, %122 : vector<8x256xf32>
    %124 = vector.extract_strided_slice %123 {offsets = [0, 0], sizes = [8, 64], strides = [1, 1]} : vector<8x256xf32> to vector<8x64xf32>
    %125 = arith.negf %124 : vector<8x64xf32>
    %126 = math.exp %125 : vector<8x64xf32>
    %cst_66 = arith.constant 1.000000e+00 : f32
    %127 = vector.broadcast %cst_66 : f32 to vector<8x64xf32>
    %128 = arith.addf %127, %126 : vector<8x64xf32>
    %129 = arith.divf %127, %128 : vector<8x64xf32>
    %130 = vector.extract_strided_slice %123 {offsets = [0, 64], sizes = [8, 64], strides = [1, 1]} : vector<8x256xf32> to vector<8x64xf32>
    %131 = arith.negf %130 : vector<8x64xf32>
    %132 = math.exp %131 : vector<8x64xf32>
    %cst_67 = arith.constant 1.000000e+00 : f32
    %133 = vector.broadcast %cst_67 : f32 to vector<8x64xf32>
    %134 = arith.addf %133, %132 : vector<8x64xf32>
    %135 = arith.divf %133, %134 : vector<8x64xf32>
    %136 = vector.extract_strided_slice %123 {offsets = [0, 128], sizes = [8, 64], strides = [1, 1]} : vector<8x256xf32> to vector<8x64xf32>
    %137 = math.tanh %136 : vector<8x64xf32>
    %138 = vector.extract_strided_slice %123 {offsets = [0, 192], sizes = [8, 64], strides = [1, 1]} : vector<8x256xf32> to vector<8x64xf32>
    %139 = arith.negf %138 : vector<8x64xf32>
    %140 = math.exp %139 : vector<8x64xf32>
    %cst_68 = arith.constant 1.000000e+00 : f32
    %141 = vector.broadcast %cst_68 : f32 to vector<8x64xf32>
    %142 = arith.addf %141, %140 : vector<8x64xf32>
    %143 = arith.divf %141, %142 : vector<8x64xf32>
    %c0_69 = arith.constant 0 : index
    %c0_70 = arith.constant 0 : index
    %144 = vector.load %arg6[%c0_69, %c0_70] : memref<8x64xf32, #tpu.memory_space<vmem>>, vector<8x64xf32>
    %145 = arith.mulf %135, %144 : vector<8x64xf32>
    %146 = arith.mulf %129, %137 : vector<8x64xf32>
    %147 = arith.addf %145, %146 : vector<8x64xf32>
    %148 = math.tanh %147 : vector<8x64xf32>
    %149 = arith.mulf %143, %148 : vector<8x64xf32>
    %c0_71 = arith.constant 0 : index
    %c0_72 = arith.constant 0 : index
    %150 = vector.load %arg6[%c0_71, %c0_72] : memref<8x64xf32, #tpu.memory_space<vmem>>, vector<8x64xf32>
    tpu.vector_store %arg6[%c0_71, %c0_72], %147 {strides = array<i32>} : memref<8x64xf32, #tpu.memory_space<vmem>>, vector<8x64xf32>,
    %c0_73 = arith.constant 0 : index
    %c0_74 = arith.constant 0 : index
    %151 = vector.load %arg5[%c0_73, %c0_74] : memref<8x64xf32, #tpu.memory_space<vmem>>, vector<8x64xf32>
    tpu.vector_store %arg5[%c0_73, %c0_74], %149 {strides = array<i32>} : memref<8x64xf32, #tpu.memory_space<vmem>>, vector<8x64xf32>,
    %152 = vector.extract_strided_slice %149 {offsets = [0, 0], sizes = [8, 32], strides = [1, 1]} : vector<8x64xf32> to vector<8x32xf32>
    %153 = arith.index_cast %c2_i32 : i32 to index
    %c0_75 = arith.constant 0 : index
    %c0_76 = arith.constant 0 : index
    %154 = vector.load %arg4[%153, %c0_75, %c0_76] : memref<4x8x64xf32, #tpu.memory_space<vmem>>, vector<1x8x32xf32>
    %155 = vector.shape_cast %154 : vector<1x8x32xf32> to vector<8x32xf32>
    %156 = vector.shape_cast %152 : vector<8x32xf32> to vector<1x8x32xf32>
    tpu.vector_store %arg4[%153, %c0_75, %c0_76], %156 {strides = array<i32>} : memref<4x8x64xf32, #tpu.memory_space<vmem>>, vector<1x8x32xf32>,
    %157 = vector.extract_strided_slice %149 {offsets = [0, 32], sizes = [8, 32], strides = [1, 1]} : vector<8x64xf32> to vector<8x32xf32>
    %c3_i32_77 = arith.constant 3 : i32
    %158 = arith.subi %c3_i32_77, %c2_i32 : i32
    %159 = arith.index_cast %158 : i32 to index
    %c0_78 = arith.constant 0 : index
    %c32_79 = arith.constant 32 : index
    %160 = vector.load %arg4[%159, %c0_78, %c32_79] : memref<4x8x64xf32, #tpu.memory_space<vmem>>, vector<1x8x32xf32>
    %161 = vector.shape_cast %160 : vector<1x8x32xf32> to vector<8x32xf32>
    %162 = vector.shape_cast %157 : vector<8x32xf32> to vector<1x8x32xf32>
    tpu.vector_store %arg4[%159, %c0_78, %c32_79], %162 {strides = array<i32>} : memref<4x8x64xf32, #tpu.memory_space<vmem>>, vector<1x8x32xf32>,
    %c3_i32_80 = arith.constant 3 : i32
    %163 = arith.index_cast %c3_i32_80 : i32 to index
    %c0_81 = arith.constant 0 : index
    %c0_82 = arith.constant 0 : index
    %164 = vector.load %arg1[%163, %c0_81, %c0_82] : memref<4x8x32xf32, #tpu.memory_space<vmem>>, vector<1x8x32xf32>
    %165 = vector.shape_cast %164 : vector<1x8x32xf32> to vector<8x32xf32>
    %c3_i32_83 = arith.constant 3 : i32
    %166 = arith.subi %c3_i32_83, %c3_i32_80 : i32
    %167 = arith.index_cast %166 : i32 to index
    %c0_84 = arith.constant 0 : index
    %c0_85 = arith.constant 0 : index
    %168 = vector.load %arg1[%167, %c0_84, %c0_85] : memref<4x8x32xf32, #tpu.memory_space<vmem>>, vector<1x8x32xf32>
    %169 = vector.shape_cast %168 : vector<1x8x32xf32> to vector<8x32xf32>
    %c0_86 = arith.constant 0 : index
    %c0_87 = arith.constant 0 : index
    %170 = vector.load %arg5[%c0_86, %c0_87] : memref<8x64xf32, #tpu.memory_space<vmem>>, vector<8x64xf32>
    %171 = tpu.concatenate %165, %169, %170 in 1 : vector<8x32xf32>, vector<8x32xf32>, vector<8x64xf32> -> vector<8x128xf32>
    %c0_88 = arith.constant 0 : index
    %c0_89 = arith.constant 0 : index
    %172 = vector.load %arg2[%c0_88, %c0_89] : memref<128x256xf32, #tpu.memory_space<vmem>>, vector<128x256xf32>
    %cst_90 = arith.constant dense<0.000000e+00> : vector<8x256xf32>
    %173 = tpu.matmul %171, %172, %cst_90 {dimension_numbers = #tpu.dot_dimension_numbers<[1], [0], [0], [1], [0, 0, 1, 1], [], []>} : vector<8x128xf32>, vector<128x256xf32>, vector<8x256xf32> -> vector<8x256xf32>
    %c0_91 = arith.constant 0 : index
    %c0_92 = arith.constant 0 : index
    %174 = vector.load %arg3[%c0_91, %c0_92] : memref<1x256xf32, #tpu.memory_space<vmem>>, vector<1x256xf32>
    %175 = vector.broadcast %174 : vector<1x256xf32> to vector<8x256xf32>
    %176 = arith.addf %173, %175 : vector<8x256xf32>
    %177 = vector.extract_strided_slice %176 {offsets = [0, 0], sizes = [8, 64], strides = [1, 1]} : vector<8x256xf32> to vector<8x64xf32>
    %178 = arith.negf %177 : vector<8x64xf32>
    %179 = math.exp %178 : vector<8x64xf32>
    %cst_93 = arith.constant 1.000000e+00 : f32
    %180 = vector.broadcast %cst_93 : f32 to vector<8x64xf32>
    %181 = arith.addf %180, %179 : vector<8x64xf32>
    %182 = arith.divf %180, %181 : vector<8x64xf32>
    %183 = vector.extract_strided_slice %176 {offsets = [0, 64], sizes = [8, 64], strides = [1, 1]} : vector<8x256xf32> to vector<8x64xf32>
    %184 = arith.negf %183 : vector<8x64xf32>
    %185 = math.exp %184 : vector<8x64xf32>
    %cst_94 = arith.constant 1.000000e+00 : f32
    %186 = vector.broadcast %cst_94 : f32 to vector<8x64xf32>
    %187 = arith.addf %186, %185 : vector<8x64xf32>
    %188 = arith.divf %186, %187 : vector<8x64xf32>
    %189 = vector.extract_strided_slice %176 {offsets = [0, 128], sizes = [8, 64], strides = [1, 1]} : vector<8x256xf32> to vector<8x64xf32>
    %190 = math.tanh %189 : vector<8x64xf32>
    %191 = vector.extract_strided_slice %176 {offsets = [0, 192], sizes = [8, 64], strides = [1, 1]} : vector<8x256xf32> to vector<8x64xf32>
    %192 = arith.negf %191 : vector<8x64xf32>
    %193 = math.exp %192 : vector<8x64xf32>
    %cst_95 = arith.constant 1.000000e+00 : f32
    %194 = vector.broadcast %cst_95 : f32 to vector<8x64xf32>
    %195 = arith.addf %194, %193 : vector<8x64xf32>
    %196 = arith.divf %194, %195 : vector<8x64xf32>
    %c0_96 = arith.constant 0 : index
    %c0_97 = arith.constant 0 : index
    %197 = vector.load %arg6[%c0_96, %c0_97] : memref<8x64xf32, #tpu.memory_space<vmem>>, vector<8x64xf32>
    %198 = arith.mulf %188, %197 : vector<8x64xf32>
    %199 = arith.mulf %182, %190 : vector<8x64xf32>
    %200 = arith.addf %198, %199 : vector<8x64xf32>
    %201 = math.tanh %200 : vector<8x64xf32>
    %202 = arith.mulf %196, %201 : vector<8x64xf32>
    %c0_98 = arith.constant 0 : index
    %c0_99 = arith.constant 0 : index
    %203 = vector.load %arg6[%c0_98, %c0_99] : memref<8x64xf32, #tpu.memory_space<vmem>>, vector<8x64xf32>
    tpu.vector_store %arg6[%c0_98, %c0_99], %200 {strides = array<i32>} : memref<8x64xf32, #tpu.memory_space<vmem>>, vector<8x64xf32>,
    %c0_100 = arith.constant 0 : index
    %c0_101 = arith.constant 0 : index
    %204 = vector.load %arg5[%c0_100, %c0_101] : memref<8x64xf32, #tpu.memory_space<vmem>>, vector<8x64xf32>
    tpu.vector_store %arg5[%c0_100, %c0_101], %202 {strides = array<i32>} : memref<8x64xf32, #tpu.memory_space<vmem>>, vector<8x64xf32>,
    %205 = vector.extract_strided_slice %202 {offsets = [0, 0], sizes = [8, 32], strides = [1, 1]} : vector<8x64xf32> to vector<8x32xf32>
    %206 = arith.index_cast %c3_i32_80 : i32 to index
    %c0_102 = arith.constant 0 : index
    %c0_103 = arith.constant 0 : index
    %207 = vector.load %arg4[%206, %c0_102, %c0_103] : memref<4x8x64xf32, #tpu.memory_space<vmem>>, vector<1x8x32xf32>
    %208 = vector.shape_cast %207 : vector<1x8x32xf32> to vector<8x32xf32>
    %209 = vector.shape_cast %205 : vector<8x32xf32> to vector<1x8x32xf32>
    tpu.vector_store %arg4[%206, %c0_102, %c0_103], %209 {strides = array<i32>} : memref<4x8x64xf32, #tpu.memory_space<vmem>>, vector<1x8x32xf32>,
    %210 = vector.extract_strided_slice %202 {offsets = [0, 32], sizes = [8, 32], strides = [1, 1]} : vector<8x64xf32> to vector<8x32xf32>
    %c3_i32_104 = arith.constant 3 : i32
    %211 = arith.subi %c3_i32_104, %c3_i32_80 : i32
    %212 = arith.index_cast %211 : i32 to index
    %c0_105 = arith.constant 0 : index
    %c32_106 = arith.constant 32 : index
    %213 = vector.load %arg4[%212, %c0_105, %c32_106] : memref<4x8x64xf32, #tpu.memory_space<vmem>>, vector<1x8x32xf32>
    %214 = vector.shape_cast %213 : vector<1x8x32xf32> to vector<8x32xf32>
    %215 = vector.shape_cast %210 : vector<8x32xf32> to vector<1x8x32xf32>
    tpu.vector_store %arg4[%212, %c0_105, %c32_106], %215 {strides = array<i32>} : memref<4x8x64xf32, #tpu.memory_space<vmem>>, vector<1x8x32xf32>,
    %c4_i32 = arith.constant 4 : i32
    return
  }
  func.func @transform_0(%arg0: i32) -> (i32, i32, i32) {
    %c0_i32 = arith.constant 0 : i32
    %c0_i32_0 = arith.constant 0 : i32
    %c0_i32_1 = arith.constant 0 : i32
    return %c0_i32, %arg0, %c0_i32_0 : i32, i32, i32
  }
  func.func @transform_1(%arg0: i32) -> (i32, i32) {
    %c0_i32 = arith.constant 0 : i32
    %c0_i32_0 = arith.constant 0 : i32
    %c0_i32_1 = arith.constant 0 : i32
    return %c0_i32, %c0_i32_0 : i32, i32
  }
  func.func @transform_2(%arg0: i32) -> (i32, i32) {
    %c0_i32 = arith.constant 0 : i32
    %c0_i32_0 = arith.constant 0 : i32
    %c0_i32_1 = arith.constant 0 : i32
    return %c0_i32, %c0_i32_0 : i32, i32
  }
  func.func @transform_3(%arg0: i32) -> (i32, i32, i32) {
    %c0_i32 = arith.constant 0 : i32
    %c0_i32_0 = arith.constant 0 : i32
    %c0_i32_1 = arith.constant 0 : i32
    return %c0_i32, %arg0, %c0_i32_0 : i32, i32, i32
  }
}

module attributes {stable_mosaic.version = 11 : i64} {
  func.func @_bilstm_kernel(%arg0: i32, %arg1: memref<4x8x32xf32, #tpu.memory_space<vmem>>, %arg2: memref<128x256xf32, #tpu.memory_space<vmem>>, %arg3: memref<1x256xf32, #tpu.memory_space<vmem>>, %arg4: memref<4x8x64xf32, #tpu.memory_space<vmem>>, %arg5: memref<8x64xf32, #tpu.memory_space<vmem>>, %arg6: memref<8x64xf32, #tpu.memory_space<vmem>>) attributes {dimension_semantics = [#tpu.dimension_semantics<parallel>], iteration_bounds = array<i64: 1>, scalar_prefetch = 0 : i64, scratch_operands = 2 : i64, tpu.core_type = #tpu.core_type<tc>, window_params = [{transform_indices = @transform_0, window_bounds = array<i64: 4, 8, 32>}, {pipeline_mode = #tpu.pipeline_mode<synchronous>, transform_indices = @transform_1, window_bounds = array<i64: 128, 256>}, {pipeline_mode = #tpu.pipeline_mode<synchronous>, transform_indices = @transform_2, window_bounds = array<i64: 1, 256>}, {transform_indices = @transform_3, window_bounds = array<i64: 4, 8, 64>}]} {
    %cst = arith.constant 0.000000e+00 : f32
    %0 = vector.broadcast %cst : f32 to vector<8x64xf32>
    %c0 = arith.constant 0 : index
    %c0_0 = arith.constant 0 : index
    %1 = vector.load %arg5[%c0, %c0_0] : memref<8x64xf32, #tpu.memory_space<vmem>>, vector<8x64xf32>
    tpu.vector_store %arg5[%c0, %c0_0], %0 {strides = array<i32>} : memref<8x64xf32, #tpu.memory_space<vmem>>, vector<8x64xf32>,
    %cst_1 = arith.constant 0.000000e+00 : f32
    %2 = vector.broadcast %cst_1 : f32 to vector<8x64xf32>
    %c0_2 = arith.constant 0 : index
    %c0_3 = arith.constant 0 : index
    %3 = vector.load %arg6[%c0_2, %c0_3] : memref<8x64xf32, #tpu.memory_space<vmem>>, vector<8x64xf32>
    tpu.vector_store %arg6[%c0_2, %c0_3], %2 {strides = array<i32>} : memref<8x64xf32, #tpu.memory_space<vmem>>, vector<8x64xf32>,
    %c0_i32 = arith.constant 0 : i32
    %4 = arith.index_cast %c0_i32 : i32 to index
    %c0_4 = arith.constant 0 : index
    %c0_5 = arith.constant 0 : index
    %5 = vector.load %arg1[%4, %c0_4, %c0_5] : memref<4x8x32xf32, #tpu.memory_space<vmem>>, vector<1x8x32xf32>
    %6 = vector.shape_cast %5 : vector<1x8x32xf32> to vector<8x32xf32>
    %c3_i32 = arith.constant 3 : i32
    %7 = arith.subi %c3_i32, %c0_i32 : i32
    %8 = arith.index_cast %7 : i32 to index
    %c0_6 = arith.constant 0 : index
    %c0_7 = arith.constant 0 : index
    %9 = vector.load %arg1[%8, %c0_6, %c0_7] : memref<4x8x32xf32, #tpu.memory_space<vmem>>, vector<1x8x32xf32>
    %10 = vector.shape_cast %9 : vector<1x8x32xf32> to vector<8x32xf32>
    %c0_8 = arith.constant 0 : index
    %c0_9 = arith.constant 0 : index
    %11 = vector.load %arg5[%c0_8, %c0_9] : memref<8x64xf32, #tpu.memory_space<vmem>>, vector<8x64xf32>
    %12 = tpu.concatenate %6, %10, %11 in 1 : vector<8x32xf32>, vector<8x32xf32>, vector<8x64xf32> -> vector<8x128xf32>
    %c0_10 = arith.constant 0 : index
    %c0_11 = arith.constant 0 : index
    %13 = vector.load %arg2[%c0_10, %c0_11] : memref<128x256xf32, #tpu.memory_space<vmem>>, vector<128x256xf32>
    %cst_12 = arith.constant dense<0.000000e+00> : vector<8x256xf32>
    %14 = tpu.matmul %12, %13, %cst_12 {dimension_numbers = #tpu.dot_dimension_numbers<[1], [0], [0], [1], [0, 0, 1, 1], [], []>} : vector<8x128xf32>, vector<128x256xf32>, vector<8x256xf32> -> vector<8x256xf32>
    %c0_13 = arith.constant 0 : index
    %c0_14 = arith.constant 0 : index
    %15 = vector.load %arg3[%c0_13, %c0_14] : memref<1x256xf32, #tpu.memory_space<vmem>>, vector<1x256xf32>
    %16 = vector.broadcast %15 : vector<1x256xf32> to vector<8x256xf32>
    %17 = arith.addf %14, %16 : vector<8x256xf32>
    %18 = vector.extract_strided_slice %17 {offsets = [0, 0], sizes = [8, 64], strides = [1, 1]} : vector<8x256xf32> to vector<8x64xf32>
    %19 = arith.negf %18 : vector<8x64xf32>
    %20 = math.exp %19 : vector<8x64xf32>
    %cst_15 = arith.constant 1.000000e+00 : f32
    %21 = vector.broadcast %cst_15 : f32 to vector<8x64xf32>
    %22 = arith.addf %21, %20 : vector<8x64xf32>
    %23 = arith.divf %21, %22 : vector<8x64xf32>
    %24 = vector.extract_strided_slice %17 {offsets = [0, 64], sizes = [8, 64], strides = [1, 1]} : vector<8x256xf32> to vector<8x64xf32>
    %25 = arith.negf %24 : vector<8x64xf32>
    %26 = math.exp %25 : vector<8x64xf32>
    %cst_16 = arith.constant 1.000000e+00 : f32
    %27 = vector.broadcast %cst_16 : f32 to vector<8x64xf32>
    %28 = arith.addf %27, %26 : vector<8x64xf32>
    %29 = arith.divf %27, %28 : vector<8x64xf32>
    %30 = vector.extract_strided_slice %17 {offsets = [0, 128], sizes = [8, 64], strides = [1, 1]} : vector<8x256xf32> to vector<8x64xf32>
    %31 = math.tanh %30 : vector<8x64xf32>
    %32 = vector.extract_strided_slice %17 {offsets = [0, 192], sizes = [8, 64], strides = [1, 1]} : vector<8x256xf32> to vector<8x64xf32>
    %33 = arith.negf %32 : vector<8x64xf32>
    %34 = math.exp %33 : vector<8x64xf32>
    %cst_17 = arith.constant 1.000000e+00 : f32
    %35 = vector.broadcast %cst_17 : f32 to vector<8x64xf32>
    %36 = arith.addf %35, %34 : vector<8x64xf32>
    %37 = arith.divf %35, %36 : vector<8x64xf32>
    %c0_18 = arith.constant 0 : index
    %c0_19 = arith.constant 0 : index
    %38 = vector.load %arg6[%c0_18, %c0_19] : memref<8x64xf32, #tpu.memory_space<vmem>>, vector<8x64xf32>
    %39 = arith.mulf %29, %38 : vector<8x64xf32>
    %40 = arith.mulf %23, %31 : vector<8x64xf32>
    %41 = arith.addf %39, %40 : vector<8x64xf32>
    %42 = math.tanh %41 : vector<8x64xf32>
    %43 = arith.mulf %37, %42 : vector<8x64xf32>
    %c0_20 = arith.constant 0 : index
    %c0_21 = arith.constant 0 : index
    %44 = vector.load %arg6[%c0_20, %c0_21] : memref<8x64xf32, #tpu.memory_space<vmem>>, vector<8x64xf32>
    tpu.vector_store %arg6[%c0_20, %c0_21], %41 {strides = array<i32>} : memref<8x64xf32, #tpu.memory_space<vmem>>, vector<8x64xf32>,
    %c0_22 = arith.constant 0 : index
    %c0_23 = arith.constant 0 : index
    %45 = vector.load %arg5[%c0_22, %c0_23] : memref<8x64xf32, #tpu.memory_space<vmem>>, vector<8x64xf32>
    tpu.vector_store %arg5[%c0_22, %c0_23], %43 {strides = array<i32>} : memref<8x64xf32, #tpu.memory_space<vmem>>, vector<8x64xf32>,
    %46 = vector.extract_strided_slice %43 {offsets = [0, 0], sizes = [8, 32], strides = [1, 1]} : vector<8x64xf32> to vector<8x32xf32>
    %47 = arith.index_cast %c0_i32 : i32 to index
    %c0_24 = arith.constant 0 : index
    %c0_25 = arith.constant 0 : index
    %48 = vector.load %arg4[%47, %c0_24, %c0_25] : memref<4x8x64xf32, #tpu.memory_space<vmem>>, vector<1x8x32xf32>
    %49 = vector.shape_cast %48 : vector<1x8x32xf32> to vector<8x32xf32>
    %50 = vector.shape_cast %46 : vector<8x32xf32> to vector<1x8x32xf32>
    tpu.vector_store %arg4[%47, %c0_24, %c0_25], %50 {strides = array<i32>} : memref<4x8x64xf32, #tpu.memory_space<vmem>>, vector<1x8x32xf32>,
    %51 = vector.extract_strided_slice %43 {offsets = [0, 32], sizes = [8, 32], strides = [1, 1]} : vector<8x64xf32> to vector<8x32xf32>
    %c3_i32_26 = arith.constant 3 : i32
    %52 = arith.subi %c3_i32_26, %c0_i32 : i32
    %53 = arith.index_cast %52 : i32 to index
    %c0_27 = arith.constant 0 : index
    %c32 = arith.constant 32 : index
    %54 = vector.load %arg4[%53, %c0_27, %c32] : memref<4x8x64xf32, #tpu.memory_space<vmem>>, vector<1x8x32xf32>
    %55 = vector.shape_cast %54 : vector<1x8x32xf32> to vector<8x32xf32>
    %56 = vector.shape_cast %51 : vector<8x32xf32> to vector<1x8x32xf32>
    tpu.vector_store %arg4[%53, %c0_27, %c32], %56 {strides = array<i32>} : memref<4x8x64xf32, #tpu.memory_space<vmem>>, vector<1x8x32xf32>,
    %c1_i32 = arith.constant 1 : i32
    %57 = arith.index_cast %c1_i32 : i32 to index
    %c0_28 = arith.constant 0 : index
    %c0_29 = arith.constant 0 : index
    %58 = vector.load %arg1[%57, %c0_28, %c0_29] : memref<4x8x32xf32, #tpu.memory_space<vmem>>, vector<1x8x32xf32>
    %59 = vector.shape_cast %58 : vector<1x8x32xf32> to vector<8x32xf32>
    %c3_i32_30 = arith.constant 3 : i32
    %60 = arith.subi %c3_i32_30, %c1_i32 : i32
    %61 = arith.index_cast %60 : i32 to index
    %c0_31 = arith.constant 0 : index
    %c0_32 = arith.constant 0 : index
    %62 = vector.load %arg1[%61, %c0_31, %c0_32] : memref<4x8x32xf32, #tpu.memory_space<vmem>>, vector<1x8x32xf32>
    %63 = vector.shape_cast %62 : vector<1x8x32xf32> to vector<8x32xf32>
    %c0_33 = arith.constant 0 : index
    %c0_34 = arith.constant 0 : index
    %64 = vector.load %arg5[%c0_33, %c0_34] : memref<8x64xf32, #tpu.memory_space<vmem>>, vector<8x64xf32>
    %65 = tpu.concatenate %59, %63, %64 in 1 : vector<8x32xf32>, vector<8x32xf32>, vector<8x64xf32> -> vector<8x128xf32>
    %c0_35 = arith.constant 0 : index
    %c0_36 = arith.constant 0 : index
    %66 = vector.load %arg2[%c0_35, %c0_36] : memref<128x256xf32, #tpu.memory_space<vmem>>, vector<128x256xf32>
    %cst_37 = arith.constant dense<0.000000e+00> : vector<8x256xf32>
    %67 = tpu.matmul %65, %66, %cst_37 {dimension_numbers = #tpu.dot_dimension_numbers<[1], [0], [0], [1], [0, 0, 1, 1], [], []>} : vector<8x128xf32>, vector<128x256xf32>, vector<8x256xf32> -> vector<8x256xf32>
    %c0_38 = arith.constant 0 : index
    %c0_39 = arith.constant 0 : index
    %68 = vector.load %arg3[%c0_38, %c0_39] : memref<1x256xf32, #tpu.memory_space<vmem>>, vector<1x256xf32>
    %69 = vector.broadcast %68 : vector<1x256xf32> to vector<8x256xf32>
    %70 = arith.addf %67, %69 : vector<8x256xf32>
    %71 = vector.extract_strided_slice %70 {offsets = [0, 0], sizes = [8, 64], strides = [1, 1]} : vector<8x256xf32> to vector<8x64xf32>
    %72 = arith.negf %71 : vector<8x64xf32>
    %73 = math.exp %72 : vector<8x64xf32>
    %cst_40 = arith.constant 1.000000e+00 : f32
    %74 = vector.broadcast %cst_40 : f32 to vector<8x64xf32>
    %75 = arith.addf %74, %73 : vector<8x64xf32>
    %76 = arith.divf %74, %75 : vector<8x64xf32>
    %77 = vector.extract_strided_slice %70 {offsets = [0, 64], sizes = [8, 64], strides = [1, 1]} : vector<8x256xf32> to vector<8x64xf32>
    %78 = arith.negf %77 : vector<8x64xf32>
    %79 = math.exp %78 : vector<8x64xf32>
    %cst_41 = arith.constant 1.000000e+00 : f32
    %80 = vector.broadcast %cst_41 : f32 to vector<8x64xf32>
    %81 = arith.addf %80, %79 : vector<8x64xf32>
    %82 = arith.divf %80, %81 : vector<8x64xf32>
    %83 = vector.extract_strided_slice %70 {offsets = [0, 128], sizes = [8, 64], strides = [1, 1]} : vector<8x256xf32> to vector<8x64xf32>
    %84 = math.tanh %83 : vector<8x64xf32>
    %85 = vector.extract_strided_slice %70 {offsets = [0, 192], sizes = [8, 64], strides = [1, 1]} : vector<8x256xf32> to vector<8x64xf32>
    %86 = arith.negf %85 : vector<8x64xf32>
    %87 = math.exp %86 : vector<8x64xf32>
    %cst_42 = arith.constant 1.000000e+00 : f32
    %88 = vector.broadcast %cst_42 : f32 to vector<8x64xf32>
    %89 = arith.addf %88, %87 : vector<8x64xf32>
    %90 = arith.divf %88, %89 : vector<8x64xf32>
    %c0_43 = arith.constant 0 : index
    %c0_44 = arith.constant 0 : index
    %91 = vector.load %arg6[%c0_43, %c0_44] : memref<8x64xf32, #tpu.memory_space<vmem>>, vector<8x64xf32>
    %92 = arith.mulf %82, %91 : vector<8x64xf32>
    %93 = arith.mulf %76, %84 : vector<8x64xf32>
    %94 = arith.addf %92, %93 : vector<8x64xf32>
    %95 = math.tanh %94 : vector<8x64xf32>
    %96 = arith.mulf %90, %95 : vector<8x64xf32>
    %c0_45 = arith.constant 0 : index
    %c0_46 = arith.constant 0 : index
    %97 = vector.load %arg6[%c0_45, %c0_46] : memref<8x64xf32, #tpu.memory_space<vmem>>, vector<8x64xf32>
    tpu.vector_store %arg6[%c0_45, %c0_46], %94 {strides = array<i32>} : memref<8x64xf32, #tpu.memory_space<vmem>>, vector<8x64xf32>,
    %c0_47 = arith.constant 0 : index
    %c0_48 = arith.constant 0 : index
    %98 = vector.load %arg5[%c0_47, %c0_48] : memref<8x64xf32, #tpu.memory_space<vmem>>, vector<8x64xf32>
    tpu.vector_store %arg5[%c0_47, %c0_48], %96 {strides = array<i32>} : memref<8x64xf32, #tpu.memory_space<vmem>>, vector<8x64xf32>,
    %99 = vector.extract_strided_slice %96 {offsets = [0, 0], sizes = [8, 32], strides = [1, 1]} : vector<8x64xf32> to vector<8x32xf32>
    %100 = arith.index_cast %c1_i32 : i32 to index
    %c0_49 = arith.constant 0 : index
    %c0_50 = arith.constant 0 : index
    %101 = vector.load %arg4[%100, %c0_49, %c0_50] : memref<4x8x64xf32, #tpu.memory_space<vmem>>, vector<1x8x32xf32>
    %102 = vector.shape_cast %101 : vector<1x8x32xf32> to vector<8x32xf32>
    %103 = vector.shape_cast %99 : vector<8x32xf32> to vector<1x8x32xf32>
    tpu.vector_store %arg4[%100, %c0_49, %c0_50], %103 {strides = array<i32>} : memref<4x8x64xf32, #tpu.memory_space<vmem>>, vector<1x8x32xf32>,
    %104 = vector.extract_strided_slice %96 {offsets = [0, 32], sizes = [8, 32], strides = [1, 1]} : vector<8x64xf32> to vector<8x32xf32>
    %c3_i32_51 = arith.constant 3 : i32
    %105 = arith.subi %c3_i32_51, %c1_i32 : i32
    %106 = arith.index_cast %105 : i32 to index
    %c0_52 = arith.constant 0 : index
    %c32_53 = arith.constant 32 : index
    %107 = vector.load %arg4[%106, %c0_52, %c32_53] : memref<4x8x64xf32, #tpu.memory_space<vmem>>, vector<1x8x32xf32>
    %108 = vector.shape_cast %107 : vector<1x8x32xf32> to vector<8x32xf32>
    %109 = vector.shape_cast %104 : vector<8x32xf32> to vector<1x8x32xf32>
    tpu.vector_store %arg4[%106, %c0_52, %c32_53], %109 {strides = array<i32>} : memref<4x8x64xf32, #tpu.memory_space<vmem>>, vector<1x8x32xf32>,
    %c2_i32 = arith.constant 2 : i32
    %110 = arith.index_cast %c2_i32 : i32 to index
    %c0_54 = arith.constant 0 : index
    %c0_55 = arith.constant 0 : index
    %111 = vector.load %arg1[%110, %c0_54, %c0_55] : memref<4x8x32xf32, #tpu.memory_space<vmem>>, vector<1x8x32xf32>
    %112 = vector.shape_cast %111 : vector<1x8x32xf32> to vector<8x32xf32>
    %c3_i32_56 = arith.constant 3 : i32
    %113 = arith.subi %c3_i32_56, %c2_i32 : i32
    %114 = arith.index_cast %113 : i32 to index
    %c0_57 = arith.constant 0 : index
    %c0_58 = arith.constant 0 : index
    %115 = vector.load %arg1[%114, %c0_57, %c0_58] : memref<4x8x32xf32, #tpu.memory_space<vmem>>, vector<1x8x32xf32>
    %116 = vector.shape_cast %115 : vector<1x8x32xf32> to vector<8x32xf32>
    %c0_59 = arith.constant 0 : index
    %c0_60 = arith.constant 0 : index
    %117 = vector.load %arg5[%c0_59, %c0_60] : memref<8x64xf32, #tpu.memory_space<vmem>>, vector<8x64xf32>
    %118 = tpu.concatenate %112, %116, %117 in 1 : vector<8x32xf32>, vector<8x32xf32>, vector<8x64xf32> -> vector<8x128xf32>
    %c0_61 = arith.constant 0 : index
    %c0_62 = arith.constant 0 : index
    %119 = vector.load %arg2[%c0_61, %c0_62] : memref<128x256xf32, #tpu.memory_space<vmem>>, vector<128x256xf32>
    %cst_63 = arith.constant dense<0.000000e+00> : vector<8x256xf32>
    %120 = tpu.matmul %118, %119, %cst_63 {dimension_numbers = #tpu.dot_dimension_numbers<[1], [0], [0], [1], [0, 0, 1, 1], [], []>} : vector<8x128xf32>, vector<128x256xf32>, vector<8x256xf32> -> vector<8x256xf32>
    %c0_64 = arith.constant 0 : index
    %c0_65 = arith.constant 0 : index
    %121 = vector.load %arg3[%c0_64, %c0_65] : memref<1x256xf32, #tpu.memory_space<vmem>>, vector<1x256xf32>
    %122 = vector.broadcast %121 : vector<1x256xf32> to vector<8x256xf32>
    %123 = arith.addf %120, %122 : vector<8x256xf32>
    %124 = vector.extract_strided_slice %123 {offsets = [0, 0], sizes = [8, 64], strides = [1, 1]} : vector<8x256xf32> to vector<8x64xf32>
    %125 = arith.negf %124 : vector<8x64xf32>
    %126 = math.exp %125 : vector<8x64xf32>
    %cst_66 = arith.constant 1.000000e+00 : f32
    %127 = vector.broadcast %cst_66 : f32 to vector<8x64xf32>
    %128 = arith.addf %127, %126 : vector<8x64xf32>
    %129 = arith.divf %127, %128 : vector<8x64xf32>
    %130 = vector.extract_strided_slice %123 {offsets = [0, 64], sizes = [8, 64], strides = [1, 1]} : vector<8x256xf32> to vector<8x64xf32>
    %131 = arith.negf %130 : vector<8x64xf32>
    %132 = math.exp %131 : vector<8x64xf32>
    %cst_67 = arith.constant 1.000000e+00 : f32
    %133 = vector.broadcast %cst_67 : f32 to vector<8x64xf32>
    %134 = arith.addf %133, %132 : vector<8x64xf32>
    %135 = arith.divf %133, %134 : vector<8x64xf32>
    %136 = vector.extract_strided_slice %123 {offsets = [0, 128], sizes = [8, 64], strides = [1, 1]} : vector<8x256xf32> to vector<8x64xf32>
    %137 = math.tanh %136 : vector<8x64xf32>
    %138 = vector.extract_strided_slice %123 {offsets = [0, 192], sizes = [8, 64], strides = [1, 1]} : vector<8x256xf32> to vector<8x64xf32>
    %139 = arith.negf %138 : vector<8x64xf32>
    %140 = math.exp %139 : vector<8x64xf32>
    %cst_68 = arith.constant 1.000000e+00 : f32
    %141 = vector.broadcast %cst_68 : f32 to vector<8x64xf32>
    %142 = arith.addf %141, %140 : vector<8x64xf32>
    %143 = arith.divf %141, %142 : vector<8x64xf32>
    %c0_69 = arith.constant 0 : index
    %c0_70 = arith.constant 0 : index
    %144 = vector.load %arg6[%c0_69, %c0_70] : memref<8x64xf32, #tpu.memory_space<vmem>>, vector<8x64xf32>
    %145 = arith.mulf %135, %144 : vector<8x64xf32>
    %146 = arith.mulf %129, %137 : vector<8x64xf32>
    %147 = arith.addf %145, %146 : vector<8x64xf32>
    %148 = math.tanh %147 : vector<8x64xf32>
    %149 = arith.mulf %143, %148 : vector<8x64xf32>
    %c0_71 = arith.constant 0 : index
    %c0_72 = arith.constant 0 : index
    %150 = vector.load %arg6[%c0_71, %c0_72] : memref<8x64xf32, #tpu.memory_space<vmem>>, vector<8x64xf32>
    tpu.vector_store %arg6[%c0_71, %c0_72], %147 {strides = array<i32>} : memref<8x64xf32, #tpu.memory_space<vmem>>, vector<8x64xf32>,
    %c0_73 = arith.constant 0 : index
    %c0_74 = arith.constant 0 : index
    %151 = vector.load %arg5[%c0_73, %c0_74] : memref<8x64xf32, #tpu.memory_space<vmem>>, vector<8x64xf32>
    tpu.vector_store %arg5[%c0_73, %c0_74], %149 {strides = array<i32>} : memref<8x64xf32, #tpu.memory_space<vmem>>, vector<8x64xf32>,
    %152 = vector.extract_strided_slice %149 {offsets = [0, 0], sizes = [8, 32], strides = [1, 1]} : vector<8x64xf32> to vector<8x32xf32>
    %153 = arith.index_cast %c2_i32 : i32 to index
    %c0_75 = arith.constant 0 : index
    %c0_76 = arith.constant 0 : index
    %154 = vector.load %arg4[%153, %c0_75, %c0_76] : memref<4x8x64xf32, #tpu.memory_space<vmem>>, vector<1x8x32xf32>
    %155 = vector.shape_cast %154 : vector<1x8x32xf32> to vector<8x32xf32>
    %156 = vector.shape_cast %152 : vector<8x32xf32> to vector<1x8x32xf32>
    tpu.vector_store %arg4[%153, %c0_75, %c0_76], %156 {strides = array<i32>} : memref<4x8x64xf32, #tpu.memory_space<vmem>>, vector<1x8x32xf32>,
    %157 = vector.extract_strided_slice %149 {offsets = [0, 32], sizes = [8, 32], strides = [1, 1]} : vector<8x64xf32> to vector<8x32xf32>
    %c3_i32_77 = arith.constant 3 : i32
    %158 = arith.subi %c3_i32_77, %c2_i32 : i32
    %159 = arith.index_cast %158 : i32 to index
    %c0_78 = arith.constant 0 : index
    %c32_79 = arith.constant 32 : index
    %160 = vector.load %arg4[%159, %c0_78, %c32_79] : memref<4x8x64xf32, #tpu.memory_space<vmem>>, vector<1x8x32xf32>
    %161 = vector.shape_cast %160 : vector<1x8x32xf32> to vector<8x32xf32>
    %162 = vector.shape_cast %157 : vector<8x32xf32> to vector<1x8x32xf32>
    tpu.vector_store %arg4[%159, %c0_78, %c32_79], %162 {strides = array<i32>} : memref<4x8x64xf32, #tpu.memory_space<vmem>>, vector<1x8x32xf32>,
    %c3_i32_80 = arith.constant 3 : i32
    %163 = arith.index_cast %c3_i32_80 : i32 to index
    %c0_81 = arith.constant 0 : index
    %c0_82 = arith.constant 0 : index
    %164 = vector.load %arg1[%163, %c0_81, %c0_82] : memref<4x8x32xf32, #tpu.memory_space<vmem>>, vector<1x8x32xf32>
    %165 = vector.shape_cast %164 : vector<1x8x32xf32> to vector<8x32xf32>
    %c3_i32_83 = arith.constant 3 : i32
    %166 = arith.subi %c3_i32_83, %c3_i32_80 : i32
    %167 = arith.index_cast %166 : i32 to index
    %c0_84 = arith.constant 0 : index
    %c0_85 = arith.constant 0 : index
    %168 = vector.load %arg1[%167, %c0_84, %c0_85] : memref<4x8x32xf32, #tpu.memory_space<vmem>>, vector<1x8x32xf32>
    %169 = vector.shape_cast %168 : vector<1x8x32xf32> to vector<8x32xf32>
    %c0_86 = arith.constant 0 : index
    %c0_87 = arith.constant 0 : index
    %170 = vector.load %arg5[%c0_86, %c0_87] : memref<8x64xf32, #tpu.memory_space<vmem>>, vector<8x64xf32>
    %171 = tpu.concatenate %165, %169, %170 in 1 : vector<8x32xf32>, vector<8x32xf32>, vector<8x64xf32> -> vector<8x128xf32>
    %c0_88 = arith.constant 0 : index
    %c0_89 = arith.constant 0 : index
    %172 = vector.load %arg2[%c0_88, %c0_89] : memref<128x256xf32, #tpu.memory_space<vmem>>, vector<128x256xf32>
    %cst_90 = arith.constant dense<0.000000e+00> : vector<8x256xf32>
    %173 = tpu.matmul %171, %172, %cst_90 {dimension_numbers = #tpu.dot_dimension_numbers<[1], [0], [0], [1], [0, 0, 1, 1], [], []>} : vector<8x128xf32>, vector<128x256xf32>, vector<8x256xf32> -> vector<8x256xf32>
    %c0_91 = arith.constant 0 : index
    %c0_92 = arith.constant 0 : index
    %174 = vector.load %arg3[%c0_91, %c0_92] : memref<1x256xf32, #tpu.memory_space<vmem>>, vector<1x256xf32>
    %175 = vector.broadcast %174 : vector<1x256xf32> to vector<8x256xf32>
    %176 = arith.addf %173, %175 : vector<8x256xf32>
    %177 = vector.extract_strided_slice %176 {offsets = [0, 0], sizes = [8, 64], strides = [1, 1]} : vector<8x256xf32> to vector<8x64xf32>
    %178 = arith.negf %177 : vector<8x64xf32>
    %179 = math.exp %178 : vector<8x64xf32>
    %cst_93 = arith.constant 1.000000e+00 : f32
    %180 = vector.broadcast %cst_93 : f32 to vector<8x64xf32>
    %181 = arith.addf %180, %179 : vector<8x64xf32>
    %182 = arith.divf %180, %181 : vector<8x64xf32>
    %183 = vector.extract_strided_slice %176 {offsets = [0, 64], sizes = [8, 64], strides = [1, 1]} : vector<8x256xf32> to vector<8x64xf32>
    %184 = arith.negf %183 : vector<8x64xf32>
    %185 = math.exp %184 : vector<8x64xf32>
    %cst_94 = arith.constant 1.000000e+00 : f32
    %186 = vector.broadcast %cst_94 : f32 to vector<8x64xf32>
    %187 = arith.addf %186, %185 : vector<8x64xf32>
    %188 = arith.divf %186, %187 : vector<8x64xf32>
    %189 = vector.extract_strided_slice %176 {offsets = [0, 128], sizes = [8, 64], strides = [1, 1]} : vector<8x256xf32> to vector<8x64xf32>
    %190 = math.tanh %189 : vector<8x64xf32>
    %191 = vector.extract_strided_slice %176 {offsets = [0, 192], sizes = [8, 64], strides = [1, 1]} : vector<8x256xf32> to vector<8x64xf32>
    %192 = arith.negf %191 : vector<8x64xf32>
    %193 = math.exp %192 : vector<8x64xf32>
    %cst_95 = arith.constant 1.000000e+00 : f32
    %194 = vector.broadcast %cst_95 : f32 to vector<8x64xf32>
    %195 = arith.addf %194, %193 : vector<8x64xf32>
    %196 = arith.divf %194, %195 : vector<8x64xf32>
    %c0_96 = arith.constant 0 : index
    %c0_97 = arith.constant 0 : index
    %197 = vector.load %arg6[%c0_96, %c0_97] : memref<8x64xf32, #tpu.memory_space<vmem>>, vector<8x64xf32>
    %198 = arith.mulf %188, %197 : vector<8x64xf32>
    %199 = arith.mulf %182, %190 : vector<8x64xf32>
    %200 = arith.addf %198, %199 : vector<8x64xf32>
    %201 = math.tanh %200 : vector<8x64xf32>
    %202 = arith.mulf %196, %201 : vector<8x64xf32>
    %c0_98 = arith.constant 0 : index
    %c0_99 = arith.constant 0 : index
    %203 = vector.load %arg6[%c0_98, %c0_99] : memref<8x64xf32, #tpu.memory_space<vmem>>, vector<8x64xf32>
    tpu.vector_store %arg6[%c0_98, %c0_99], %200 {strides = array<i32>} : memref<8x64xf32, #tpu.memory_space<vmem>>, vector<8x64xf32>,
    %c0_100 = arith.constant 0 : index
    %c0_101 = arith.constant 0 : index
    %204 = vector.load %arg5[%c0_100, %c0_101] : memref<8x64xf32, #tpu.memory_space<vmem>>, vector<8x64xf32>
    tpu.vector_store %arg5[%c0_100, %c0_101], %202 {strides = array<i32>} : memref<8x64xf32, #tpu.memory_space<vmem>>, vector<8x64xf32>,
    %205 = vector.extract_strided_slice %202 {offsets = [0, 0], sizes = [8, 32], strides = [1, 1]} : vector<8x64xf32> to vector<8x32xf32>
    %206 = arith.index_cast %c3_i32_80 : i32 to index
    %c0_102 = arith.constant 0 : index
    %c0_103 = arith.constant 0 : index
    %207 = vector.load %arg4[%206, %c0_102, %c0_103] : memref<4x8x64xf32, #tpu.memory_space<vmem>>, vector<1x8x32xf32>
    %208 = vector.shape_cast %207 : vector<1x8x32xf32> to vector<8x32xf32>
    %209 = vector.shape_cast %205 : vector<8x32xf32> to vector<1x8x32xf32>
    tpu.vector_store %arg4[%206, %c0_102, %c0_103], %209 {strides = array<i32>} : memref<4x8x64xf32, #tpu.memory_space<vmem>>, vector<1x8x32xf32>,
    %210 = vector.extract_strided_slice %202 {offsets = [0, 32], sizes = [8, 32], strides = [1, 1]} : vector<8x64xf32> to vector<8x32xf32>
    %c3_i32_104 = arith.constant 3 : i32
    %211 = arith.subi %c3_i32_104, %c3_i32_80 : i32
    %212 = arith.index_cast %211 : i32 to index
    %c0_105 = arith.constant 0 : index
    %c32_106 = arith.constant 32 : index
    %213 = vector.load %arg4[%212, %c0_105, %c32_106] : memref<4x8x64xf32, #tpu.memory_space<vmem>>, vector<1x8x32xf32>
    %214 = vector.shape_cast %213 : vector<1x8x32xf32> to vector<8x32xf32>
    %215 = vector.shape_cast %210 : vector<8x32xf32> to vector<1x8x32xf32>
    tpu.vector_store %arg4[%212, %c0_105, %c32_106], %215 {strides = array<i32>} : memref<4x8x64xf32, #tpu.memory_space<vmem>>, vector<1x8x32xf32>,
    %c4_i32 = arith.constant 4 : i32
    return
  }
  func.func @transform_0(%arg0: i32) -> (i32, i32, i32) {
    %c0_i32 = arith.constant 0 : i32
    %c0_i32_0 = arith.constant 0 : i32
    %c0_i32_1 = arith.constant 0 : i32
    return %c0_i32, %arg0, %c0_i32_0 : i32, i32, i32
  }
  func.func @transform_1(%arg0: i32) -> (i32, i32) {
    %c0_i32 = arith.constant 0 : i32
    %c0_i32_0 = arith.constant 0 : i32
    %c0_i32_1 = arith.constant 0 : i32
    return %c0_i32, %c0_i32_0 : i32, i32
  }
  func.func @transform_2(%arg0: i32) -> (i32, i32) {
    %c0_i32 = arith.constant 0 : i32
    %c0_i32_0 = arith.constant 0 : i32
    %c0_i32_1 = arith.constant 0 : i32
    return %c0_i32, %c0_i32_0 : i32, i32
  }
  func.func @transform_3(%arg0: i32) -> (i32, i32, i32) {
    %c0_i32 = arith.constant 0 : i32
    %c0_i32_0 = arith.constant 0 : i32
    %c0_i32_1 = arith.constant 0 : i32
    return %c0_i32, %arg0, %c0_i32_0 : i32, i32, i32
  }
}

module attributes {stable_mosaic.version = 11 : i64} {
  func.func @_fc_mlp_res_kernel(%arg0: i32, %arg1: memref<32x64xf32, #tpu.memory_space<vmem>>, %arg2: memref<32x64xf32, #tpu.memory_space<vmem>>, %arg3: memref<32x32xf32, #tpu.memory_space<vmem>>, %arg4: memref<64x32xf32, #tpu.memory_space<vmem>>, %arg5: memref<64x32xf32, #tpu.memory_space<vmem>>, %arg6: memref<1x32xf32, #tpu.memory_space<vmem>>, %arg7: memref<32x128xf32, #tpu.memory_space<vmem>>, %arg8: memref<1x128xf32, #tpu.memory_space<vmem>>, %arg9: memref<128x32xf32, #tpu.memory_space<vmem>>, %arg10: memref<1x32xf32, #tpu.memory_space<vmem>>, %arg11: memref<32x32xf32, #tpu.memory_space<vmem>>) attributes {dimension_semantics = [#tpu.dimension_semantics<parallel>], iteration_bounds = array<i64: 1>, scalar_prefetch = 0 : i64, scratch_operands = 0 : i64, tpu.core_type = #tpu.core_type<tc>, window_params = [{transform_indices = @transform_0, window_bounds = array<i64: 32, 64>}, {transform_indices = @transform_1, window_bounds = array<i64: 32, 64>}, {transform_indices = @transform_2, window_bounds = array<i64: 32, 32>}, {pipeline_mode = #tpu.pipeline_mode<synchronous>, transform_indices = @transform_3, window_bounds = array<i64: 64, 32>}, {pipeline_mode = #tpu.pipeline_mode<synchronous>, transform_indices = @transform_4, window_bounds = array<i64: 64, 32>}, {pipeline_mode = #tpu.pipeline_mode<synchronous>, transform_indices = @transform_5, window_bounds = array<i64: 1, 32>}, {pipeline_mode = #tpu.pipeline_mode<synchronous>, transform_indices = @transform_6, window_bounds = array<i64: 32, 128>}, {pipeline_mode = #tpu.pipeline_mode<synchronous>, transform_indices = @transform_7, window_bounds = array<i64: 1, 128>}, {pipeline_mode = #tpu.pipeline_mode<synchronous>, transform_indices = @transform_8, window_bounds = array<i64: 128, 32>}, {pipeline_mode = #tpu.pipeline_mode<synchronous>, transform_indices = @transform_9, window_bounds = array<i64: 1, 32>}, {transform_indices = @transform_10, window_bounds = array<i64: 32, 32>}]} {
    %c0 = arith.constant 0 : index
    %c0_0 = arith.constant 0 : index
    %0 = vector.load %arg1[%c0, %c0_0] : memref<32x64xf32, #tpu.memory_space<vmem>>, vector<32x64xf32>
    %c0_1 = arith.constant 0 : index
    %c0_2 = arith.constant 0 : index
    %1 = vector.load %arg4[%c0_1, %c0_2] : memref<64x32xf32, #tpu.memory_space<vmem>>, vector<64x32xf32>
    %cst = arith.constant dense<0.000000e+00> : vector<32x32xf32>
    %2 = tpu.matmul %0, %1, %cst {dimension_numbers = #tpu.dot_dimension_numbers<[1], [0], [0], [1], [0, 0, 1, 1], [], []>} : vector<32x64xf32>, vector<64x32xf32>, vector<32x32xf32> -> vector<32x32xf32>
    %c0_3 = arith.constant 0 : index
    %c0_4 = arith.constant 0 : index
    %3 = vector.load %arg2[%c0_3, %c0_4] : memref<32x64xf32, #tpu.memory_space<vmem>>, vector<32x64xf32>
    %c0_5 = arith.constant 0 : index
    %c0_6 = arith.constant 0 : index
    %4 = vector.load %arg5[%c0_5, %c0_6] : memref<64x32xf32, #tpu.memory_space<vmem>>, vector<64x32xf32>
    %cst_7 = arith.constant dense<0.000000e+00> : vector<32x32xf32>
    %5 = tpu.matmul %3, %4, %cst_7 {dimension_numbers = #tpu.dot_dimension_numbers<[1], [0], [0], [1], [0, 0, 1, 1], [], []>} : vector<32x64xf32>, vector<64x32xf32>, vector<32x32xf32> -> vector<32x32xf32>
    %6 = arith.addf %2, %5 : vector<32x32xf32>
    %c0_8 = arith.constant 0 : index
    %c0_9 = arith.constant 0 : index
    %7 = vector.load %arg6[%c0_8, %c0_9] : memref<1x32xf32, #tpu.memory_space<vmem>>, vector<1x32xf32>
    %8 = vector.broadcast %7 : vector<1x32xf32> to vector<32x32xf32>
    %9 = arith.addf %6, %8 : vector<32x32xf32>
    %c0_10 = arith.constant 0 : index
    %c0_11 = arith.constant 0 : index
    %10 = vector.load %arg7[%c0_10, %c0_11] : memref<32x128xf32, #tpu.memory_space<vmem>>, vector<32x128xf32>
    %cst_12 = arith.constant dense<0.000000e+00> : vector<32x128xf32>
    %11 = tpu.matmul %9, %10, %cst_12 {dimension_numbers = #tpu.dot_dimension_numbers<[1], [0], [0], [1], [0, 0, 1, 1], [], []>} : vector<32x32xf32>, vector<32x128xf32>, vector<32x128xf32> -> vector<32x128xf32>
    %c0_13 = arith.constant 0 : index
    %c0_14 = arith.constant 0 : index
    %12 = vector.load %arg8[%c0_13, %c0_14] : memref<1x128xf32, #tpu.memory_space<vmem>>, vector<1x128xf32>
    %13 = vector.broadcast %12 : vector<1x128xf32> to vector<32x128xf32>
    %14 = arith.addf %11, %13 : vector<32x128xf32>
    %cst_15 = arith.constant 5.000000e-01 : f32
    %15 = vector.broadcast %cst_15 : f32 to vector<32x128xf32>
    %16 = arith.mulf %15, %14 : vector<32x128xf32>
    %cst_16 = arith.constant 4.471500e-02 : f32
    %17 = vector.broadcast %cst_16 : f32 to vector<32x128xf32>
    %18 = arith.mulf %17, %14 : vector<32x128xf32>
    %19 = arith.mulf %18, %14 : vector<32x128xf32>
    %20 = arith.mulf %19, %14 : vector<32x128xf32>
    %21 = arith.addf %14, %20 : vector<32x128xf32>
    %cst_17 = arith.constant 0.797884583 : f32
    %22 = vector.broadcast %cst_17 : f32 to vector<32x128xf32>
    %23 = arith.mulf %22, %21 : vector<32x128xf32>
    %24 = math.tanh %23 : vector<32x128xf32>
    %cst_18 = arith.constant 1.000000e+00 : f32
    %25 = vector.broadcast %cst_18 : f32 to vector<32x128xf32>
    %26 = arith.addf %25, %24 : vector<32x128xf32>
    %27 = arith.mulf %16, %26 : vector<32x128xf32>
    %c0_19 = arith.constant 0 : index
    %c0_20 = arith.constant 0 : index
    %28 = vector.load %arg9[%c0_19, %c0_20] : memref<128x32xf32, #tpu.memory_space<vmem>>, vector<128x32xf32>
    %cst_21 = arith.constant dense<0.000000e+00> : vector<32x32xf32>
    %29 = tpu.matmul %27, %28, %cst_21 {dimension_numbers = #tpu.dot_dimension_numbers<[1], [0], [0], [1], [0, 0, 1, 1], [], []>} : vector<32x128xf32>, vector<128x32xf32>, vector<32x32xf32> -> vector<32x32xf32>
    %c0_22 = arith.constant 0 : index
    %c0_23 = arith.constant 0 : index
    %30 = vector.load %arg10[%c0_22, %c0_23] : memref<1x32xf32, #tpu.memory_space<vmem>>, vector<1x32xf32>
    %31 = vector.broadcast %30 : vector<1x32xf32> to vector<32x32xf32>
    %32 = arith.addf %29, %31 : vector<32x32xf32>
    %c0_24 = arith.constant 0 : index
    %c0_25 = arith.constant 0 : index
    %33 = vector.load %arg3[%c0_24, %c0_25] : memref<32x32xf32, #tpu.memory_space<vmem>>, vector<32x32xf32>
    %34 = arith.addf %32, %33 : vector<32x32xf32>
    %c0_26 = arith.constant 0 : index
    %c0_27 = arith.constant 0 : index
    %35 = vector.load %arg11[%c0_26, %c0_27] : memref<32x32xf32, #tpu.memory_space<vmem>>, vector<32x32xf32>
    tpu.vector_store %arg11[%c0_26, %c0_27], %34 {strides = array<i32>} : memref<32x32xf32, #tpu.memory_space<vmem>>, vector<32x32xf32>,
    return
  }
  func.func @transform_0(%arg0: i32) -> (i32, i32) {
    %c0_i32 = arith.constant 0 : i32
    %c0_i32_0 = arith.constant 0 : i32
    return %arg0, %c0_i32 : i32, i32
  }
  func.func @transform_1(%arg0: i32) -> (i32, i32) {
    %c0_i32 = arith.constant 0 : i32
    %c0_i32_0 = arith.constant 0 : i32
    return %arg0, %c0_i32 : i32, i32
  }
  func.func @transform_2(%arg0: i32) -> (i32, i32) {
    %c0_i32 = arith.constant 0 : i32
    %c0_i32_0 = arith.constant 0 : i32
    return %arg0, %c0_i32 : i32, i32
  }
  func.func @transform_3(%arg0: i32) -> (i32, i32) {
    %c0_i32 = arith.constant 0 : i32
    %c0_i32_0 = arith.constant 0 : i32
    %c0_i32_1 = arith.constant 0 : i32
    return %c0_i32, %c0_i32_0 : i32, i32
  }
  func.func @transform_4(%arg0: i32) -> (i32, i32) {
    %c0_i32 = arith.constant 0 : i32
    %c0_i32_0 = arith.constant 0 : i32
    %c0_i32_1 = arith.constant 0 : i32
    return %c0_i32, %c0_i32_0 : i32, i32
  }
  func.func @transform_5(%arg0: i32) -> (i32, i32) {
    %c0_i32 = arith.constant 0 : i32
    %c0_i32_0 = arith.constant 0 : i32
    %c0_i32_1 = arith.constant 0 : i32
    return %c0_i32, %c0_i32_0 : i32, i32
  }
  func.func @transform_6(%arg0: i32) -> (i32, i32) {
    %c0_i32 = arith.constant 0 : i32
    %c0_i32_0 = arith.constant 0 : i32
    %c0_i32_1 = arith.constant 0 : i32
    return %c0_i32, %c0_i32_0 : i32, i32
  }
  func.func @transform_7(%arg0: i32) -> (i32, i32) {
    %c0_i32 = arith.constant 0 : i32
    %c0_i32_0 = arith.constant 0 : i32
    %c0_i32_1 = arith.constant 0 : i32
    return %c0_i32, %c0_i32_0 : i32, i32
  }
  func.func @transform_8(%arg0: i32) -> (i32, i32) {
    %c0_i32 = arith.constant 0 : i32
    %c0_i32_0 = arith.constant 0 : i32
    %c0_i32_1 = arith.constant 0 : i32
    return %c0_i32, %c0_i32_0 : i32, i32
  }
  func.func @transform_9(%arg0: i32) -> (i32, i32) {
    %c0_i32 = arith.constant 0 : i32
    %c0_i32_0 = arith.constant 0 : i32
    %c0_i32_1 = arith.constant 0 : i32
    return %c0_i32, %c0_i32_0 : i32, i32
  }
  func.func @transform_10(%arg0: i32) -> (i32, i32) {
    %c0_i32 = arith.constant 0 : i32
    %c0_i32_0 = arith.constant 0 : i32
    return %arg0, %c0_i32 : i32, i32
  }
}

module attributes {stable_mosaic.version = 11 : i64} {
  func.func @_ln_mlp_res_kernel(%arg0: i32, %arg1: memref<32x32xf32, #tpu.memory_space<vmem>>, %arg2: memref<1x32xf32, #tpu.memory_space<vmem>>, %arg3: memref<1x32xf32, #tpu.memory_space<vmem>>, %arg4: memref<32x128xf32, #tpu.memory_space<vmem>>, %arg5: memref<1x128xf32, #tpu.memory_space<vmem>>, %arg6: memref<128x32xf32, #tpu.memory_space<vmem>>, %arg7: memref<1x32xf32, #tpu.memory_space<vmem>>, %arg8: memref<32x32xf32, #tpu.memory_space<vmem>>) attributes {dimension_semantics = [#tpu.dimension_semantics<parallel>], iteration_bounds = array<i64: 1>, scalar_prefetch = 0 : i64, scratch_operands = 0 : i64, tpu.core_type = #tpu.core_type<tc>, window_params = [{transform_indices = @transform_0, window_bounds = array<i64: 32, 32>}, {pipeline_mode = #tpu.pipeline_mode<synchronous>, transform_indices = @transform_1, window_bounds = array<i64: 1, 32>}, {pipeline_mode = #tpu.pipeline_mode<synchronous>, transform_indices = @transform_2, window_bounds = array<i64: 1, 32>}, {pipeline_mode = #tpu.pipeline_mode<synchronous>, transform_indices = @transform_3, window_bounds = array<i64: 32, 128>}, {pipeline_mode = #tpu.pipeline_mode<synchronous>, transform_indices = @transform_4, window_bounds = array<i64: 1, 128>}, {pipeline_mode = #tpu.pipeline_mode<synchronous>, transform_indices = @transform_5, window_bounds = array<i64: 128, 32>}, {pipeline_mode = #tpu.pipeline_mode<synchronous>, transform_indices = @transform_6, window_bounds = array<i64: 1, 32>}, {transform_indices = @transform_7, window_bounds = array<i64: 32, 32>}]} {
    %c0 = arith.constant 0 : index
    %c0_0 = arith.constant 0 : index
    %0 = vector.load %arg1[%c0, %c0_0] : memref<32x32xf32, #tpu.memory_space<vmem>>, vector<32x32xf32>
    %cst = arith.constant dense<0.000000e+00> : vector<32xf32>
    %1 = vector.multi_reduction <add>, %0, %cst [1] : vector<32x32xf32> to vector<32xf32>
    %2 = vector.shape_cast %1 : vector<32xf32> to vector<32x1xf32>
    %cst_1 = arith.constant 3.200000e+01 : f32
    %3 = vector.broadcast %cst_1 : f32 to vector<32x1xf32>
    %4 = arith.divf %2, %3 : vector<32x1xf32>
    %5 = vector.broadcast %4 : vector<32x1xf32> to vector<32x32xf32>
    %6 = arith.subf %0, %5 : vector<32x32xf32>
    %7 = arith.mulf %6, %6 : vector<32x32xf32>
    %cst_2 = arith.constant dense<0.000000e+00> : vector<32xf32>
    %8 = vector.multi_reduction <add>, %7, %cst_2 [1] : vector<32x32xf32> to vector<32xf32>
    %9 = vector.shape_cast %8 : vector<32xf32> to vector<32x1xf32>
    %cst_3 = arith.constant 3.200000e+01 : f32
    %10 = vector.broadcast %cst_3 : f32 to vector<32x1xf32>
    %11 = arith.divf %9, %10 : vector<32x1xf32>
    %cst_4 = arith.constant 9.99999974E-6 : f32
    %12 = vector.broadcast %cst_4 : f32 to vector<32x1xf32>
    %13 = arith.addf %11, %12 : vector<32x1xf32>
    %14 = math.rsqrt %13 : vector<32x1xf32>
    %15 = vector.broadcast %14 : vector<32x1xf32> to vector<32x32xf32>
    %16 = arith.mulf %6, %15 : vector<32x32xf32>
    %c0_5 = arith.constant 0 : index
    %c0_6 = arith.constant 0 : index
    %17 = vector.load %arg2[%c0_5, %c0_6] : memref<1x32xf32, #tpu.memory_space<vmem>>, vector<1x32xf32>
    %18 = vector.broadcast %17 : vector<1x32xf32> to vector<32x32xf32>
    %19 = arith.mulf %16, %18 : vector<32x32xf32>
    %c0_7 = arith.constant 0 : index
    %c0_8 = arith.constant 0 : index
    %20 = vector.load %arg3[%c0_7, %c0_8] : memref<1x32xf32, #tpu.memory_space<vmem>>, vector<1x32xf32>
    %21 = vector.broadcast %20 : vector<1x32xf32> to vector<32x32xf32>
    %22 = arith.addf %19, %21 : vector<32x32xf32>
    %c0_9 = arith.constant 0 : index
    %c0_10 = arith.constant 0 : index
    %23 = vector.load %arg4[%c0_9, %c0_10] : memref<32x128xf32, #tpu.memory_space<vmem>>, vector<32x128xf32>
    %cst_11 = arith.constant dense<0.000000e+00> : vector<32x128xf32>
    %24 = tpu.matmul %22, %23, %cst_11 {dimension_numbers = #tpu.dot_dimension_numbers<[1], [0], [0], [1], [0, 0, 1, 1], [], []>} : vector<32x32xf32>, vector<32x128xf32>, vector<32x128xf32> -> vector<32x128xf32>
    %c0_12 = arith.constant 0 : index
    %c0_13 = arith.constant 0 : index
    %25 = vector.load %arg5[%c0_12, %c0_13] : memref<1x128xf32, #tpu.memory_space<vmem>>, vector<1x128xf32>
    %26 = vector.broadcast %25 : vector<1x128xf32> to vector<32x128xf32>
    %27 = arith.addf %24, %26 : vector<32x128xf32>
    %cst_14 = arith.constant 5.000000e-01 : f32
    %28 = vector.broadcast %cst_14 : f32 to vector<32x128xf32>
    %29 = arith.mulf %28, %27 : vector<32x128xf32>
    %cst_15 = arith.constant 4.471500e-02 : f32
    %30 = vector.broadcast %cst_15 : f32 to vector<32x128xf32>
    %31 = arith.mulf %30, %27 : vector<32x128xf32>
    %32 = arith.mulf %31, %27 : vector<32x128xf32>
    %33 = arith.mulf %32, %27 : vector<32x128xf32>
    %34 = arith.addf %27, %33 : vector<32x128xf32>
    %cst_16 = arith.constant 0.797884583 : f32
    %35 = vector.broadcast %cst_16 : f32 to vector<32x128xf32>
    %36 = arith.mulf %35, %34 : vector<32x128xf32>
    %37 = math.tanh %36 : vector<32x128xf32>
    %cst_17 = arith.constant 1.000000e+00 : f32
    %38 = vector.broadcast %cst_17 : f32 to vector<32x128xf32>
    %39 = arith.addf %38, %37 : vector<32x128xf32>
    %40 = arith.mulf %29, %39 : vector<32x128xf32>
    %c0_18 = arith.constant 0 : index
    %c0_19 = arith.constant 0 : index
    %41 = vector.load %arg6[%c0_18, %c0_19] : memref<128x32xf32, #tpu.memory_space<vmem>>, vector<128x32xf32>
    %cst_20 = arith.constant dense<0.000000e+00> : vector<32x32xf32>
    %42 = tpu.matmul %40, %41, %cst_20 {dimension_numbers = #tpu.dot_dimension_numbers<[1], [0], [0], [1], [0, 0, 1, 1], [], []>} : vector<32x128xf32>, vector<128x32xf32>, vector<32x32xf32> -> vector<32x32xf32>
    %c0_21 = arith.constant 0 : index
    %c0_22 = arith.constant 0 : index
    %43 = vector.load %arg7[%c0_21, %c0_22] : memref<1x32xf32, #tpu.memory_space<vmem>>, vector<1x32xf32>
    %44 = vector.broadcast %43 : vector<1x32xf32> to vector<32x32xf32>
    %45 = arith.addf %42, %44 : vector<32x32xf32>
    %46 = arith.addf %45, %0 : vector<32x32xf32>
    %c0_23 = arith.constant 0 : index
    %c0_24 = arith.constant 0 : index
    %47 = vector.load %arg8[%c0_23, %c0_24] : memref<32x32xf32, #tpu.memory_space<vmem>>, vector<32x32xf32>
    tpu.vector_store %arg8[%c0_23, %c0_24], %46 {strides = array<i32>} : memref<32x32xf32, #tpu.memory_space<vmem>>, vector<32x32xf32>,
    return
  }
  func.func @transform_0(%arg0: i32) -> (i32, i32) {
    %c0_i32 = arith.constant 0 : i32
    %c0_i32_0 = arith.constant 0 : i32
    return %arg0, %c0_i32 : i32, i32
  }
  func.func @transform_1(%arg0: i32) -> (i32, i32) {
    %c0_i32 = arith.constant 0 : i32
    %c0_i32_0 = arith.constant 0 : i32
    %c0_i32_1 = arith.constant 0 : i32
    return %c0_i32, %c0_i32_0 : i32, i32
  }
  func.func @transform_2(%arg0: i32) -> (i32, i32) {
    %c0_i32 = arith.constant 0 : i32
    %c0_i32_0 = arith.constant 0 : i32
    %c0_i32_1 = arith.constant 0 : i32
    return %c0_i32, %c0_i32_0 : i32, i32
  }
  func.func @transform_3(%arg0: i32) -> (i32, i32) {
    %c0_i32 = arith.constant 0 : i32
    %c0_i32_0 = arith.constant 0 : i32
    %c0_i32_1 = arith.constant 0 : i32
    return %c0_i32, %c0_i32_0 : i32, i32
  }
  func.func @transform_4(%arg0: i32) -> (i32, i32) {
    %c0_i32 = arith.constant 0 : i32
    %c0_i32_0 = arith.constant 0 : i32
    %c0_i32_1 = arith.constant 0 : i32
    return %c0_i32, %c0_i32_0 : i32, i32
  }
  func.func @transform_5(%arg0: i32) -> (i32, i32) {
    %c0_i32 = arith.constant 0 : i32
    %c0_i32_0 = arith.constant 0 : i32
    %c0_i32_1 = arith.constant 0 : i32
    return %c0_i32, %c0_i32_0 : i32, i32
  }
  func.func @transform_6(%arg0: i32) -> (i32, i32) {
    %c0_i32 = arith.constant 0 : i32
    %c0_i32_0 = arith.constant 0 : i32
    %c0_i32_1 = arith.constant 0 : i32
    return %c0_i32, %c0_i32_0 : i32, i32
  }
  func.func @transform_7(%arg0: i32) -> (i32, i32) {
    %c0_i32 = arith.constant 0 : i32
    %c0_i32_0 = arith.constant 0 : i32
    return %arg0, %c0_i32 : i32, i32
  }
}

</mosaic_0001>

<llo_original>
// kernel: spectral_unit_forward.5
$region0: #{spectral_unit_forward.5}
  #allocation0 [shape = 'u32[]', space=smem, size = 0x4, offset = 0x4, fixed_abs, tag = 'smem constant byte address 0x4 - core index']
  #allocation1 [shape = 'u32[144,128]{1,0:T(1,128)}', space=vmem, size = 0x12000, scoped, tag = 'internal scratch']
  %s0 = inlined_call_operand.hbm [shape: f32[32,32], index: 0, kind: input, shape index: {}]
  %s1 = inlined_call_operand.vmem [shape: f32[1,32], index: 1, kind: input, shape index: {}]
  %s2 = inlined_call_operand.vmem [shape: f32[1,32], index: 2, kind: input, shape index: {}]
  %s3 = inlined_call_operand.vmem [shape: f32[32,32], index: 3, kind: output, shape index: {}]
  %s4 = sld [smem:[#allocation0]]
  $region26: #{spectral_unit_forward.5} parent=0
    _
  %s6 = ssub.s32 1, %s4
  %s7 = scalar_select 0, %s6, %s4
  $region1: #{spectral_unit_forward.5} parent=0
    #allocation2 [shape = 'u8[16384]{0}', space=vmem, size = 0x4000, scoped, tag = 'input window, operand 0, single buffered']
    #allocation3 [shape = 's32[1]{0}', space=sflag, size = 0x4, scoped, tag = 'scoped memory for spectral_unit_forward.5']
    %8 = vsyncpa [#allocation3], 0
    // Predicated region
    $region2: #{spectral_unit_forward.5} parent=1 // pred_check
      _
    $region3: #{spectral_unit_forward.5} parent=1 // pred_check_branch
      %10 = sbr.rel (0) target = $region5
    $region4: #{spectral_unit_forward.5} parent=1 // pred_region
      %s12 = ssub.s32 512, 512
      %13 = vsyncadd [#allocation3], %s12
      %s14 = sshll.u32 [#allocation2], 4
      %s15 = int_to_ptr.vmem [resolvable:$true] %s14
      %20 = dma.hbm_to_vmem [thread:$0]  %s0, 512, %s15, [#allocation3], 128, 128, 8
    $region5: #{spectral_unit_forward.5} parent=1 // pred_fallthru
      _
    // Predicated region
    $region6: #{spectral_unit_forward.5} parent=1 // pred_check
      _
    $region7: #{spectral_unit_forward.5} parent=1 // pred_check_branch
      %22 = sbr.rel (0) target = $region9
    $region8: #{spectral_unit_forward.5} parent=1 // pred_region
      _
    $region9: #{spectral_unit_forward.5} parent=1 // pred_fallthru
      _
    // Predicated region
    $region10: #{spectral_unit_forward.5} parent=1 // pred_check
      _
    $region11: #{spectral_unit_forward.5} parent=1 // pred_check_branch
      %24 = sbr.rel (0) target = $region13
    $region12: #{spectral_unit_forward.5} parent=1 // pred_region
      _
    $region13: #{spectral_unit_forward.5} parent=1 // pred_fallthru
      _
    // Predicated region
    $region14: #{spectral_unit_forward.5} parent=1 // pred_check
      _
    $region15: #{spectral_unit_forward.5} parent=1 // pred_check_branch
      %26 = sbr.rel (0) target = $region17
    $region16: #{spectral_unit_forward.5} parent=1 // pred_region
      %27 = dma.done [#allocation3], 512
    $region17: #{spectral_unit_forward.5} parent=1 // pred_fallthru
      _
    %v28 = vld [vmem:[#allocation2] sm:$0xff]
    %v29 = vld [vmem:[#allocation2 + $0x8] sm:$0xff]
    %v30 = vld [vmem:[#allocation2 + $0x10] sm:$0xff]
    %v31 = vld [vmem:[#allocation2 + $0x18] sm:$0xff]
    %vm32 = vcmask 261120
    %v33 = vsel %vm32, %v28, 0.0
    %34 = vadd.xlane.f32.xlu0 %v33
    %v35 = vpop.xlane.xlu0 %34
    %v36 = vsel %vm32, %v29, 0.0
    %37 = vadd.xlane.f32.xlu0 %v36
    %v38 = vpop.xlane.xlu0 %37
    %v39 = vsel %vm32, %v30, 0.0
    %40 = vadd.xlane.f32.xlu0 %v39
    %v41 = vpop.xlane.xlu0 %40
    %v42 = vsel %vm32, %v31, 0.0
    %43 = vadd.xlane.f32.xlu0 %v42
    %v44 = vpop.xlane.xlu0 %43
    %v45 = vrcp.pop 32.0
    %v46 = vmul.f32 %v35, %v45
    %v47 = vmul.f32 %v38, %v45
    %v48 = vmul.f32 %v41, %v45
    %v49 = vmul.f32 %v44, %v45
    %v50 = vsub.f32 %v28, %v46
    %v51 = vsub.f32 %v29, %v47
    %v52 = vsub.f32 %v30, %v48
    %v53 = vsub.f32 %v31, %v49
    %v54 = vmul.f32 %v50, %v50
    %v55 = vmul.f32 %v51, %v51
    %v56 = vmul.f32 %v52, %v52
    %v57 = vmul.f32 %v53, %v53
    %v58 = vsel %vm32, %v54, 0.0
    %59 = vadd.xlane.f32.xlu0 %v58
    %v60 = vpop.xlane.xlu0 %59
    %v61 = vsel %vm32, %v55, 0.0
    %62 = vadd.xlane.f32.xlu0 %v61
    %v63 = vpop.xlane.xlu0 %62
    %v64 = vsel %vm32, %v56, 0.0
    %65 = vadd.xlane.f32.xlu0 %v64
    %v66 = vpop.xlane.xlu0 %65
    %v67 = vsel %vm32, %v57, 0.0
    %68 = vadd.xlane.f32.xlu0 %v67
    %v69 = vpop.xlane.xlu0 %68
    %v70 = vmul.f32 %v60, %v45
    %v71 = vmul.f32 %v63, %v45
    %v72 = vmul.f32 %v66, %v45
    %v73 = vmul.f32 %v69, %v45
    %v74 = vadd.f32 %v70, 1e-05
    %v75 = vadd.f32 %v71, 1e-05
    %v76 = vadd.f32 %v72, 1e-05
    %v77 = vadd.f32 %v73, 1e-05
    %v78 = vrsqrt.pop %v74
    %v79 = vrsqrt.pop %v75
    %v80 = vrsqrt.pop %v76
    %v81 = vrsqrt.pop %v77
    %v82 = vmul.f32 %v50, %v78
    %v83 = vmul.f32 %v51, %v79
    %v84 = vmul.f32 %v52, %v80
    %v85 = vmul.f32 %v53, %v81
    %v86 = vld [vmem:[%s1] sm:$0x1]
    %v88 = vlaneseq
    %v89 = vshrl.u32 %v88, 7
    %v90 = vsub.s32 0, %v89
    %v91 = vrot.slane %v86, %v90
    %v93 = vmul.f32 %v82, %v91
    %v94 = vmul.f32 %v83, %v91
    %v95 = vmul.f32 %v84, %v91
    %v96 = vmul.f32 %v85, %v91
    %v97 = vld [vmem:[%s2] sm:$0x1]
    %v99 = vlaneseq
    %v100 = vshrl.u32 %v99, 7
    %v101 = vsub.s32 0, %v100
    %v102 = vrot.slane %v97, %v101
    %v104 = vadd.f32 %v93, %v102
    %v105 = vadd.f32 %v94, %v102
    %v106 = vadd.f32 %v95, %v102
    %v107 = vadd.f32 %v96, %v102
    %108 = vst.msk [vmem:[%s3] sm:$0xff] %vm32, %v104
    %109 = vst.msk [vmem:[%s3 + $0x8] sm:$0xff] %vm32, %v105
    %110 = vst.msk [vmem:[%s3 + $0x10] sm:$0xff] %vm32, %v106
    %111 = vst.msk [vmem:[%s3 + $0x18] sm:$0xff] %vm32, %v107
    // Predicated region
    $region18: #{spectral_unit_forward.5} parent=1 // pred_check
      _
    $region19: #{spectral_unit_forward.5} parent=1 // pred_check_branch
      %113 = sbr.rel (0) target = $region21
    $region20: #{spectral_unit_forward.5} parent=1 // pred_region
      _
    $region21: #{spectral_unit_forward.5} parent=1 // pred_fallthru
      _
    // Predicated region
    $region22: #{spectral_unit_forward.5} parent=1 // pred_check
      _
    $region23: #{spectral_unit_forward.5} parent=1 // pred_check_branch
      %115 = sbr.rel (0) target = $region25
    $region24: #{spectral_unit_forward.5} parent=1 // pred_region
      _
    $region25: #{spectral_unit_forward.5} parent=1 // pred_fallthru
      _
    %116 = vsyncpa [#allocation3], 1

// kernel: spectral_unit_forward.6
$region0: #{spectral_unit_forward.6}
  #allocation0 [shape = 'u32[]', space=smem, size = 0x4, offset = 0x4, fixed_abs, tag = 'smem constant byte address 0x4 - core index']
  #allocation1 [shape = 'u32[144,128]{1,0:T(1,128)}', space=vmem, size = 0x12000, scoped, tag = 'internal scratch']
  #allocation2 [shape = 'f32[8,64]{1,0:T(8,128)}', space=vmem, size = 0x1000, scoped, tag = 'scratch operand']
  #allocation3 [shape = 'f32[8,64]{1,0:T(8,128)}', space=vmem, size = 0x1000, scoped, tag = 'scratch operand']
  %s0 = inlined_call_operand.vmem [shape: f32[4,8,32], index: 0, kind: input, shape index: {}]
  %s1 = inlined_call_operand.hbm [shape: f32[128,256], index: 1, kind: input, shape index: {}]
  %s2 = inlined_call_operand.vmem [shape: f32[1,256], index: 2, kind: input, shape index: {}]
  %s3 = inlined_call_operand.vmem [shape: f32[4,8,64], index: 3, kind: output, shape index: {}]
  %s4 = sld [smem:[#allocation0]]
  $region26: #{spectral_unit_forward.6} parent=0
    _
  %s6 = ssub.s32 1, %s4
  %s7 = scalar_select 0, %s6, %s4
  $region1: #{spectral_unit_forward.6} parent=0
    #allocation4 [shape = 'u8[131072]{0}', space=vmem, size = 0x20000, scoped, tag = 'input window, operand 1, single buffered']
    #allocation5 [shape = 's32[1]{0}', space=sflag, size = 0x4, scoped, tag = 'scoped memory for spectral_unit_forward.6']
    %8 = vsyncpa [#allocation5], 0
    // Predicated region
    $region2: #{spectral_unit_forward.6} parent=1 // pred_check
      _
    $region3: #{spectral_unit_forward.6} parent=1 // pred_check_branch
      %10 = sbr.rel (0) target = $region5
    $region4: #{spectral_unit_forward.6} parent=1 // pred_region
      _
    $region5: #{spectral_unit_forward.6} parent=1 // pred_fallthru
      _
    // Predicated region
    $region6: #{spectral_unit_forward.6} parent=1 // pred_check
      _
    $region7: #{spectral_unit_forward.6} parent=1 // pred_check_branch
      %12 = sbr.rel (0) target = $region9
    $region8: #{spectral_unit_forward.6} parent=1 // pred_region
      %s14 = ssub.s32 4096, 4096
      %15 = vsyncadd [#allocation5], %s14
      %s16 = sshll.u32 [#allocation4], 4
      %s17 = int_to_ptr.vmem [resolvable:$true] %s16
      %22 = dma.hbm_to_vmem [thread:$0]  %s1, 4096, %s17, [#allocation5], 256, 256, 16
    $region9: #{spectral_unit_forward.6} parent=1 // pred_fallthru
      _
    // Predicated region
    $region10: #{spectral_unit_forward.6} parent=1 // pred_check
      _
    $region11: #{spectral_unit_forward.6} parent=1 // pred_check_branch
      %24 = sbr.rel (0) target = $region13
    $region12: #{spectral_unit_forward.6} parent=1 // pred_region
      _
    $region13: #{spectral_unit_forward.6} parent=1 // pred_fallthru
      _
    // Predicated region
    $region14: #{spectral_unit_forward.6} parent=1 // pred_check
      _
    $region15: #{spectral_unit_forward.6} parent=1 // pred_check_branch
      %26 = sbr.rel (0) target = $region17
    $region16: #{spectral_unit_forward.6} parent=1 // pred_region
      %27 = dma.done [#allocation5], 4096
    $region17: #{spectral_unit_forward.6} parent=1 // pred_fallthru
      _
    %vm28 = vcmask 523264
    %29 = vst.msk [vmem:[#allocation2] sm:$0xff] %vm28, 0.0
    %30 = vst.msk [vmem:[#allocation3] sm:$0xff] %vm28, 0.0
    %v31 = vld [vmem:[%s0] sm:$0xff]
    %s32 = scalar_lea.vmem %s0, 24
    %v33 = vld [vmem:[%s32] sm:$0xff]
    %v34 = vld [vmem:[#allocation2] sm:$0xff]
    %36 = vrot.lane.b32.xlu0 %v33, 32
    %v37 = vpop.permute.xlu0 %36
    %40 = vrot.lane.b32.xlu0 %v34, 64
    %v41 = vpop.permute.xlu0 %40
    %vm43 = vcmask 261120
    %v44 = vsel %vm43, %v31, %v37
    %v45 = vsel %vm28, %v44, %v41
    %v46 = vld [vmem:[#allocation4] sm:$0xff]
    %v47 = vld [vmem:[#allocation4 + $0x8] sm:$0xff]
    %v48 = vld [vmem:[#allocation4 + $0x10] sm:$0xff]
    %v49 = vld [vmem:[#allocation4 + $0x18] sm:$0xff]
    %v50 = vld [vmem:[#allocation4 + $0x20] sm:$0xff]
    %v51 = vld [vmem:[#allocation4 + $0x28] sm:$0xff]
    %v52 = vld [vmem:[#allocation4 + $0x30] sm:$0xff]
    %v53 = vld [vmem:[#allocation4 + $0x38] sm:$0xff]
    %v54 = vld [vmem:[#allocation4 + $0x40] sm:$0xff]
    %v55 = vld [vmem:[#allocation4 + $0x48] sm:$0xff]
    %v56 = vld [vmem:[#allocation4 + $0x50] sm:$0xff]
    %v57 = vld [vmem:[#allocation4 + $0x58] sm:$0xff]
    %v58 = vld [vmem:[#allocation4 + $0x60] sm:$0xff]
    %v59 = vld [vmem:[#allocation4 + $0x68] sm:$0xff]
    %v60 = vld [vmem:[#allocation4 + $0x70] sm:$0xff]
    %v61 = vld [vmem:[#allocation4 + $0x78] sm:$0xff]
    %v62 = vld [vmem:[#allocation4 + $0x80] sm:$0xff]
    %v63 = vld [vmem:[#allocation4 + $0x88] sm:$0xff]
    %v64 = vld [vmem:[#allocation4 + $0x90] sm:$0xff]
    %v65 = vld [vmem:[#allocation4 + $0x98] sm:$0xff]
    %v66 = vld [vmem:[#allocation4 + $0xa0] sm:$0xff]
    %v67 = vld [vmem:[#allocation4 + $0xa8] sm:$0xff]
    %v68 = vld [vmem:[#allocation4 + $0xb0] sm:$0xff]
    %v69 = vld [vmem:[#allocation4 + $0xb8] sm:$0xff]
    %v70 = vld [vmem:[#allocation4 + $0xc0] sm:$0xff]
    %v71 = vld [vmem:[#allocation4 + $0xc8] sm:$0xff]
    %v72 = vld [vmem:[#allocation4 + $0xd0] sm:$0xff]
    %v73 = vld [vmem:[#allocation4 + $0xd8] sm:$0xff]
    %v74 = vld [vmem:[#allocation4 + $0xe0] sm:$0xff]
    %v75 = vld [vmem:[#allocation4 + $0xe8] sm:$0xff]
    %v76 = vld [vmem:[#allocation4 + $0xf0] sm:$0xff]
    %v77 = vld [vmem:[#allocation4 + $0xf8] sm:$0xff]
    %v78 = vld [vmem:[%s2] sm:$0x3]
    %v80 = vlaneseq
    %v81 = vshrl.u32 %v80, 7
    %v82 = vsub.s32 0, %v81
    %v83 = vrot.slane %v78, %v82
    %v84 = vlaneseq
    %v85 = vshrl.u32 %v84, 7
    %v86 = vsub.s32 1, %v85
    %v87 = vrot.slane %v78, %v86
    %90 = vmatprep.subr.mxu0 %v47
    %91 = vmatpush1.msra.mxu0 %v46
    %92 = vmatprep.subr.mxu0 %v49
    %93 = vmatpush1.msra.mxu0 %v48
    %94 = vmatprep.subr.mxu0 %v51
    %95 = vmatpush1.msra.mxu0 %v50
    %96 = vmatprep.subr.mxu0 %v53
    %97 = vmatpush1.msra.mxu0 %v52
    %98 = vmatprep.subr.mxu0 %v55
    %99 = vmatpush1.msra.mxu0 %v54
    %100 = vmatprep.subr.mxu0 %v57
    %101 = vmatpush1.msra.mxu0 %v56
    %102 = vmatprep.subr.mxu0 %v59
    %103 = vmatpush1.msra.mxu0 %v58
    %104 = vmatprep.subr.mxu0 %v61
    %105 = vmatpush1.msra.mxu0 %v60
    %106 = vmatprep.subr.mxu0 %v63
    %107 = vmatpush1.msra.mxu0 %v62
    %108 = vmatprep.subr.mxu0 %v65
    %109 = vmatpush1.msra.mxu0 %v64
    %110 = vmatprep.subr.mxu0 %v67
    %111 = vmatpush1.msra.mxu0 %v66
    %112 = vmatprep.subr.mxu0 %v69
    %113 = vmatpush1.msra.mxu0 %v68
    %114 = vmatprep.subr.mxu0 %v71
    %115 = vmatpush1.msra.mxu0 %v70
    %116 = vmatprep.subr.mxu0 %v73
    %117 = vmatpush1.msra.mxu0 %v72
    %118 = vmatprep.subr.mxu0 %v75
    %119 = vmatpush1.msra.mxu0 %v74
    %120 = vmatprep.subr.mxu0 %v77
    %121 = vmatpush1.msra.mxu0 %v76
    %122 = vmatprep.subr.mxu0 0.0
    %123 = vmatpush1.msra.mxu0 0.0
    %124 = vmatprep.subr.mxu0 0.0
    %125 = vmatpush1.msra.mxu0 0.0
    %126 = vmatprep.subr.mxu0 0.0
    %127 = vmatpush1.msra.mxu0 0.0
    %128 = vmatprep.subr.mxu0 0.0
    %129 = vmatpush1.msra.mxu0 0.0
    %130 = vmatprep.subr.mxu0 0.0
    %131 = vmatpush1.msra.mxu0 0.0
    %132 = vmatprep.subr.mxu0 0.0
    %133 = vmatpush1.msra.mxu0 0.0
    %134 = vmatprep.subr.mxu0 0.0
    %135 = vmatpush1.msra.mxu0 0.0
    %136 = vmatprep.subr.mxu0 0.0
    %137 = vmatpush1.msra.mxu0 0.0
    %138 = vmatprep.subr.mxu0 0.0
    %139 = vmatpush1.msra.mxu0 0.0
    %140 = vmatprep.subr.mxu0 0.0
    %141 = vmatpush1.msra.mxu0 0.0
    %142 = vmatprep.subr.mxu0 0.0
    %143 = vmatpush1.msra.mxu0 0.0
    %144 = vmatprep.subr.mxu0 0.0
    %145 = vmatpush1.msra.mxu0 0.0
    %146 = vmatprep.subr.mxu0 0.0
    %147 = vmatpush1.msra.mxu0 0.0
    %148 = vmatprep.subr.mxu0 0.0
    %149 = vmatpush1.msra.mxu0 0.0
    %150 = vmatprep.subr.mxu0 0.0
    %151 = vmatpush1.msra.mxu0 0.0
    %152 = vmatprep.subr.mxu0 0.0
    %153 = vmatpush1.msra.mxu0 0.0
    %154 = vmatprep.mubr.f32.mxu0 0.0
    %155 = vmatmul.mubr.f32.gmra.mrb[0].mxu0 %v45
    %v156 = vpop.f32.mrb[0].mxu0
    %v157 = vadd.f32 %v83, %v156
    %v158 = vpop.f32.mrb[0].mxu0
    %v159 = vadd.f32 %v87, %v158
    %160 = vdwg.mxu0
    %v161 = vxor.u32 %v157, 2147483648
    %v162 = vmul.f32 %v161, 1.442695
    %v163 = vpow.pop %v162
    %v164 = vadd.f32 %v163, 1.0
    %v165 = vrcp.pop %v164
    %v166 = vmul.f32 1.0, %v165
    %v167 = vtanh.pop %v159
    %v168 = vxor.u32 %v159, 2147483648
    %v169 = vmul.f32 %v168, 1.442695
    %v170 = vpow.pop %v169
    %v171 = vadd.f32 %v170, 1.0
    %v172 = vrcp.pop %v171
    %v173 = vmul.f32 1.0, %v172
    %v174 = vld [vmem:[#allocation3] sm:$0xff]
    %176 = vrot.lane.b32.xlu0 %v174, 64
    %v177 = vpop.permute.xlu0 %176
    %v179 = vmul.f32 %v166, %v177
    %v180 = vmul.f32 %v166, %v167
    %182 = vrot.lane.b32.xlu0 %v180, 64
    %v183 = vpop.permute.xlu0 %182
    %v185 = vadd.f32 %v179, %v183
    %v186 = vtanh.pop %v185
    %v187 = vmul.f32 %v173, %v186
    %189 = vrot.lane.b32.xlu0 %v185, 64
    %v190 = vpop.permute.xlu0 %189
    %192 = vst.msk [vmem:[#allocation3] sm:$0xff] %vm28, %v190
    %194 = vrot.lane.b32.xlu0 %v187, 64
    %v195 = vpop.permute.xlu0 %194
    %197 = vst.msk [vmem:[#allocation2] sm:$0xff] %vm28, %v195
    %198 = vst.msk [vmem:[%s3] sm:$0xff] %vm43, %v195
    %s199 = scalar_lea.vmem %s3, 24
    %vm200 = vcmask 523520
    %201 = vst.msk [vmem:[%s199] sm:$0xff] %vm200, %v195
    %s202 = scalar_lea.vmem %s0, 8
    %v203 = vld [vmem:[%s202] sm:$0xff]
    %s204 = scalar_lea.vmem %s0, 16
    %v205 = vld [vmem:[%s204] sm:$0xff]
    %v206 = vld [vmem:[#allocation2] sm:$0xff]
    %208 = vrot.lane.b32.xlu0 %v205, 32
    %v209 = vpop.permute.xlu0 %208
    %212 = vrot.lane.b32.xlu0 %v206, 64
    %v213 = vpop.permute.xlu0 %212
    %v215 = vsel %vm43, %v203, %v209
    %v216 = vsel %vm28, %v215, %v213
    %v217 = vld [vmem:[#allocation4] sm:$0xff]
    %v218 = vld [vmem:[#allocation4 + $0x8] sm:$0xff]
    %v219 = vld [vmem:[#allocation4 + $0x10] sm:$0xff]
    %v220 = vld [vmem:[#allocation4 + $0x18] sm:$0xff]
    %v221 = vld [vmem:[#allocation4 + $0x20] sm:$0xff]
    %v222 = vld [vmem:[#allocation4 + $0x28] sm:$0xff]
    %v223 = vld [vmem:[#allocation4 + $0x30] sm:$0xff]
    %v224 = vld [vmem:[#allocation4 + $0x38] sm:$0xff]
    %v225 = vld [vmem:[#allocation4 + $0x40] sm:$0xff]
    %v226 = vld [vmem:[#allocation4 + $0x48] sm:$0xff]
    %v227 = vld [vmem:[#allocation4 + $0x50] sm:$0xff]
    %v228 = vld [vmem:[#allocation4 + $0x58] sm:$0xff]
    %v229 = vld [vmem:[#allocation4 + $0x60] sm:$0xff]
    %v230 = vld [vmem:[#allocation4 + $0x68] sm:$0xff]
    %v231 = vld [vmem:[#allocation4 + $0x70] sm:$0xff]
    %v232 = vld [vmem:[#allocation4 + $0x78] sm:$0xff]
    %v233 = vld [vmem:[#allocation4 + $0x80] sm:$0xff]
    %v234 = vld [vmem:[#allocation4 + $0x88] sm:$0xff]
    %v235 = vld [vmem:[#allocation4 + $0x90] sm:$0xff]
    %v236 = vld [vmem:[#allocation4 + $0x98] sm:$0xff]
    %v237 = vld [vmem:[#allocation4 + $0xa0] sm:$0xff]
    %v238 = vld [vmem:[#allocation4 + $0xa8] sm:$0xff]
    %v239 = vld [vmem:[#allocation4 + $0xb0] sm:$0xff]
    %v240 = vld [vmem:[#allocation4 + $0xb8] sm:$0xff]
    %v241 = vld [vmem:[#allocation4 + $0xc0] sm:$0xff]
    %v242 = vld [vmem:[#allocation4 + $0xc8] sm:$0xff]
    %v243 = vld [vmem:[#allocation4 + $0xd0] sm:$0xff]
    %v244 = vld [vmem:[#allocation4 + $0xd8] sm:$0xff]
    %v245 = vld [vmem:[#allocation4 + $0xe0] sm:$0xff]
    %v246 = vld [vmem:[#allocation4 + $0xe8] sm:$0xff]
    %v247 = vld [vmem:[#allocation4 + $0xf0] sm:$0xff]
    %v248 = vld [vmem:[#allocation4 + $0xf8] sm:$0xff]
    %v249 = vld [vmem:[%s2] sm:$0x3]
    %v251 = vlaneseq
    %v252 = vshrl.u32 %v251, 7
    %v253 = vsub.s32 0, %v252
    %v254 = vrot.slane %v249, %v253
    %v255 = vlaneseq
    %v256 = vshrl.u32 %v255, 7
    %v257 = vsub.s32 1, %v256
    %v258 = vrot.slane %v249, %v257
    %261 = vmatprep.subr.mxu0 %v218
    %262 = vmatpush1.msra.mxu0 %v217
    %263 = vmatprep.subr.mxu0 %v220
    %264 = vmatpush1.msra.mxu0 %v219
    %265 = vmatprep.subr.mxu0 %v222
    %266 = vmatpush1.msra.mxu0 %v221
    %267 = vmatprep.subr.mxu0 %v224
    %268 = vmatpush1.msra.mxu0 %v223
    %269 = vmatprep.subr.mxu0 %v226
    %270 = vmatpush1.msra.mxu0 %v225
    %271 = vmatprep.subr.mxu0 %v228
    %272 = vmatpush1.msra.mxu0 %v227
    %273 = vmatprep.subr.mxu0 %v230
    %274 = vmatpush1.msra.mxu0 %v229
    %275 = vmatprep.subr.mxu0 %v232
    %276 = vmatpush1.msra.mxu0 %v231
    %277 = vmatprep.subr.mxu0 %v234
    %278 = vmatpush1.msra.mxu0 %v233
    %279 = vmatprep.subr.mxu0 %v236
    %280 = vmatpush1.msra.mxu0 %v235
    %281 = vmatprep.subr.mxu0 %v238
    %282 = vmatpush1.msra.mxu0 %v237
    %283 = vmatprep.subr.mxu0 %v240
    %284 = vmatpush1.msra.mxu0 %v239
    %285 = vmatprep.subr.mxu0 %v242
    %286 = vmatpush1.msra.mxu0 %v241
    %287 = vmatprep.subr.mxu0 %v244
    %288 = vmatpush1.msra.mxu0 %v243
    %289 = vmatprep.subr.mxu0 %v246
    %290 = vmatpush1.msra.mxu0 %v245
    %291 = vmatprep.subr.mxu0 %v248
    %292 = vmatpush1.msra.mxu0 %v247
    %293 = vmatprep.subr.mxu0 0.0
    %294 = vmatpush1.msra.mxu0 0.0
    %295 = vmatprep.subr.mxu0 0.0
    %296 = vmatpush1.msra.mxu0 0.0
    %297 = vmatprep.subr.mxu0 0.0
    %298 = vmatpush1.msra.mxu0 0.0
    %299 = vmatprep.subr.mxu0 0.0
    %300 = vmatpush1.msra.mxu0 0.0
    %301 = vmatprep.subr.mxu0 0.0
    %302 = vmatpush1.msra.mxu0 0.0
    %303 = vmatprep.subr.mxu0 0.0
    %304 = vmatpush1.msra.mxu0 0.0
    %305 = vmatprep.subr.mxu0 0.0
    %306 = vmatpush1.msra.mxu0 0.0
    %307 = vmatprep.subr.mxu0 0.0
    %308 = vmatpush1.msra.mxu0 0.0
    %309 = vmatprep.subr.mxu0 0.0
    %310 = vmatpush1.msra.mxu0 0.0
    %311 = vmatprep.subr.mxu0 0.0
    %312 = vmatpush1.msra.mxu0 0.0
    %313 = vmatprep.subr.mxu0 0.0
    %314 = vmatpush1.msra.mxu0 0.0
    %315 = vmatprep.subr.mxu0 0.0
    %316 = vmatpush1.msra.mxu0 0.0
    %317 = vmatprep.subr.mxu0 0.0
    %318 = vmatpush1.msra.mxu0 0.0
    %319 = vmatprep.subr.mxu0 0.0
    %320 = vmatpush1.msra.mxu0 0.0
    %321 = vmatprep.subr.mxu0 0.0
    %322 = vmatpush1.msra.mxu0 0.0
    %323 = vmatprep.subr.mxu0 0.0
    %324 = vmatpush1.msra.mxu0 0.0
    %325 = vmatprep.mubr.f32.mxu0 0.0
    %326 = vmatmul.mubr.f32.gmra.mrb[0].mxu0 %v216
    %v327 = vpop.f32.mrb[0].mxu0
    %v328 = vadd.f32 %v254, %v327
    %v329 = vpop.f32.mrb[0].mxu0
    %v330 = vadd.f32 %v258, %v329
    %331 = vdwg.mxu0
    %v332 = vxor.u32 %v328, 2147483648
    %v333 = vmul.f32 %v332, 1.442695
    %v334 = vpow.pop %v333
    %v335 = vadd.f32 %v334, 1.0
    %v336 = vrcp.pop %v335
    %v337 = vmul.f32 1.0, %v336
    %v338 = vtanh.pop %v330
    %v339 = vxor.u32 %v330, 2147483648
    %v340 = vmul.f32 %v339, 1.442695
    %v341 = vpow.pop %v340
    %v342 = vadd.f32 %v341, 1.0
    %v343 = vrcp.pop %v342
    %v344 = vmul.f32 1.0, %v343
    %v345 = vld [vmem:[#allocation3] sm:$0xff]
    %347 = vrot.lane.b32.xlu0 %v345, 64
    %v348 = vpop.permute.xlu0 %347
    %v350 = vmul.f32 %v337, %v348
    %v351 = vmul.f32 %v337, %v338
    %353 = vrot.lane.b32.xlu0 %v351, 64
    %v354 = vpop.permute.xlu0 %353
    %v356 = vadd.f32 %v350, %v354
    %v357 = vtanh.pop %v356
    %v358 = vmul.f32 %v344, %v357
    %360 = vrot.lane.b32.xlu0 %v356, 64
    %v361 = vpop.permute.xlu0 %360
    %363 = vst.msk [vmem:[#allocation3] sm:$0xff] %vm28, %v361
    %365 = vrot.lane.b32.xlu0 %v358, 64
    %v366 = vpop.permute.xlu0 %365
    %368 = vst.msk [vmem:[#allocation2] sm:$0xff] %vm28, %v366
    %s369 = scalar_lea.vmem %s3, 8
    %370 = vst.msk [vmem:[%s369] sm:$0xff] %vm43, %v366
    %s371 = scalar_lea.vmem %s3, 16
    %372 = vst.msk [vmem:[%s371] sm:$0xff] %vm200, %v366
    %v373 = vld [vmem:[%s204] sm:$0xff]
    %v374 = vld [vmem:[%s202] sm:$0xff]
    %v375 = vld [vmem:[#allocation2] sm:$0xff]
    %377 = vrot.lane.b32.xlu0 %v374, 32
    %v378 = vpop.permute.xlu0 %377
    %381 = vrot.lane.b32.xlu0 %v375, 64
    %v382 = vpop.permute.xlu0 %381
    %v384 = vsel %vm43, %v373, %v378
    %v385 = vsel %vm28, %v384, %v382
    %v386 = vld [vmem:[#allocation4] sm:$0xff]
    %v387 = vld [vmem:[#allocation4 + $0x8] sm:$0xff]
    %v388 = vld [vmem:[#allocation4 + $0x10] sm:$0xff]
    %v389 = vld [vmem:[#allocation4 + $0x18] sm:$0xff]
    %v390 = vld [vmem:[#allocation4 + $0x20] sm:$0xff]
    %v391 = vld [vmem:[#allocation4 + $0x28] sm:$0xff]
    %v392 = vld [vmem:[#allocation4 + $0x30] sm:$0xff]
    %v393 = vld [vmem:[#allocation4 + $0x38] sm:$0xff]
    %v394 = vld [vmem:[#allocation4 + $0x40] sm:$0xff]
    %v395 = vld [vmem:[#allocation4 + $0x48] sm:$0xff]
    %v396 = vld [vmem:[#allocation4 + $0x50] sm:$0xff]
    %v397 = vld [vmem:[#allocation4 + $0x58] sm:$0xff]
    %v398 = vld [vmem:[#allocation4 + $0x60] sm:$0xff]
    %v399 = vld [vmem:[#allocation4 + $0x68] sm:$0xff]
    %v400 = vld [vmem:[#allocation4 + $0x70] sm:$0xff]
    %v401 = vld [vmem:[#allocation4 + $0x78] sm:$0xff]
    %v402 = vld [vmem:[#allocation4 + $0x80] sm:$0xff]
    %v403 = vld [vmem:[#allocation4 + $0x88] sm:$0xff]
    %v404 = vld [vmem:[#allocation4 + $0x90] sm:$0xff]
    %v405 = vld [vmem:[#allocation4 + $0x98] sm:$0xff]
    %v406 = vld [vmem:[#allocation4 + $0xa0] sm:$0xff]
    %v407 = vld [vmem:[#allocation4 + $0xa8] sm:$0xff]
    %v408 = vld [vmem:[#allocation4 + $0xb0] sm:$0xff]
    %v409 = vld [vmem:[#allocation4 + $0xb8] sm:$0xff]
    %v410 = vld [vmem:[#allocation4 + $0xc0] sm:$0xff]
    %v411 = vld [vmem:[#allocation4 + $0xc8] sm:$0xff]
    %v412 = vld [vmem:[#allocation4 + $0xd0] sm:$0xff]
    %v413 = vld [vmem:[#allocation4 + $0xd8] sm:$0xff]
    %v414 = vld [vmem:[#allocation4 + $0xe0] sm:$0xff]
    %v415 = vld [vmem:[#allocation4 + $0xe8] sm:$0xff]
    %v416 = vld [vmem:[#allocation4 + $0xf0] sm:$0xff]
    %v417 = vld [vmem:[#allocation4 + $0xf8] sm:$0xff]
    %v418 = vld [vmem:[%s2] sm:$0x3]
    %v420 = vlaneseq
    %v421 = vshrl.u32 %v420, 7
    %v422 = vsub.s32 0, %v421
    %v423 = vrot.slane %v418, %v422
    %v424 = vlaneseq
    %v425 = vshrl.u32 %v424, 7
    %v426 = vsub.s32 1, %v425
    %v427 = vrot.slane %v418, %v426
    %430 = vmatprep.subr.mxu0 %v387
    %431 = vmatpush1.msra.mxu0 %v386
    %432 = vmatprep.subr.mxu0 %v389
    %433 = vmatpush1.msra.mxu0 %v388
    %434 = vmatprep.subr.mxu0 %v391
    %435 = vmatpush1.msra.mxu0 %v390
    %436 = vmatprep.subr.mxu0 %v393
    %437 = vmatpush1.msra.mxu0 %v392
    %438 = vmatprep.subr.mxu0 %v395
    %439 = vmatpush1.msra.mxu0 %v394
    %440 = vmatprep.subr.mxu0 %v397
    %441 = vmatpush1.msra.mxu0 %v396
    %442 = vmatprep.subr.mxu0 %v399
    %443 = vmatpush1.msra.mxu0 %v398
    %444 = vmatprep.subr.mxu0 %v401
    %445 = vmatpush1.msra.mxu0 %v400
    %446 = vmatprep.subr.mxu0 %v403
    %447 = vmatpush1.msra.mxu0 %v402
    %448 = vmatprep.subr.mxu0 %v405
    %449 = vmatpush1.msra.mxu0 %v404
    %450 = vmatprep.subr.mxu0 %v407
    %451 = vmatpush1.msra.mxu0 %v406
    %452 = vmatprep.subr.mxu0 %v409
    %453 = vmatpush1.msra.mxu0 %v408
    %454 = vmatprep.subr.mxu0 %v411
    %455 = vmatpush1.msra.mxu0 %v410
    %456 = vmatprep.subr.mxu0 %v413
    %457 = vmatpush1.msra.mxu0 %v412
    %458 = vmatprep.subr.mxu0 %v415
    %459 = vmatpush1.msra.mxu0 %v414
    %460 = vmatprep.subr.mxu0 %v417
    %461 = vmatpush1.msra.mxu0 %v416
    %462 = vmatprep.subr.mxu0 0.0
    %463 = vmatpush1.msra.mxu0 0.0
    %464 = vmatprep.subr.mxu0 0.0
    %465 = vmatpush1.msra.mxu0 0.0
    %466 = vmatprep.subr.mxu0 0.0
    %467 = vmatpush1.msra.mxu0 0.0
    %468 = vmatprep.subr.mxu0 0.0
    %469 = vmatpush1.msra.mxu0 0.0
    %470 = vmatprep.subr.mxu0 0.0
    %471 = vmatpush1.msra.mxu0 0.0
    %472 = vmatprep.subr.mxu0 0.0
    %473 = vmatpush1.msra.mxu0 0.0
    %474 = vmatprep.subr.mxu0 0.0
    %475 = vmatpush1.msra.mxu0 0.0
    %476 = vmatprep.subr.mxu0 0.0
    %477 = vmatpush1.msra.mxu0 0.0
    %478 = vmatprep.subr.mxu0 0.0
    %479 = vmatpush1.msra.mxu0 0.0
    %480 = vmatprep.subr.mxu0 0.0
    %481 = vmatpush1.msra.mxu0 0.0
    %482 = vmatprep.subr.mxu0 0.0
    %483 = vmatpush1.msra.mxu0 0.0
    %484 = vmatprep.subr.mxu0 0.0
    %485 = vmatpush1.msra.mxu0 0.0
    %486 = vmatprep.subr.mxu0 0.0
    %487 = vmatpush1.msra.mxu0 0.0
    %488 = vmatprep.subr.mxu0 0.0
    %489 = vmatpush1.msra.mxu0 0.0
    %490 = vmatprep.subr.mxu0 0.0
    %491 = vmatpush1.msra.mxu0 0.0
    %492 = vmatprep.subr.mxu0 0.0
    %493 = vmatpush1.msra.mxu0 0.0
    %494 = vmatprep.mubr.f32.mxu0 0.0
    %495 = vmatmul.mubr.f32.gmra.mrb[0].mxu0 %v385
    %v496 = vpop.f32.mrb[0].mxu0
    %v497 = vadd.f32 %v423, %v496
    %v498 = vpop.f32.mrb[0].mxu0
    %v499 = vadd.f32 %v427, %v498
    %500 = vdwg.mxu0
    %v501 = vxor.u32 %v497, 2147483648
    %v502 = vmul.f32 %v501, 1.442695
    %v503 = vpow.pop %v502
    %v504 = vadd.f32 %v503, 1.0
    %v505 = vrcp.pop %v504
    %v506 = vmul.f32 1.0, %v505
    %v507 = vtanh.pop %v499
    %v508 = vxor.u32 %v499, 2147483648
    %v509 = vmul.f32 %v508, 1.442695
    %v510 = vpow.pop %v509
    %v511 = vadd.f32 %v510, 1.0
    %v512 = vrcp.pop %v511
    %v513 = vmul.f32 1.0, %v512
    %v514 = vld [vmem:[#allocation3] sm:$0xff]
    %516 = vrot.lane.b32.xlu0 %v514, 64
    %v517 = vpop.permute.xlu0 %516
    %v519 = vmul.f32 %v506, %v517
    %v520 = vmul.f32 %v506, %v507
    %522 = vrot.lane.b32.xlu0 %v520, 64
    %v523 = vpop.permute.xlu0 %522
    %v525 = vadd.f32 %v519, %v523
    %v526 = vtanh.pop %v525
    %v527 = vmul.f32 %v513, %v526
    %529 = vrot.lane.b32.xlu0 %v525, 64
    %v530 = vpop.permute.xlu0 %529
    %532 = vst.msk [vmem:[#allocation3] sm:$0xff] %vm28, %v530
    %534 = vrot.lane.b32.xlu0 %v527, 64
    %v535 = vpop.permute.xlu0 %534
    %537 = vst.msk [vmem:[#allocation2] sm:$0xff] %vm28, %v535
    %538 = vst.msk [vmem:[%s371] sm:$0xff] %vm43, %v535
    %539 = vst.msk [vmem:[%s369] sm:$0xff] %vm200, %v535
    %v540 = vld [vmem:[%s32] sm:$0xff]
    %v541 = vld [vmem:[%s0] sm:$0xff]
    %v542 = vld [vmem:[#allocation2] sm:$0xff]
    %544 = vrot.lane.b32.xlu0 %v541, 32
    %v545 = vpop.permute.xlu0 %544
    %548 = vrot.lane.b32.xlu0 %v542, 64
    %v549 = vpop.permute.xlu0 %548
    %v551 = vsel %vm43, %v540, %v545
    %v552 = vsel %vm28, %v551, %v549
    %v553 = vld [vmem:[#allocation4] sm:$0xff]
    %v554 = vld [vmem:[#allocation4 + $0x8] sm:$0xff]
    %v555 = vld [vmem:[#allocation4 + $0x10] sm:$0xff]
    %v556 = vld [vmem:[#allocation4 + $0x18] sm:$0xff]
    %v557 = vld [vmem:[#allocation4 + $0x20] sm:$0xff]
    %v558 = vld [vmem:[#allocation4 + $0x28] sm:$0xff]
    %v559 = vld [vmem:[#allocation4 + $0x30] sm:$0xff]
    %v560 = vld [vmem:[#allocation4 + $0x38] sm:$0xff]
    %v561 = vld [vmem:[#allocation4 + $0x40] sm:$0xff]
    %v562 = vld [vmem:[#allocation4 + $0x48] sm:$0xff]
    %v563 = vld [vmem:[#allocation4 + $0x50] sm:$0xff]
    %v564 = vld [vmem:[#allocation4 + $0x58] sm:$0xff]
    %v565 = vld [vmem:[#allocation4 + $0x60] sm:$0xff]
    %v566 = vld [vmem:[#allocation4 + $0x68] sm:$0xff]
    %v567 = vld [vmem:[#allocation4 + $0x70] sm:$0xff]
    %v568 = vld [vmem:[#allocation4 + $0x78] sm:$0xff]
    %v569 = vld [vmem:[#allocation4 + $0x80] sm:$0xff]
    %v570 = vld [vmem:[#allocation4 + $0x88] sm:$0xff]
    %v571 = vld [vmem:[#allocation4 + $0x90] sm:$0xff]
    %v572 = vld [vmem:[#allocation4 + $0x98] sm:$0xff]
    %v573 = vld [vmem:[#allocation4 + $0xa0] sm:$0xff]
    %v574 = vld [vmem:[#allocation4 + $0xa8] sm:$0xff]
    %v575 = vld [vmem:[#allocation4 + $0xb0] sm:$0xff]
    %v576 = vld [vmem:[#allocation4 + $0xb8] sm:$0xff]
    %v577 = vld [vmem:[#allocation4 + $0xc0] sm:$0xff]
    %v578 = vld [vmem:[#allocation4 + $0xc8] sm:$0xff]
    %v579 = vld [vmem:[#allocation4 + $0xd0] sm:$0xff]
    %v580 = vld [vmem:[#allocation4 + $0xd8] sm:$0xff]
    %v581 = vld [vmem:[#allocation4 + $0xe0] sm:$0xff]
    %v582 = vld [vmem:[#allocation4 + $0xe8] sm:$0xff]
    %v583 = vld [vmem:[#allocation4 + $0xf0] sm:$0xff]
    %v584 = vld [vmem:[#allocation4 + $0xf8] sm:$0xff]
    %v585 = vld [vmem:[%s2] sm:$0x3]
    %v587 = vlaneseq
    %v588 = vshrl.u32 %v587, 7
    %v589 = vsub.s32 0, %v588
    %v590 = vrot.slane %v585, %v589
    %v591 = vlaneseq
    %v592 = vshrl.u32 %v591, 7
    %v593 = vsub.s32 1, %v592
    %v594 = vrot.slane %v585, %v593
    %597 = vmatprep.subr.mxu0 %v554
    %598 = vmatpush1.msra.mxu0 %v553
    %599 = vmatprep.subr.mxu0 %v556
    %600 = vmatpush1.msra.mxu0 %v555
    %601 = vmatprep.subr.mxu0 %v558
    %602 = vmatpush1.msra.mxu0 %v557
    %603 = vmatprep.subr.mxu0 %v560
    %604 = vmatpush1.msra.mxu0 %v559
    %605 = vmatprep.subr.mxu0 %v562
    %606 = vmatpush1.msra.mxu0 %v561
    %607 = vmatprep.subr.mxu0 %v564
    %608 = vmatpush1.msra.mxu0 %v563
    %609 = vmatprep.subr.mxu0 %v566
    %610 = vmatpush1.msra.mxu0 %v565
    %611 = vmatprep.subr.mxu0 %v568
    %612 = vmatpush1.msra.mxu0 %v567
    %613 = vmatprep.subr.mxu0 %v570
    %614 = vmatpush1.msra.mxu0 %v569
    %615 = vmatprep.subr.mxu0 %v572
    %616 = vmatpush1.msra.mxu0 %v571
    %617 = vmatprep.subr.mxu0 %v574
    %618 = vmatpush1.msra.mxu0 %v573
    %619 = vmatprep.subr.mxu0 %v576
    %620 = vmatpush1.msra.mxu0 %v575
    %621 = vmatprep.subr.mxu0 %v578
    %622 = vmatpush1.msra.mxu0 %v577
    %623 = vmatprep.subr.mxu0 %v580
    %624 = vmatpush1.msra.mxu0 %v579
    %625 = vmatprep.subr.mxu0 %v582
    %626 = vmatpush1.msra.mxu0 %v581
    %627 = vmatprep.subr.mxu0 %v584
    %628 = vmatpush1.msra.mxu0 %v583
    %629 = vmatprep.subr.mxu0 0.0
    %630 = vmatpush1.msra.mxu0 0.0
    %631 = vmatprep.subr.mxu0 0.0
    %632 = vmatpush1.msra.mxu0 0.0
    %633 = vmatprep.subr.mxu0 0.0
    %634 = vmatpush1.msra.mxu0 0.0
    %635 = vmatprep.subr.mxu0 0.0
    %636 = vmatpush1.msra.mxu0 0.0
    %637 = vmatprep.subr.mxu0 0.0
    %638 = vmatpush1.msra.mxu0 0.0
    %639 = vmatprep.subr.mxu0 0.0
    %640 = vmatpush1.msra.mxu0 0.0
    %641 = vmatprep.subr.mxu0 0.0
    %642 = vmatpush1.msra.mxu0 0.0
    %643 = vmatprep.subr.mxu0 0.0
    %644 = vmatpush1.msra.mxu0 0.0
    %645 = vmatprep.subr.mxu0 0.0
    %646 = vmatpush1.msra.mxu0 0.0
    %647 = vmatprep.subr.mxu0 0.0
    %648 = vmatpush1.msra.mxu0 0.0
    %649 = vmatprep.subr.mxu0 0.0
    %650 = vmatpush1.msra.mxu0 0.0
    %651 = vmatprep.subr.mxu0 0.0
    %652 = vmatpush1.msra.mxu0 0.0
    %653 = vmatprep.subr.mxu0 0.0
    %654 = vmatpush1.msra.mxu0 0.0
    %655 = vmatprep.subr.mxu0 0.0
    %656 = vmatpush1.msra.mxu0 0.0
    %657 = vmatprep.subr.mxu0 0.0
    %658 = vmatpush1.msra.mxu0 0.0
    %659 = vmatprep.subr.mxu0 0.0
    %660 = vmatpush1.msra.mxu0 0.0
    %661 = vmatprep.mubr.f32.mxu0 0.0
    %662 = vmatmul.mubr.f32.gmra.mrb[0].mxu0 %v552
    %v663 = vpop.f32.mrb[0].mxu0
    %v664 = vadd.f32 %v590, %v663
    %v665 = vpop.f32.mrb[0].mxu0
    %v666 = vadd.f32 %v594, %v665
    %667 = vdwg.mxu0
    %v668 = vxor.u32 %v664, 2147483648
    %v669 = vmul.f32 %v668, 1.442695
    %v670 = vpow.pop %v669
    %v671 = vadd.f32 %v670, 1.0
    %v672 = vrcp.pop %v671
    %v673 = vmul.f32 1.0, %v672
    %v674 = vtanh.pop %v666
    %v675 = vxor.u32 %v666, 2147483648
    %v676 = vmul.f32 %v675, 1.442695
    %v677 = vpow.pop %v676
    %v678 = vadd.f32 %v677, 1.0
    %v679 = vrcp.pop %v678
    %v680 = vmul.f32 1.0, %v679
    %v681 = vld [vmem:[#allocation3] sm:$0xff]
    %683 = vrot.lane.b32.xlu0 %v681, 64
    %v684 = vpop.permute.xlu0 %683
    %v686 = vmul.f32 %v673, %v684
    %v687 = vmul.f32 %v673, %v674
    %689 = vrot.lane.b32.xlu0 %v687, 64
    %v690 = vpop.permute.xlu0 %689
    %v692 = vadd.f32 %v686, %v690
    %v693 = vtanh.pop %v692
    %v694 = vmul.f32 %v680, %v693
    %696 = vrot.lane.b32.xlu0 %v692, 64
    %v697 = vpop.permute.xlu0 %696
    %699 = vst.msk [vmem:[#allocation3] sm:$0xff] %vm28, %v697
    %701 = vrot.lane.b32.xlu0 %v694, 64
    %v702 = vpop.permute.xlu0 %701
    %704 = vst.msk [vmem:[#allocation2] sm:$0xff] %vm28, %v702
    %705 = vst.msk [vmem:[%s199] sm:$0xff] %vm43, %v702
    %706 = vst.msk [vmem:[%s3] sm:$0xff] %vm200, %v702
    // Predicated region
    $region18: #{spectral_unit_forward.6} parent=1 // pred_check
      _
    $region19: #{spectral_unit_forward.6} parent=1 // pred_check_branch
      %708 = sbr.rel (0) target = $region21
    $region20: #{spectral_unit_forward.6} parent=1 // pred_region
      _
    $region21: #{spectral_unit_forward.6} parent=1 // pred_fallthru
      _
    // Predicated region
    $region22: #{spectral_unit_forward.6} parent=1 // pred_check
      _
    $region23: #{spectral_unit_forward.6} parent=1 // pred_check_branch
      %710 = sbr.rel (0) target = $region25
    $region24: #{spectral_unit_forward.6} parent=1 // pred_region
      _
    $region25: #{spectral_unit_forward.6} parent=1 // pred_fallthru
      _
    %711 = vsyncpa [#allocation5], 1

// kernel: spectral_unit_forward.8
$region0: #{spectral_unit_forward.8}
  #allocation0 [shape = 'u32[]', space=smem, size = 0x4, offset = 0x4, fixed_abs, tag = 'smem constant byte address 0x4 - core index']
  #allocation1 [shape = 'u32[144,128]{1,0:T(1,128)}', space=vmem, size = 0x12000, scoped, tag = 'internal scratch']
  %s0 = inlined_call_operand.vmem [shape: f32[32,64], index: 0, kind: input, shape index: {}]
  %s1 = inlined_call_operand.vmem [shape: f32[32,64], index: 1, kind: input, shape index: {}]
  %s2 = inlined_call_operand.vmem [shape: f32[32,32], index: 2, kind: input, shape index: {}]
  %s3 = inlined_call_operand.vmem [shape: f32[64,32], index: 3, kind: input, shape index: {}]
  %s4 = inlined_call_operand.vmem [shape: f32[64,32], index: 4, kind: input, shape index: {}]
  %s5 = inlined_call_operand.vmem [shape: f32[1,32], index: 5, kind: input, shape index: {}]
  %s6 = inlined_call_operand.vmem [shape: f32[32,128], index: 6, kind: input, shape index: {}]
  %s7 = inlined_call_operand.vmem [shape: f32[1,128], index: 7, kind: input, shape index: {}]
  %s8 = inlined_call_operand.vmem [shape: f32[128,32], index: 8, kind: input, shape index: {}]
  %s9 = inlined_call_operand.vmem [shape: f32[1,32], index: 9, kind: input, shape index: {}]
  %s10 = inlined_call_operand.vmem [shape: f32[32,32], index: 10, kind: output, shape index: {}]
  %s11 = sld [smem:[#allocation0]]
  $region50: #{spectral_unit_forward.8} parent=0
    _
  %s13 = ssub.s32 1, %s11
  %s14 = scalar_select 0, %s13, %s11
  // Predicated region
  $region2: #{spectral_unit_forward.8} parent=0 // pred_check
    _
  $region3: #{spectral_unit_forward.8} parent=0 // pred_check_branch
    %16 = sbr.rel (0) target = $region5
  $region4: #{spectral_unit_forward.8} parent=0 // pred_region
    _
  $region5: #{spectral_unit_forward.8} parent=0 // pred_fallthru
    _
  // Predicated region
  $region6: #{spectral_unit_forward.8} parent=0 // pred_check
    _
  $region7: #{spectral_unit_forward.8} parent=0 // pred_check_branch
    %18 = sbr.rel (0) target = $region9
  $region8: #{spectral_unit_forward.8} parent=0 // pred_region
    _
  $region9: #{spectral_unit_forward.8} parent=0 // pred_fallthru
    _
  // Predicated region
  $region10: #{spectral_unit_forward.8} parent=0 // pred_check
    _
  $region11: #{spectral_unit_forward.8} parent=0 // pred_check_branch
    %20 = sbr.rel (0) target = $region13
  $region12: #{spectral_unit_forward.8} parent=0 // pred_region
    _
  $region13: #{spectral_unit_forward.8} parent=0 // pred_fallthru
    _
  // Predicated region
  $region14: #{spectral_unit_forward.8} parent=0 // pred_check
    _
  $region15: #{spectral_unit_forward.8} parent=0 // pred_check_branch
    %22 = sbr.rel (0) target = $region17
  $region16: #{spectral_unit_forward.8} parent=0 // pred_region
    _
  $region17: #{spectral_unit_forward.8} parent=0 // pred_fallthru
    _
  // Predicated region
  $region18: #{spectral_unit_forward.8} parent=0 // pred_check
    _
  $region19: #{spectral_unit_forward.8} parent=0 // pred_check_branch
    %24 = sbr.rel (0) target = $region21
  $region20: #{spectral_unit_forward.8} parent=0 // pred_region
    _
  $region21: #{spectral_unit_forward.8} parent=0 // pred_fallthru
    _
  // Predicated region
  $region22: #{spectral_unit_forward.8} parent=0 // pred_check
    _
  $region23: #{spectral_unit_forward.8} parent=0 // pred_check_branch
    %26 = sbr.rel (0) target = $region25
  $region24: #{spectral_unit_forward.8} parent=0 // pred_region
    _
  $region25: #{spectral_unit_forward.8} parent=0 // pred_fallthru
    _
  // Predicated region
  $region26: #{spectral_unit_forward.8} parent=0 // pred_check
    _
  $region27: #{spectral_unit_forward.8} parent=0 // pred_check_branch
    %28 = sbr.rel (0) target = $region29
  $region28: #{spectral_unit_forward.8} parent=0 // pred_region
    _
  $region29: #{spectral_unit_forward.8} parent=0 // pred_fallthru
    _
  // Predicated region
  $region30: #{spectral_unit_forward.8} parent=0 // pred_check
    _
  $region31: #{spectral_unit_forward.8} parent=0 // pred_check_branch
    %30 = sbr.rel (0) target = $region33
  $region32: #{spectral_unit_forward.8} parent=0 // pred_region
    _
  $region33: #{spectral_unit_forward.8} parent=0 // pred_fallthru
    _
  // Predicated region
  $region34: #{spectral_unit_forward.8} parent=0 // pred_check
    _
  $region35: #{spectral_unit_forward.8} parent=0 // pred_check_branch
    %32 = sbr.rel (0) target = $region37
  $region36: #{spectral_unit_forward.8} parent=0 // pred_region
    _
  $region37: #{spectral_unit_forward.8} parent=0 // pred_fallthru
    _
  // Predicated region
  $region38: #{spectral_unit_forward.8} parent=0 // pred_check
    _
  $region39: #{spectral_unit_forward.8} parent=0 // pred_check_branch
    %34 = sbr.rel (0) target = $region41
  $region40: #{spectral_unit_forward.8} parent=0 // pred_region
    _
  $region41: #{spectral_unit_forward.8} parent=0 // pred_fallthru
    _
  %v35 = vld [vmem:[%s0] sm:$0xff]
  %v36 = vld [vmem:[%s0 + $0x8] sm:$0xff]
  %v37 = vld [vmem:[%s0 + $0x10] sm:$0xff]
  %v38 = vld [vmem:[%s0 + $0x18] sm:$0xff]
  %v39 = vld [vmem:[%s3] sm:$0xff]
  %v40 = vld [vmem:[%s3 + $0x8] sm:$0xff]
  %v41 = vld [vmem:[%s3 + $0x10] sm:$0xff]
  %v42 = vld [vmem:[%s3 + $0x18] sm:$0xff]
  %v43 = vld [vmem:[%s3 + $0x20] sm:$0xff]
  %v44 = vld [vmem:[%s3 + $0x28] sm:$0xff]
  %v45 = vld [vmem:[%s3 + $0x30] sm:$0xff]
  %v46 = vld [vmem:[%s3 + $0x38] sm:$0xff]
  %v47 = vld [vmem:[%s1] sm:$0xff]
  %v48 = vld [vmem:[%s1 + $0x8] sm:$0xff]
  %v49 = vld [vmem:[%s1 + $0x10] sm:$0xff]
  %v50 = vld [vmem:[%s1 + $0x18] sm:$0xff]
  %v51 = vld [vmem:[%s4] sm:$0xff]
  %v52 = vld [vmem:[%s4 + $0x8] sm:$0xff]
  %v53 = vld [vmem:[%s4 + $0x10] sm:$0xff]
  %v54 = vld [vmem:[%s4 + $0x18] sm:$0xff]
  %v55 = vld [vmem:[%s4 + $0x20] sm:$0xff]
  %v56 = vld [vmem:[%s4 + $0x28] sm:$0xff]
  %v57 = vld [vmem:[%s4 + $0x30] sm:$0xff]
  %v58 = vld [vmem:[%s4 + $0x38] sm:$0xff]
  %vm59 = vcmask 523264
  %v61 = vsel %vm59, %v47, 0
  %v64 = vsel %vm59, %v48, 0
  %v67 = vsel %vm59, %v49, 0
  %v70 = vsel %vm59, %v50, 0
  %72 = vmatprep.subr.mxu0 0.0
  %73 = vmatpush1.msra.mxu0 %v51
  %74 = vmatprep.subr.mxu0 0.0
  %75 = vmatpush1.msra.mxu0 %v52
  %76 = vmatprep.subr.mxu0 0.0
  %77 = vmatpush1.msra.mxu0 %v53
  %78 = vmatprep.subr.mxu0 0.0
  %79 = vmatpush1.msra.mxu0 %v54
  %80 = vmatprep.subr.mxu0 0.0
  %81 = vmatpush1.msra.mxu0 %v55
  %82 = vmatprep.subr.mxu0 0.0
  %83 = vmatpush1.msra.mxu0 %v56
  %84 = vmatprep.subr.mxu0 0.0
  %85 = vmatpush1.msra.mxu0 %v57
  %86 = vmatprep.subr.mxu0 0.0
  %87 = vmatpush1.msra.mxu0 %v58
  %88 = vmatprep.subr.mxu0 0.0
  %89 = vmatpush1.msra.mxu0 0.0
  %90 = vmatprep.subr.mxu0 0.0
  %91 = vmatpush1.msra.mxu0 0.0
  %92 = vmatprep.subr.mxu0 0.0
  %93 = vmatpush1.msra.mxu0 0.0
  %94 = vmatprep.subr.mxu0 0.0
  %95 = vmatpush1.msra.mxu0 0.0
  %96 = vmatprep.subr.mxu0 0.0
  %97 = vmatpush1.msra.mxu0 0.0
  %98 = vmatprep.subr.mxu0 0.0
  %99 = vmatpush1.msra.mxu0 0.0
  %100 = vmatprep.subr.mxu0 0.0
  %101 = vmatpush1.msra.mxu0 0.0
  %102 = vmatprep.subr.mxu0 0.0
  %103 = vmatpush1.msra.mxu0 0.0
  %104 = vmatprep.subr.mxu0 0.0
  %105 = vmatpush1.msra.mxu0 0.0
  %106 = vmatprep.subr.mxu0 0.0
  %107 = vmatpush1.msra.mxu0 0.0
  %108 = vmatprep.subr.mxu0 0.0
  %109 = vmatpush1.msra.mxu0 0.0
  %110 = vmatprep.subr.mxu0 0.0
  %111 = vmatpush1.msra.mxu0 0.0
  %112 = vmatprep.subr.mxu0 0.0
  %113 = vmatpush1.msra.mxu0 0.0
  %114 = vmatprep.subr.mxu0 0.0
  %115 = vmatpush1.msra.mxu0 0.0
  %116 = vmatprep.subr.mxu0 0.0
  %117 = vmatpush1.msra.mxu0 0.0
  %118 = vmatprep.subr.mxu0 0.0
  %119 = vmatpush1.msra.mxu0 0.0
  %120 = vmatprep.subr.mxu0 0.0
  %121 = vmatpush1.msra.mxu0 0.0
  %122 = vmatprep.subr.mxu0 0.0
  %123 = vmatpush1.msra.mxu0 0.0
  %124 = vmatprep.subr.mxu0 0.0
  %125 = vmatpush1.msra.mxu0 0.0
  %126 = vmatprep.subr.mxu0 0.0
  %127 = vmatpush1.msra.mxu0 0.0
  %128 = vmatprep.subr.mxu0 0.0
  %129 = vmatpush1.msra.mxu0 0.0
  %130 = vmatprep.subr.mxu0 0.0
  %131 = vmatpush1.msra.mxu0 0.0
  %132 = vmatprep.subr.mxu0 0.0
  %133 = vmatpush1.msra.mxu0 0.0
  %134 = vmatprep.subr.mxu0 0.0
  %135 = vmatpush1.msra.mxu0 0.0
  %136 = vmatprep.mubr.f32.mxu0 0.0
  %137 = vmatmul.mubr.f32.gmra.mrb[0].mxu0 %v61
  %v138 = vpop.f32.mrb[0].mxu0
  %v139 = vadd.f32 0.0, %v138
  %v140 = vpop.f32.mrb[0].mxu0
  %141 = vmatprep.mubr.f32.mxu0 0.0
  %142 = vmatmul.mubr.f32.gmra.mrb[0].mxu0 %v64
  %v143 = vpop.f32.mrb[0].mxu0
  %v144 = vadd.f32 0.0, %v143
  %v145 = vpop.f32.mrb[0].mxu0
  %146 = vmatprep.mubr.f32.mxu0 0.0
  %147 = vmatmul.mubr.f32.gmra.mrb[0].mxu0 %v67
  %v148 = vpop.f32.mrb[0].mxu0
  %v149 = vadd.f32 0.0, %v148
  %v150 = vpop.f32.mrb[0].mxu0
  %151 = vmatprep.mubr.f32.mxu0 0.0
  %152 = vmatmul.mubr.f32.gmra.mrb[0].mxu0 %v70
  %v153 = vpop.f32.mrb[0].mxu0
  %v154 = vadd.f32 0.0, %v153
  %v155 = vpop.f32.mrb[0].mxu0
  %156 = vdwg.mxu0
  %v158 = vsel %vm59, %v35, 0
  %v161 = vsel %vm59, %v36, 0
  %v164 = vsel %vm59, %v37, 0
  %v167 = vsel %vm59, %v38, 0
  %169 = vmatprep.subr.mxu0 0.0
  %170 = vmatpush1.msra.mxu0 %v39
  %171 = vmatprep.subr.mxu0 0.0
  %172 = vmatpush1.msra.mxu0 %v40
  %173 = vmatprep.subr.mxu0 0.0
  %174 = vmatpush1.msra.mxu0 %v41
  %175 = vmatprep.subr.mxu0 0.0
  %176 = vmatpush1.msra.mxu0 %v42
  %177 = vmatprep.subr.mxu0 0.0
  %178 = vmatpush1.msra.mxu0 %v43
  %179 = vmatprep.subr.mxu0 0.0
  %180 = vmatpush1.msra.mxu0 %v44
  %181 = vmatprep.subr.mxu0 0.0
  %182 = vmatpush1.msra.mxu0 %v45
  %183 = vmatprep.subr.mxu0 0.0
  %184 = vmatpush1.msra.mxu0 %v46
  %185 = vmatprep.subr.mxu0 0.0
  %186 = vmatpush1.msra.mxu0 0.0
  %187 = vmatprep.subr.mxu0 0.0
  %188 = vmatpush1.msra.mxu0 0.0
  %189 = vmatprep.subr.mxu0 0.0
  %190 = vmatpush1.msra.mxu0 0.0
  %191 = vmatprep.subr.mxu0 0.0
  %192 = vmatpush1.msra.mxu0 0.0
  %193 = vmatprep.subr.mxu0 0.0
  %194 = vmatpush1.msra.mxu0 0.0
  %195 = vmatprep.subr.mxu0 0.0
  %196 = vmatpush1.msra.mxu0 0.0
  %197 = vmatprep.subr.mxu0 0.0
  %198 = vmatpush1.msra.mxu0 0.0
  %199 = vmatprep.subr.mxu0 0.0
  %200 = vmatpush1.msra.mxu0 0.0
  %201 = vmatprep.subr.mxu0 0.0
  %202 = vmatpush1.msra.mxu0 0.0
  %203 = vmatprep.subr.mxu0 0.0
  %204 = vmatpush1.msra.mxu0 0.0
  %205 = vmatprep.subr.mxu0 0.0
  %206 = vmatpush1.msra.mxu0 0.0
  %207 = vmatprep.subr.mxu0 0.0
  %208 = vmatpush1.msra.mxu0 0.0
  %209 = vmatprep.subr.mxu0 0.0
  %210 = vmatpush1.msra.mxu0 0.0
  %211 = vmatprep.subr.mxu0 0.0
  %212 = vmatpush1.msra.mxu0 0.0
  %213 = vmatprep.subr.mxu0 0.0
  %214 = vmatpush1.msra.mxu0 0.0
  %215 = vmatprep.subr.mxu0 0.0
  %216 = vmatpush1.msra.mxu0 0.0
  %217 = vmatprep.subr.mxu0 0.0
  %218 = vmatpush1.msra.mxu0 0.0
  %219 = vmatprep.subr.mxu0 0.0
  %220 = vmatpush1.msra.mxu0 0.0
  %221 = vmatprep.subr.mxu0 0.0
  %222 = vmatpush1.msra.mxu0 0.0
  %223 = vmatprep.subr.mxu0 0.0
  %224 = vmatpush1.msra.mxu0 0.0
  %225 = vmatprep.subr.mxu0 0.0
  %226 = vmatpush1.msra.mxu0 0.0
  %227 = vmatprep.subr.mxu0 0.0
  %228 = vmatpush1.msra.mxu0 0.0
  %229 = vmatprep.subr.mxu0 0.0
  %230 = vmatpush1.msra.mxu0 0.0
  %231 = vmatprep.subr.mxu0 0.0
  %232 = vmatpush1.msra.mxu0 0.0
  %233 = vmatprep.mubr.f32.mxu0 0.0
  %234 = vmatmul.mubr.f32.gmra.mrb[0].mxu0 %v158
  %v235 = vpop.f32.mrb[0].mxu0
  %v236 = vadd.f32 %v139, %v235
  %v237 = vpop.f32.mrb[0].mxu0
  %238 = vmatprep.mubr.f32.mxu0 0.0
  %239 = vmatmul.mubr.f32.gmra.mrb[0].mxu0 %v161
  %v240 = vpop.f32.mrb[0].mxu0
  %v241 = vadd.f32 %v144, %v240
  %v242 = vpop.f32.mrb[0].mxu0
  %243 = vmatprep.mubr.f32.mxu0 0.0
  %244 = vmatmul.mubr.f32.gmra.mrb[0].mxu0 %v164
  %v245 = vpop.f32.mrb[0].mxu0
  %v246 = vadd.f32 %v149, %v245
  %v247 = vpop.f32.mrb[0].mxu0
  %248 = vmatprep.mubr.f32.mxu0 0.0
  %249 = vmatmul.mubr.f32.gmra.mrb[0].mxu0 %v167
  %v250 = vpop.f32.mrb[0].mxu0
  %v251 = vadd.f32 %v154, %v250
  %v252 = vpop.f32.mrb[0].mxu0
  %253 = vdwg.mxu0
  %v254 = vld [vmem:[%s5] sm:$0x1]
  %v256 = vlaneseq
  %v257 = vshrl.u32 %v256, 7
  %v258 = vsub.s32 0, %v257
  %v259 = vrot.slane %v254, %v258
  %v261 = vadd.f32 %v236, %v259
  %v262 = vadd.f32 %v241, %v259
  %v263 = vadd.f32 %v246, %v259
  %v264 = vadd.f32 %v251, %v259
  %v265 = vld [vmem:[%s6] sm:$0xff]
  %v266 = vld [vmem:[%s6 + $0x8] sm:$0xff]
  %v267 = vld [vmem:[%s6 + $0x10] sm:$0xff]
  %v268 = vld [vmem:[%s6 + $0x18] sm:$0xff]
  %v269 = vld [vmem:[%s7] sm:$0x1]
  %v271 = vlaneseq
  %v272 = vshrl.u32 %v271, 7
  %v273 = vsub.s32 0, %v272
  %v274 = vrot.slane %v269, %v273
  %vm276 = vcmask 261120
  %v278 = vsel %vm276, %v261, 0
  %v281 = vsel %vm276, %v262, 0
  %v284 = vsel %vm276, %v263, 0
  %v287 = vsel %vm276, %v264, 0
  %289 = vmatprep.subr.mxu0 0.0
  %290 = vmatpush1.msra.mxu0 %v265
  %291 = vmatprep.subr.mxu0 0.0
  %292 = vmatpush1.msra.mxu0 %v266
  %293 = vmatprep.subr.mxu0 0.0
  %294 = vmatpush1.msra.mxu0 %v267
  %295 = vmatprep.subr.mxu0 0.0
  %296 = vmatpush1.msra.mxu0 %v268
  %297 = vmatprep.subr.mxu0 0.0
  %298 = vmatpush1.msra.mxu0 0.0
  %299 = vmatprep.subr.mxu0 0.0
  %300 = vmatpush1.msra.mxu0 0.0
  %301 = vmatprep.subr.mxu0 0.0
  %302 = vmatpush1.msra.mxu0 0.0
  %303 = vmatprep.subr.mxu0 0.0
  %304 = vmatpush1.msra.mxu0 0.0
  %305 = vmatprep.subr.mxu0 0.0
  %306 = vmatpush1.msra.mxu0 0.0
  %307 = vmatprep.subr.mxu0 0.0
  %308 = vmatpush1.msra.mxu0 0.0
  %309 = vmatprep.subr.mxu0 0.0
  %310 = vmatpush1.msra.mxu0 0.0
  %311 = vmatprep.subr.mxu0 0.0
  %312 = vmatpush1.msra.mxu0 0.0
  %313 = vmatprep.subr.mxu0 0.0
  %314 = vmatpush1.msra.mxu0 0.0
  %315 = vmatprep.subr.mxu0 0.0
  %316 = vmatpush1.msra.mxu0 0.0
  %317 = vmatprep.subr.mxu0 0.0
  %318 = vmatpush1.msra.mxu0 0.0
  %319 = vmatprep.subr.mxu0 0.0
  %320 = vmatpush1.msra.mxu0 0.0
  %321 = vmatprep.subr.mxu0 0.0
  %322 = vmatpush1.msra.mxu0 0.0
  %323 = vmatprep.subr.mxu0 0.0
  %324 = vmatpush1.msra.mxu0 0.0
  %325 = vmatprep.subr.mxu0 0.0
  %326 = vmatpush1.msra.mxu0 0.0
  %327 = vmatprep.subr.mxu0 0.0
  %328 = vmatpush1.msra.mxu0 0.0
  %329 = vmatprep.subr.mxu0 0.0
  %330 = vmatpush1.msra.mxu0 0.0
  %331 = vmatprep.subr.mxu0 0.0
  %332 = vmatpush1.msra.mxu0 0.0
  %333 = vmatprep.subr.mxu0 0.0
  %334 = vmatpush1.msra.mxu0 0.0
  %335 = vmatprep.subr.mxu0 0.0
  %336 = vmatpush1.msra.mxu0 0.0
  %337 = vmatprep.subr.mxu0 0.0
  %338 = vmatpush1.msra.mxu0 0.0
  %339 = vmatprep.subr.mxu0 0.0
  %340 = vmatpush1.msra.mxu0 0.0
  %341 = vmatprep.subr.mxu0 0.0
  %342 = vmatpush1.msra.mxu0 0.0
  %343 = vmatprep.subr.mxu0 0.0
  %344 = vmatpush1.msra.mxu0 0.0
  %345 = vmatprep.subr.mxu0 0.0
  %346 = vmatpush1.msra.mxu0 0.0
  %347 = vmatprep.subr.mxu0 0.0
  %348 = vmatpush1.msra.mxu0 0.0
  %349 = vmatprep.subr.mxu0 0.0
  %350 = vmatpush1.msra.mxu0 0.0
  %351 = vmatprep.subr.mxu0 0.0
  %352 = vmatpush1.msra.mxu0 0.0
  %353 = vmatprep.mubr.f32.mxu0 0.0
  %354 = vmatmul.mubr.f32.gmra.mrb[0].mxu0 %v278
  %v355 = vpop.f32.mrb[0].mxu0
  %v356 = vadd.f32 %v274, %v355
  %v357 = vpop.f32.mrb[0].mxu0
  %358 = vmatprep.mubr.f32.mxu0 0.0
  %359 = vmatmul.mubr.f32.gmra.mrb[0].mxu0 %v281
  %v360 = vpop.f32.mrb[0].mxu0
  %v361 = vadd.f32 %v274, %v360
  %v362 = vpop.f32.mrb[0].mxu0
  %363 = vmatprep.mubr.f32.mxu0 0.0
  %364 = vmatmul.mubr.f32.gmra.mrb[0].mxu0 %v284
  %v365 = vpop.f32.mrb[0].mxu0
  %v366 = vadd.f32 %v274, %v365
  %v367 = vpop.f32.mrb[0].mxu0
  %368 = vmatprep.mubr.f32.mxu0 0.0
  %369 = vmatmul.mubr.f32.gmra.mrb[0].mxu0 %v287
  %v370 = vpop.f32.mrb[0].mxu0
  %v371 = vadd.f32 %v274, %v370
  %v372 = vpop.f32.mrb[0].mxu0
  %373 = vdwg.mxu0
  %v374 = vmul.f32 %v356, 0.5
  %v375 = vmul.f32 %v361, 0.5
  %v376 = vmul.f32 %v366, 0.5
  %v377 = vmul.f32 %v371, 0.5
  %v378 = vmul.f32 %v356, 0.044715
  %v379 = vmul.f32 %v361, 0.044715
  %v380 = vmul.f32 %v366, 0.044715
  %v381 = vmul.f32 %v371, 0.044715
  %v382 = vmul.f32 %v378, %v356
  %v383 = vmul.f32 %v379, %v361
  %v384 = vmul.f32 %v380, %v366
  %v385 = vmul.f32 %v381, %v371
  %v386 = vmul.f32 %v382, %v356
  %v387 = vmul.f32 %v383, %v361
  %v388 = vmul.f32 %v384, %v366
  %v389 = vmul.f32 %v385, %v371
  %v390 = vadd.f32 %v356, %v386
  %v391 = vadd.f32 %v361, %v387
  %v392 = vadd.f32 %v366, %v388
  %v393 = vadd.f32 %v371, %v389
  %v394 = vmul.f32 %v390, 0.7978846
  %v395 = vmul.f32 %v391, 0.7978846
  %v396 = vmul.f32 %v392, 0.7978846
  %v397 = vmul.f32 %v393, 0.7978846
  %v398 = vtanh.pop %v394
  %v399 = vtanh.pop %v395
  %v400 = vtanh.pop %v396
  %v401 = vtanh.pop %v397
  %v402 = vadd.f32 %v398, 1.0
  %v403 = vadd.f32 %v399, 1.0
  %v404 = vadd.f32 %v400, 1.0
  %v405 = vadd.f32 %v401, 1.0
  %v406 = vmul.f32 %v374, %v402
  %v407 = vmul.f32 %v375, %v403
  %v408 = vmul.f32 %v376, %v404
  %v409 = vmul.f32 %v377, %v405
  %v410 = vld [vmem:[%s8] sm:$0xff]
  %v411 = vld [vmem:[%s8 + $0x8] sm:$0xff]
  %v412 = vld [vmem:[%s8 + $0x10] sm:$0xff]
  %v413 = vld [vmem:[%s8 + $0x18] sm:$0xff]
  %v414 = vld [vmem:[%s8 + $0x20] sm:$0xff]
  %v415 = vld [vmem:[%s8 + $0x28] sm:$0xff]
  %v416 = vld [vmem:[%s8 + $0x30] sm:$0xff]
  %v417 = vld [vmem:[%s8 + $0x38] sm:$0xff]
  %v418 = vld [vmem:[%s8 + $0x40] sm:$0xff]
  %v419 = vld [vmem:[%s8 + $0x48] sm:$0xff]
  %v420 = vld [vmem:[%s8 + $0x50] sm:$0xff]
  %v421 = vld [vmem:[%s8 + $0x58] sm:$0xff]
  %v422 = vld [vmem:[%s8 + $0x60] sm:$0xff]
  %v423 = vld [vmem:[%s8 + $0x68] sm:$0xff]
  %v424 = vld [vmem:[%s8 + $0x70] sm:$0xff]
  %v425 = vld [vmem:[%s8 + $0x78] sm:$0xff]
  %v426 = vld [vmem:[%s9] sm:$0x1]
  %v428 = vlaneseq
  %v429 = vshrl.u32 %v428, 7
  %v430 = vsub.s32 0, %v429
  %v431 = vrot.slane %v426, %v430
  %433 = vmatprep.subr.mxu0 0.0
  %434 = vmatpush1.msra.mxu0 %v410
  %435 = vmatprep.subr.mxu0 0.0
  %436 = vmatpush1.msra.mxu0 %v411
  %437 = vmatprep.subr.mxu0 0.0
  %438 = vmatpush1.msra.mxu0 %v412
  %439 = vmatprep.subr.mxu0 0.0
  %440 = vmatpush1.msra.mxu0 %v413
  %441 = vmatprep.subr.mxu0 0.0
  %442 = vmatpush1.msra.mxu0 %v414
  %443 = vmatprep.subr.mxu0 0.0
  %444 = vmatpush1.msra.mxu0 %v415
  %445 = vmatprep.subr.mxu0 0.0
  %446 = vmatpush1.msra.mxu0 %v416
  %447 = vmatprep.subr.mxu0 0.0
  %448 = vmatpush1.msra.mxu0 %v417
  %449 = vmatprep.subr.mxu0 0.0
  %450 = vmatpush1.msra.mxu0 %v418
  %451 = vmatprep.subr.mxu0 0.0
  %452 = vmatpush1.msra.mxu0 %v419
  %453 = vmatprep.subr.mxu0 0.0
  %454 = vmatpush1.msra.mxu0 %v420
  %455 = vmatprep.subr.mxu0 0.0
  %456 = vmatpush1.msra.mxu0 %v421
  %457 = vmatprep.subr.mxu0 0.0
  %458 = vmatpush1.msra.mxu0 %v422
  %459 = vmatprep.subr.mxu0 0.0
  %460 = vmatpush1.msra.mxu0 %v423
  %461 = vmatprep.subr.mxu0 0.0
  %462 = vmatpush1.msra.mxu0 %v424
  %463 = vmatprep.subr.mxu0 0.0
  %464 = vmatpush1.msra.mxu0 %v425
  %465 = vmatprep.subr.mxu0 0.0
  %466 = vmatpush1.msra.mxu0 0.0
  %467 = vmatprep.subr.mxu0 0.0
  %468 = vmatpush1.msra.mxu0 0.0
  %469 = vmatprep.subr.mxu0 0.0
  %470 = vmatpush1.msra.mxu0 0.0
  %471 = vmatprep.subr.mxu0 0.0
  %472 = vmatpush1.msra.mxu0 0.0
  %473 = vmatprep.subr.mxu0 0.0
  %474 = vmatpush1.msra.mxu0 0.0
  %475 = vmatprep.subr.mxu0 0.0
  %476 = vmatpush1.msra.mxu0 0.0
  %477 = vmatprep.subr.mxu0 0.0
  %478 = vmatpush1.msra.mxu0 0.0
  %479 = vmatprep.subr.mxu0 0.0
  %480 = vmatpush1.msra.mxu0 0.0
  %481 = vmatprep.subr.mxu0 0.0
  %482 = vmatpush1.msra.mxu0 0.0
  %483 = vmatprep.subr.mxu0 0.0
  %484 = vmatpush1.msra.mxu0 0.0
  %485 = vmatprep.subr.mxu0 0.0
  %486 = vmatpush1.msra.mxu0 0.0
  %487 = vmatprep.subr.mxu0 0.0
  %488 = vmatpush1.msra.mxu0 0.0
  %489 = vmatprep.subr.mxu0 0.0
  %490 = vmatpush1.msra.mxu0 0.0
  %491 = vmatprep.subr.mxu0 0.0
  %492 = vmatpush1.msra.mxu0 0.0
  %493 = vmatprep.subr.mxu0 0.0
  %494 = vmatpush1.msra.mxu0 0.0
  %495 = vmatprep.subr.mxu0 0.0
  %496 = vmatpush1.msra.mxu0 0.0
  %497 = vmatprep.mubr.f32.mxu0 0.0
  %498 = vmatmul.mubr.f32.gmra.mrb[0].mxu0 %v406
  %v499 = vpop.f32.mrb[0].mxu0
  %v500 = vadd.f32 %v431, %v499
  %v501 = vpop.f32.mrb[0].mxu0
  %502 = vmatprep.mubr.f32.mxu0 0.0
  %503 = vmatmul.mubr.f32.gmra.mrb[0].mxu0 %v407
  %v504 = vpop.f32.mrb[0].mxu0
  %v505 = vadd.f32 %v431, %v504
  %v506 = vpop.f32.mrb[0].mxu0
  %507 = vmatprep.mubr.f32.mxu0 0.0
  %508 = vmatmul.mubr.f32.gmra.mrb[0].mxu0 %v408
  %v509 = vpop.f32.mrb[0].mxu0
  %v510 = vadd.f32 %v431, %v509
  %v511 = vpop.f32.mrb[0].mxu0
  %512 = vmatprep.mubr.f32.mxu0 0.0
  %513 = vmatmul.mubr.f32.gmra.mrb[0].mxu0 %v409
  %v514 = vpop.f32.mrb[0].mxu0
  %v515 = vadd.f32 %v431, %v514
  %v516 = vpop.f32.mrb[0].mxu0
  %517 = vdwg.mxu0
  %v518 = vld [vmem:[%s2] sm:$0xff]
  %v519 = vld [vmem:[%s2 + $0x8] sm:$0xff]
  %v520 = vld [vmem:[%s2 + $0x10] sm:$0xff]
  %v521 = vld [vmem:[%s2 + $0x18] sm:$0xff]
  %v522 = vadd.f32 %v500, %v518
  %v523 = vadd.f32 %v505, %v519
  %v524 = vadd.f32 %v510, %v520
  %v525 = vadd.f32 %v515, %v521
  %526 = vst.msk [vmem:[%s10] sm:$0xff] %vm276, %v522
  %527 = vst.msk [vmem:[%s10 + $0x8] sm:$0xff] %vm276, %v523
  %528 = vst.msk [vmem:[%s10 + $0x10] sm:$0xff] %vm276, %v524
  %529 = vst.msk [vmem:[%s10 + $0x18] sm:$0xff] %vm276, %v525
  // Predicated region
  $region42: #{spectral_unit_forward.8} parent=0 // pred_check
    _
  $region43: #{spectral_unit_forward.8} parent=0 // pred_check_branch
    %531 = sbr.rel (0) target = $region45
  $region44: #{spectral_unit_forward.8} parent=0 // pred_region
    _
  $region45: #{spectral_unit_forward.8} parent=0 // pred_fallthru
    _
  // Predicated region
  $region46: #{spectral_unit_forward.8} parent=0 // pred_check
    _
  $region47: #{spectral_unit_forward.8} parent=0 // pred_check_branch
    %533 = sbr.rel (0) target = $region49
  $region48: #{spectral_unit_forward.8} parent=0 // pred_region
    _
  $region49: #{spectral_unit_forward.8} parent=0 // pred_fallthru
    _

// kernel: spectral_unit_forward.7
$region0: #{spectral_unit_forward.7}
  #allocation0 [shape = 'u32[]', space=smem, size = 0x4, offset = 0x4, fixed_abs, tag = 'smem constant byte address 0x4 - core index']
  #allocation1 [shape = 'u32[144,128]{1,0:T(1,128)}', space=vmem, size = 0x12000, scoped, tag = 'internal scratch']
  #allocation2 [shape = 'f32[8,64]{1,0:T(8,128)}', space=vmem, size = 0x1000, scoped, tag = 'scratch operand']
  #allocation3 [shape = 'f32[8,64]{1,0:T(8,128)}', space=vmem, size = 0x1000, scoped, tag = 'scratch operand']
  %s0 = inlined_call_operand.vmem [shape: f32[4,8,32], index: 0, kind: input, shape index: {}]
  %s1 = inlined_call_operand.vmem [shape: f32[128,256], index: 1, kind: input, shape index: {}]
  %s2 = inlined_call_operand.vmem [shape: f32[1,256], index: 2, kind: input, shape index: {}]
  %s3 = inlined_call_operand.vmem [shape: f32[4,8,64], index: 3, kind: output, shape index: {}]
  %s4 = sld [smem:[#allocation0]]
  $region22: #{spectral_unit_forward.7} parent=0
    _
  %s6 = ssub.s32 1, %s4
  %s7 = scalar_select 0, %s6, %s4
  // Predicated region
  $region2: #{spectral_unit_forward.7} parent=0 // pred_check
    _
  $region3: #{spectral_unit_forward.7} parent=0 // pred_check_branch
    %9 = sbr.rel (0) target = $region5
  $region4: #{spectral_unit_forward.7} parent=0 // pred_region
    _
  $region5: #{spectral_unit_forward.7} parent=0 // pred_fallthru
    _
  // Predicated region
  $region6: #{spectral_unit_forward.7} parent=0 // pred_check
    _
  $region7: #{spectral_unit_forward.7} parent=0 // pred_check_branch
    %11 = sbr.rel (0) target = $region9
  $region8: #{spectral_unit_forward.7} parent=0 // pred_region
    _
  $region9: #{spectral_unit_forward.7} parent=0 // pred_fallthru
    _
  // Predicated region
  $region10: #{spectral_unit_forward.7} parent=0 // pred_check
    _
  $region11: #{spectral_unit_forward.7} parent=0 // pred_check_branch
    %13 = sbr.rel (0) target = $region13
  $region12: #{spectral_unit_forward.7} parent=0 // pred_region
    _
  $region13: #{spectral_unit_forward.7} parent=0 // pred_fallthru
    _
  %vm14 = vcmask 523264
  %15 = vst.msk [vmem:[#allocation2] sm:$0xff] %vm14, 0.0
  %16 = vst.msk [vmem:[#allocation3] sm:$0xff] %vm14, 0.0
  %v17 = vld [vmem:[%s0] sm:$0xff]
  %s18 = scalar_lea.vmem %s0, 24
  %v19 = vld [vmem:[%s18] sm:$0xff]
  %v20 = vld [vmem:[#allocation2] sm:$0xff]
  %22 = vrot.lane.b32.xlu0 %v19, 32
  %v23 = vpop.permute.xlu0 %22
  %26 = vrot.lane.b32.xlu0 %v20, 64
  %v27 = vpop.permute.xlu0 %26
  %vm29 = vcmask 261120
  %v30 = vsel %vm29, %v17, %v23
  %v31 = vsel %vm14, %v30, %v27
  %v32 = vld [vmem:[%s1] sm:$0xff]
  %v33 = vld [vmem:[%s1 + $0x8] sm:$0xff]
  %v34 = vld [vmem:[%s1 + $0x10] sm:$0xff]
  %v35 = vld [vmem:[%s1 + $0x18] sm:$0xff]
  %v36 = vld [vmem:[%s1 + $0x20] sm:$0xff]
  %v37 = vld [vmem:[%s1 + $0x28] sm:$0xff]
  %v38 = vld [vmem:[%s1 + $0x30] sm:$0xff]
  %v39 = vld [vmem:[%s1 + $0x38] sm:$0xff]
  %v40 = vld [vmem:[%s1 + $0x40] sm:$0xff]
  %v41 = vld [vmem:[%s1 + $0x48] sm:$0xff]
  %v42 = vld [vmem:[%s1 + $0x50] sm:$0xff]
  %v43 = vld [vmem:[%s1 + $0x58] sm:$0xff]
  %v44 = vld [vmem:[%s1 + $0x60] sm:$0xff]
  %v45 = vld [vmem:[%s1 + $0x68] sm:$0xff]
  %v46 = vld [vmem:[%s1 + $0x70] sm:$0xff]
  %v47 = vld [vmem:[%s1 + $0x78] sm:$0xff]
  %v48 = vld [vmem:[%s1 + $0x80] sm:$0xff]
  %v49 = vld [vmem:[%s1 + $0x88] sm:$0xff]
  %v50 = vld [vmem:[%s1 + $0x90] sm:$0xff]
  %v51 = vld [vmem:[%s1 + $0x98] sm:$0xff]
  %v52 = vld [vmem:[%s1 + $0xa0] sm:$0xff]
  %v53 = vld [vmem:[%s1 + $0xa8] sm:$0xff]
  %v54 = vld [vmem:[%s1 + $0xb0] sm:$0xff]
  %v55 = vld [vmem:[%s1 + $0xb8] sm:$0xff]
  %v56 = vld [vmem:[%s1 + $0xc0] sm:$0xff]
  %v57 = vld [vmem:[%s1 + $0xc8] sm:$0xff]
  %v58 = vld [vmem:[%s1 + $0xd0] sm:$0xff]
  %v59 = vld [vmem:[%s1 + $0xd8] sm:$0xff]
  %v60 = vld [vmem:[%s1 + $0xe0] sm:$0xff]
  %v61 = vld [vmem:[%s1 + $0xe8] sm:$0xff]
  %v62 = vld [vmem:[%s1 + $0xf0] sm:$0xff]
  %v63 = vld [vmem:[%s1 + $0xf8] sm:$0xff]
  %v64 = vld [vmem:[%s2] sm:$0x3]
  %v66 = vlaneseq
  %v67 = vshrl.u32 %v66, 7
  %v68 = vsub.s32 0, %v67
  %v69 = vrot.slane %v64, %v68
  %v70 = vlaneseq
  %v71 = vshrl.u32 %v70, 7
  %v72 = vsub.s32 1, %v71
  %v73 = vrot.slane %v64, %v72
  %76 = vmatprep.subr.mxu0 %v33
  %77 = vmatpush1.msra.mxu0 %v32
  %78 = vmatprep.subr.mxu0 %v35
  %79 = vmatpush1.msra.mxu0 %v34
  %80 = vmatprep.subr.mxu0 %v37
  %81 = vmatpush1.msra.mxu0 %v36
  %82 = vmatprep.subr.mxu0 %v39
  %83 = vmatpush1.msra.mxu0 %v38
  %84 = vmatprep.subr.mxu0 %v41
  %85 = vmatpush1.msra.mxu0 %v40
  %86 = vmatprep.subr.mxu0 %v43
  %87 = vmatpush1.msra.mxu0 %v42
  %88 = vmatprep.subr.mxu0 %v45
  %89 = vmatpush1.msra.mxu0 %v44
  %90 = vmatprep.subr.mxu0 %v47
  %91 = vmatpush1.msra.mxu0 %v46
  %92 = vmatprep.subr.mxu0 %v49
  %93 = vmatpush1.msra.mxu0 %v48
  %94 = vmatprep.subr.mxu0 %v51
  %95 = vmatpush1.msra.mxu0 %v50
  %96 = vmatprep.subr.mxu0 %v53
  %97 = vmatpush1.msra.mxu0 %v52
  %98 = vmatprep.subr.mxu0 %v55
  %99 = vmatpush1.msra.mxu0 %v54
  %100 = vmatprep.subr.mxu0 %v57
  %101 = vmatpush1.msra.mxu0 %v56
  %102 = vmatprep.subr.mxu0 %v59
  %103 = vmatpush1.msra.mxu0 %v58
  %104 = vmatprep.subr.mxu0 %v61
  %105 = vmatpush1.msra.mxu0 %v60
  %106 = vmatprep.subr.mxu0 %v63
  %107 = vmatpush1.msra.mxu0 %v62
  %108 = vmatprep.subr.mxu0 0.0
  %109 = vmatpush1.msra.mxu0 0.0
  %110 = vmatprep.subr.mxu0 0.0
  %111 = vmatpush1.msra.mxu0 0.0
  %112 = vmatprep.subr.mxu0 0.0
  %113 = vmatpush1.msra.mxu0 0.0
  %114 = vmatprep.subr.mxu0 0.0
  %115 = vmatpush1.msra.mxu0 0.0
  %116 = vmatprep.subr.mxu0 0.0
  %117 = vmatpush1.msra.mxu0 0.0
  %118 = vmatprep.subr.mxu0 0.0
  %119 = vmatpush1.msra.mxu0 0.0
  %120 = vmatprep.subr.mxu0 0.0
  %121 = vmatpush1.msra.mxu0 0.0
  %122 = vmatprep.subr.mxu0 0.0
  %123 = vmatpush1.msra.mxu0 0.0
  %124 = vmatprep.subr.mxu0 0.0
  %125 = vmatpush1.msra.mxu0 0.0
  %126 = vmatprep.subr.mxu0 0.0
  %127 = vmatpush1.msra.mxu0 0.0
  %128 = vmatprep.subr.mxu0 0.0
  %129 = vmatpush1.msra.mxu0 0.0
  %130 = vmatprep.subr.mxu0 0.0
  %131 = vmatpush1.msra.mxu0 0.0
  %132 = vmatprep.subr.mxu0 0.0
  %133 = vmatpush1.msra.mxu0 0.0
  %134 = vmatprep.subr.mxu0 0.0
  %135 = vmatpush1.msra.mxu0 0.0
  %136 = vmatprep.subr.mxu0 0.0
  %137 = vmatpush1.msra.mxu0 0.0
  %138 = vmatprep.subr.mxu0 0.0
  %139 = vmatpush1.msra.mxu0 0.0
  %140 = vmatprep.mubr.f32.mxu0 0.0
  %141 = vmatmul.mubr.f32.gmra.mrb[0].mxu0 %v31
  %v142 = vpop.f32.mrb[0].mxu0
  %v143 = vadd.f32 %v69, %v142
  %v144 = vpop.f32.mrb[0].mxu0
  %v145 = vadd.f32 %v73, %v144
  %146 = vdwg.mxu0
  %v147 = vxor.u32 %v143, 2147483648
  %v148 = vmul.f32 %v147, 1.442695
  %v149 = vpow.pop %v148
  %v150 = vadd.f32 %v149, 1.0
  %v151 = vrcp.pop %v150
  %v152 = vmul.f32 1.0, %v151
  %v153 = vtanh.pop %v145
  %v154 = vxor.u32 %v145, 2147483648
  %v155 = vmul.f32 %v154, 1.442695
  %v156 = vpow.pop %v155
  %v157 = vadd.f32 %v156, 1.0
  %v158 = vrcp.pop %v157
  %v159 = vmul.f32 1.0, %v158
  %v160 = vld [vmem:[#allocation3] sm:$0xff]
  %162 = vrot.lane.b32.xlu0 %v160, 64
  %v163 = vpop.permute.xlu0 %162
  %v165 = vmul.f32 %v152, %v163
  %v166 = vmul.f32 %v152, %v153
  %168 = vrot.lane.b32.xlu0 %v166, 64
  %v169 = vpop.permute.xlu0 %168
  %v171 = vadd.f32 %v165, %v169
  %v172 = vtanh.pop %v171
  %v173 = vmul.f32 %v159, %v172
  %175 = vrot.lane.b32.xlu0 %v171, 64
  %v176 = vpop.permute.xlu0 %175
  %178 = vst.msk [vmem:[#allocation3] sm:$0xff] %vm14, %v176
  %180 = vrot.lane.b32.xlu0 %v173, 64
  %v181 = vpop.permute.xlu0 %180
  %183 = vst.msk [vmem:[#allocation2] sm:$0xff] %vm14, %v181
  %184 = vst.msk [vmem:[%s3] sm:$0xff] %vm29, %v181
  %s185 = scalar_lea.vmem %s3, 24
  %vm186 = vcmask 523520
  %187 = vst.msk [vmem:[%s185] sm:$0xff] %vm186, %v181
  %s188 = scalar_lea.vmem %s0, 8
  %v189 = vld [vmem:[%s188] sm:$0xff]
  %s190 = scalar_lea.vmem %s0, 16
  %v191 = vld [vmem:[%s190] sm:$0xff]
  %v192 = vld [vmem:[#allocation2] sm:$0xff]
  %194 = vrot.lane.b32.xlu0 %v191, 32
  %v195 = vpop.permute.xlu0 %194
  %198 = vrot.lane.b32.xlu0 %v192, 64
  %v199 = vpop.permute.xlu0 %198
  %v201 = vsel %vm29, %v189, %v195
  %v202 = vsel %vm14, %v201, %v199
  %v203 = vld [vmem:[%s1] sm:$0xff]
  %v204 = vld [vmem:[%s1 + $0x8] sm:$0xff]
  %v205 = vld [vmem:[%s1 + $0x10] sm:$0xff]
  %v206 = vld [vmem:[%s1 + $0x18] sm:$0xff]
  %v207 = vld [vmem:[%s1 + $0x20] sm:$0xff]
  %v208 = vld [vmem:[%s1 + $0x28] sm:$0xff]
  %v209 = vld [vmem:[%s1 + $0x30] sm:$0xff]
  %v210 = vld [vmem:[%s1 + $0x38] sm:$0xff]
  %v211 = vld [vmem:[%s1 + $0x40] sm:$0xff]
  %v212 = vld [vmem:[%s1 + $0x48] sm:$0xff]
  %v213 = vld [vmem:[%s1 + $0x50] sm:$0xff]
  %v214 = vld [vmem:[%s1 + $0x58] sm:$0xff]
  %v215 = vld [vmem:[%s1 + $0x60] sm:$0xff]
  %v216 = vld [vmem:[%s1 + $0x68] sm:$0xff]
  %v217 = vld [vmem:[%s1 + $0x70] sm:$0xff]
  %v218 = vld [vmem:[%s1 + $0x78] sm:$0xff]
  %v219 = vld [vmem:[%s1 + $0x80] sm:$0xff]
  %v220 = vld [vmem:[%s1 + $0x88] sm:$0xff]
  %v221 = vld [vmem:[%s1 + $0x90] sm:$0xff]
  %v222 = vld [vmem:[%s1 + $0x98] sm:$0xff]
  %v223 = vld [vmem:[%s1 + $0xa0] sm:$0xff]
  %v224 = vld [vmem:[%s1 + $0xa8] sm:$0xff]
  %v225 = vld [vmem:[%s1 + $0xb0] sm:$0xff]
  %v226 = vld [vmem:[%s1 + $0xb8] sm:$0xff]
  %v227 = vld [vmem:[%s1 + $0xc0] sm:$0xff]
  %v228 = vld [vmem:[%s1 + $0xc8] sm:$0xff]
  %v229 = vld [vmem:[%s1 + $0xd0] sm:$0xff]
  %v230 = vld [vmem:[%s1 + $0xd8] sm:$0xff]
  %v231 = vld [vmem:[%s1 + $0xe0] sm:$0xff]
  %v232 = vld [vmem:[%s1 + $0xe8] sm:$0xff]
  %v233 = vld [vmem:[%s1 + $0xf0] sm:$0xff]
  %v234 = vld [vmem:[%s1 + $0xf8] sm:$0xff]
  %v235 = vld [vmem:[%s2] sm:$0x3]
  %v237 = vlaneseq
  %v238 = vshrl.u32 %v237, 7
  %v239 = vsub.s32 0, %v238
  %v240 = vrot.slane %v235, %v239
  %v241 = vlaneseq
  %v242 = vshrl.u32 %v241, 7
  %v243 = vsub.s32 1, %v242
  %v244 = vrot.slane %v235, %v243
  %247 = vmatprep.subr.mxu0 %v204
  %248 = vmatpush1.msra.mxu0 %v203
  %249 = vmatprep.subr.mxu0 %v206
  %250 = vmatpush1.msra.mxu0 %v205
  %251 = vmatprep.subr.mxu0 %v208
  %252 = vmatpush1.msra.mxu0 %v207
  %253 = vmatprep.subr.mxu0 %v210
  %254 = vmatpush1.msra.mxu0 %v209
  %255 = vmatprep.subr.mxu0 %v212
  %256 = vmatpush1.msra.mxu0 %v211
  %257 = vmatprep.subr.mxu0 %v214
  %258 = vmatpush1.msra.mxu0 %v213
  %259 = vmatprep.subr.mxu0 %v216
  %260 = vmatpush1.msra.mxu0 %v215
  %261 = vmatprep.subr.mxu0 %v218
  %262 = vmatpush1.msra.mxu0 %v217
  %263 = vmatprep.subr.mxu0 %v220
  %264 = vmatpush1.msra.mxu0 %v219
  %265 = vmatprep.subr.mxu0 %v222
  %266 = vmatpush1.msra.mxu0 %v221
  %267 = vmatprep.subr.mxu0 %v224
  %268 = vmatpush1.msra.mxu0 %v223
  %269 = vmatprep.subr.mxu0 %v226
  %270 = vmatpush1.msra.mxu0 %v225
  %271 = vmatprep.subr.mxu0 %v228
  %272 = vmatpush1.msra.mxu0 %v227
  %273 = vmatprep.subr.mxu0 %v230
  %274 = vmatpush1.msra.mxu0 %v229
  %275 = vmatprep.subr.mxu0 %v232
  %276 = vmatpush1.msra.mxu0 %v231
  %277 = vmatprep.subr.mxu0 %v234
  %278 = vmatpush1.msra.mxu0 %v233
  %279 = vmatprep.subr.mxu0 0.0
  %280 = vmatpush1.msra.mxu0 0.0
  %281 = vmatprep.subr.mxu0 0.0
  %282 = vmatpush1.msra.mxu0 0.0
  %283 = vmatprep.subr.mxu0 0.0
  %284 = vmatpush1.msra.mxu0 0.0
  %285 = vmatprep.subr.mxu0 0.0
  %286 = vmatpush1.msra.mxu0 0.0
  %287 = vmatprep.subr.mxu0 0.0
  %288 = vmatpush1.msra.mxu0 0.0
  %289 = vmatprep.subr.mxu0 0.0
  %290 = vmatpush1.msra.mxu0 0.0
  %291 = vmatprep.subr.mxu0 0.0
  %292 = vmatpush1.msra.mxu0 0.0
  %293 = vmatprep.subr.mxu0 0.0
  %294 = vmatpush1.msra.mxu0 0.0
  %295 = vmatprep.subr.mxu0 0.0
  %296 = vmatpush1.msra.mxu0 0.0
  %297 = vmatprep.subr.mxu0 0.0
  %298 = vmatpush1.msra.mxu0 0.0
  %299 = vmatprep.subr.mxu0 0.0
  %300 = vmatpush1.msra.mxu0 0.0
  %301 = vmatprep.subr.mxu0 0.0
  %302 = vmatpush1.msra.mxu0 0.0
  %303 = vmatprep.subr.mxu0 0.0
  %304 = vmatpush1.msra.mxu0 0.0
  %305 = vmatprep.subr.mxu0 0.0
  %306 = vmatpush1.msra.mxu0 0.0
  %307 = vmatprep.subr.mxu0 0.0
  %308 = vmatpush1.msra.mxu0 0.0
  %309 = vmatprep.subr.mxu0 0.0
  %310 = vmatpush1.msra.mxu0 0.0
  %311 = vmatprep.mubr.f32.mxu0 0.0
  %312 = vmatmul.mubr.f32.gmra.mrb[0].mxu0 %v202
  %v313 = vpop.f32.mrb[0].mxu0
  %v314 = vadd.f32 %v240, %v313
  %v315 = vpop.f32.mrb[0].mxu0
  %v316 = vadd.f32 %v244, %v315
  %317 = vdwg.mxu0
  %v318 = vxor.u32 %v314, 2147483648
  %v319 = vmul.f32 %v318, 1.442695
  %v320 = vpow.pop %v319
  %v321 = vadd.f32 %v320, 1.0
  %v322 = vrcp.pop %v321
  %v323 = vmul.f32 1.0, %v322
  %v324 = vtanh.pop %v316
  %v325 = vxor.u32 %v316, 2147483648
  %v326 = vmul.f32 %v325, 1.442695
  %v327 = vpow.pop %v326
  %v328 = vadd.f32 %v327, 1.0
  %v329 = vrcp.pop %v328
  %v330 = vmul.f32 1.0, %v329
  %v331 = vld [vmem:[#allocation3] sm:$0xff]
  %333 = vrot.lane.b32.xlu0 %v331, 64
  %v334 = vpop.permute.xlu0 %333
  %v336 = vmul.f32 %v323, %v334
  %v337 = vmul.f32 %v323, %v324
  %339 = vrot.lane.b32.xlu0 %v337, 64
  %v340 = vpop.permute.xlu0 %339
  %v342 = vadd.f32 %v336, %v340
  %v343 = vtanh.pop %v342
  %v344 = vmul.f32 %v330, %v343
  %346 = vrot.lane.b32.xlu0 %v342, 64
  %v347 = vpop.permute.xlu0 %346
  %349 = vst.msk [vmem:[#allocation3] sm:$0xff] %vm14, %v347
  %351 = vrot.lane.b32.xlu0 %v344, 64
  %v352 = vpop.permute.xlu0 %351
  %354 = vst.msk [vmem:[#allocation2] sm:$0xff] %vm14, %v352
  %s355 = scalar_lea.vmem %s3, 8
  %356 = vst.msk [vmem:[%s355] sm:$0xff] %vm29, %v352
  %s357 = scalar_lea.vmem %s3, 16
  %358 = vst.msk [vmem:[%s357] sm:$0xff] %vm186, %v352
  %v359 = vld [vmem:[%s190] sm:$0xff]
  %v360 = vld [vmem:[%s188] sm:$0xff]
  %v361 = vld [vmem:[#allocation2] sm:$0xff]
  %363 = vrot.lane.b32.xlu0 %v360, 32
  %v364 = vpop.permute.xlu0 %363
  %367 = vrot.lane.b32.xlu0 %v361, 64
  %v368 = vpop.permute.xlu0 %367
  %v370 = vsel %vm29, %v359, %v364
  %v371 = vsel %vm14, %v370, %v368
  %v372 = vld [vmem:[%s1] sm:$0xff]
  %v373 = vld [vmem:[%s1 + $0x8] sm:$0xff]
  %v374 = vld [vmem:[%s1 + $0x10] sm:$0xff]
  %v375 = vld [vmem:[%s1 + $0x18] sm:$0xff]
  %v376 = vld [vmem:[%s1 + $0x20] sm:$0xff]
  %v377 = vld [vmem:[%s1 + $0x28] sm:$0xff]
  %v378 = vld [vmem:[%s1 + $0x30] sm:$0xff]
  %v379 = vld [vmem:[%s1 + $0x38] sm:$0xff]
  %v380 = vld [vmem:[%s1 + $0x40] sm:$0xff]
  %v381 = vld [vmem:[%s1 + $0x48] sm:$0xff]
  %v382 = vld [vmem:[%s1 + $0x50] sm:$0xff]
  %v383 = vld [vmem:[%s1 + $0x58] sm:$0xff]
  %v384 = vld [vmem:[%s1 + $0x60] sm:$0xff]
  %v385 = vld [vmem:[%s1 + $0x68] sm:$0xff]
  %v386 = vld [vmem:[%s1 + $0x70] sm:$0xff]
  %v387 = vld [vmem:[%s1 + $0x78] sm:$0xff]
  %v388 = vld [vmem:[%s1 + $0x80] sm:$0xff]
  %v389 = vld [vmem:[%s1 + $0x88] sm:$0xff]
  %v390 = vld [vmem:[%s1 + $0x90] sm:$0xff]
  %v391 = vld [vmem:[%s1 + $0x98] sm:$0xff]
  %v392 = vld [vmem:[%s1 + $0xa0] sm:$0xff]
  %v393 = vld [vmem:[%s1 + $0xa8] sm:$0xff]
  %v394 = vld [vmem:[%s1 + $0xb0] sm:$0xff]
  %v395 = vld [vmem:[%s1 + $0xb8] sm:$0xff]
  %v396 = vld [vmem:[%s1 + $0xc0] sm:$0xff]
  %v397 = vld [vmem:[%s1 + $0xc8] sm:$0xff]
  %v398 = vld [vmem:[%s1 + $0xd0] sm:$0xff]
  %v399 = vld [vmem:[%s1 + $0xd8] sm:$0xff]
  %v400 = vld [vmem:[%s1 + $0xe0] sm:$0xff]
  %v401 = vld [vmem:[%s1 + $0xe8] sm:$0xff]
  %v402 = vld [vmem:[%s1 + $0xf0] sm:$0xff]
  %v403 = vld [vmem:[%s1 + $0xf8] sm:$0xff]
  %v404 = vld [vmem:[%s2] sm:$0x3]
  %v406 = vlaneseq
  %v407 = vshrl.u32 %v406, 7
  %v408 = vsub.s32 0, %v407
  %v409 = vrot.slane %v404, %v408
  %v410 = vlaneseq
  %v411 = vshrl.u32 %v410, 7
  %v412 = vsub.s32 1, %v411
  %v413 = vrot.slane %v404, %v412
  %416 = vmatprep.subr.mxu0 %v373
  %417 = vmatpush1.msra.mxu0 %v372
  %418 = vmatprep.subr.mxu0 %v375
  %419 = vmatpush1.msra.mxu0 %v374
  %420 = vmatprep.subr.mxu0 %v377
  %421 = vmatpush1.msra.mxu0 %v376
  %422 = vmatprep.subr.mxu0 %v379
  %423 = vmatpush1.msra.mxu0 %v378
  %424 = vmatprep.subr.mxu0 %v381
  %425 = vmatpush1.msra.mxu0 %v380
  %426 = vmatprep.subr.mxu0 %v383
  %427 = vmatpush1.msra.mxu0 %v382
  %428 = vmatprep.subr.mxu0 %v385
  %429 = vmatpush1.msra.mxu0 %v384
  %430 = vmatprep.subr.mxu0 %v387
  %431 = vmatpush1.msra.mxu0 %v386
  %432 = vmatprep.subr.mxu0 %v389
  %433 = vmatpush1.msra.mxu0 %v388
  %434 = vmatprep.subr.mxu0 %v391
  %435 = vmatpush1.msra.mxu0 %v390
  %436 = vmatprep.subr.mxu0 %v393
  %437 = vmatpush1.msra.mxu0 %v392
  %438 = vmatprep.subr.mxu0 %v395
  %439 = vmatpush1.msra.mxu0 %v394
  %440 = vmatprep.subr.mxu0 %v397
  %441 = vmatpush1.msra.mxu0 %v396
  %442 = vmatprep.subr.mxu0 %v399
  %443 = vmatpush1.msra.mxu0 %v398
  %444 = vmatprep.subr.mxu0 %v401
  %445 = vmatpush1.msra.mxu0 %v400
  %446 = vmatprep.subr.mxu0 %v403
  %447 = vmatpush1.msra.mxu0 %v402
  %448 = vmatprep.subr.mxu0 0.0
  %449 = vmatpush1.msra.mxu0 0.0
  %450 = vmatprep.subr.mxu0 0.0
  %451 = vmatpush1.msra.mxu0 0.0
  %452 = vmatprep.subr.mxu0 0.0
  %453 = vmatpush1.msra.mxu0 0.0
  %454 = vmatprep.subr.mxu0 0.0
  %455 = vmatpush1.msra.mxu0 0.0
  %456 = vmatprep.subr.mxu0 0.0
  %457 = vmatpush1.msra.mxu0 0.0
  %458 = vmatprep.subr.mxu0 0.0
  %459 = vmatpush1.msra.mxu0 0.0
  %460 = vmatprep.subr.mxu0 0.0
  %461 = vmatpush1.msra.mxu0 0.0
  %462 = vmatprep.subr.mxu0 0.0
  %463 = vmatpush1.msra.mxu0 0.0
  %464 = vmatprep.subr.mxu0 0.0
  %465 = vmatpush1.msra.mxu0 0.0
  %466 = vmatprep.subr.mxu0 0.0
  %467 = vmatpush1.msra.mxu0 0.0
  %468 = vmatprep.subr.mxu0 0.0
  %469 = vmatpush1.msra.mxu0 0.0
  %470 = vmatprep.subr.mxu0 0.0
  %471 = vmatpush1.msra.mxu0 0.0
  %472 = vmatprep.subr.mxu0 0.0
  %473 = vmatpush1.msra.mxu0 0.0
  %474 = vmatprep.subr.mxu0 0.0
  %475 = vmatpush1.msra.mxu0 0.0
  %476 = vmatprep.subr.mxu0 0.0
  %477 = vmatpush1.msra.mxu0 0.0
  %478 = vmatprep.subr.mxu0 0.0
  %479 = vmatpush1.msra.mxu0 0.0
  %480 = vmatprep.mubr.f32.mxu0 0.0
  %481 = vmatmul.mubr.f32.gmra.mrb[0].mxu0 %v371
  %v482 = vpop.f32.mrb[0].mxu0
  %v483 = vadd.f32 %v409, %v482
  %v484 = vpop.f32.mrb[0].mxu0
  %v485 = vadd.f32 %v413, %v484
  %486 = vdwg.mxu0
  %v487 = vxor.u32 %v483, 2147483648
  %v488 = vmul.f32 %v487, 1.442695
  %v489 = vpow.pop %v488
  %v490 = vadd.f32 %v489, 1.0
  %v491 = vrcp.pop %v490
  %v492 = vmul.f32 1.0, %v491
  %v493 = vtanh.pop %v485
  %v494 = vxor.u32 %v485, 2147483648
  %v495 = vmul.f32 %v494, 1.442695
  %v496 = vpow.pop %v495
  %v497 = vadd.f32 %v496, 1.0
  %v498 = vrcp.pop %v497
  %v499 = vmul.f32 1.0, %v498
  %v500 = vld [vmem:[#allocation3] sm:$0xff]
  %502 = vrot.lane.b32.xlu0 %v500, 64
  %v503 = vpop.permute.xlu0 %502
  %v505 = vmul.f32 %v492, %v503
  %v506 = vmul.f32 %v492, %v493
  %508 = vrot.lane.b32.xlu0 %v506, 64
  %v509 = vpop.permute.xlu0 %508
  %v511 = vadd.f32 %v505, %v509
  %v512 = vtanh.pop %v511
  %v513 = vmul.f32 %v499, %v512
  %515 = vrot.lane.b32.xlu0 %v511, 64
  %v516 = vpop.permute.xlu0 %515
  %518 = vst.msk [vmem:[#allocation3] sm:$0xff] %vm14, %v516
  %520 = vrot.lane.b32.xlu0 %v513, 64
  %v521 = vpop.permute.xlu0 %520
  %523 = vst.msk [vmem:[#allocation2] sm:$0xff] %vm14, %v521
  %524 = vst.msk [vmem:[%s357] sm:$0xff] %vm29, %v521
  %525 = vst.msk [vmem:[%s355] sm:$0xff] %vm186, %v521
  %v526 = vld [vmem:[%s18] sm:$0xff]
  %v527 = vld [vmem:[%s0] sm:$0xff]
  %v528 = vld [vmem:[#allocation2] sm:$0xff]
  %530 = vrot.lane.b32.xlu0 %v527, 32
  %v531 = vpop.permute.xlu0 %530
  %534 = vrot.lane.b32.xlu0 %v528, 64
  %v535 = vpop.permute.xlu0 %534
  %v537 = vsel %vm29, %v526, %v531
  %v538 = vsel %vm14, %v537, %v535
  %v539 = vld [vmem:[%s1] sm:$0xff]
  %v540 = vld [vmem:[%s1 + $0x8] sm:$0xff]
  %v541 = vld [vmem:[%s1 + $0x10] sm:$0xff]
  %v542 = vld [vmem:[%s1 + $0x18] sm:$0xff]
  %v543 = vld [vmem:[%s1 + $0x20] sm:$0xff]
  %v544 = vld [vmem:[%s1 + $0x28] sm:$0xff]
  %v545 = vld [vmem:[%s1 + $0x30] sm:$0xff]
  %v546 = vld [vmem:[%s1 + $0x38] sm:$0xff]
  %v547 = vld [vmem:[%s1 + $0x40] sm:$0xff]
  %v548 = vld [vmem:[%s1 + $0x48] sm:$0xff]
  %v549 = vld [vmem:[%s1 + $0x50] sm:$0xff]
  %v550 = vld [vmem:[%s1 + $0x58] sm:$0xff]
  %v551 = vld [vmem:[%s1 + $0x60] sm:$0xff]
  %v552 = vld [vmem:[%s1 + $0x68] sm:$0xff]
  %v553 = vld [vmem:[%s1 + $0x70] sm:$0xff]
  %v554 = vld [vmem:[%s1 + $0x78] sm:$0xff]
  %v555 = vld [vmem:[%s1 + $0x80] sm:$0xff]
  %v556 = vld [vmem:[%s1 + $0x88] sm:$0xff]
  %v557 = vld [vmem:[%s1 + $0x90] sm:$0xff]
  %v558 = vld [vmem:[%s1 + $0x98] sm:$0xff]
  %v559 = vld [vmem:[%s1 + $0xa0] sm:$0xff]
  %v560 = vld [vmem:[%s1 + $0xa8] sm:$0xff]
  %v561 = vld [vmem:[%s1 + $0xb0] sm:$0xff]
  %v562 = vld [vmem:[%s1 + $0xb8] sm:$0xff]
  %v563 = vld [vmem:[%s1 + $0xc0] sm:$0xff]
  %v564 = vld [vmem:[%s1 + $0xc8] sm:$0xff]
  %v565 = vld [vmem:[%s1 + $0xd0] sm:$0xff]
  %v566 = vld [vmem:[%s1 + $0xd8] sm:$0xff]
  %v567 = vld [vmem:[%s1 + $0xe0] sm:$0xff]
  %v568 = vld [vmem:[%s1 + $0xe8] sm:$0xff]
  %v569 = vld [vmem:[%s1 + $0xf0] sm:$0xff]
  %v570 = vld [vmem:[%s1 + $0xf8] sm:$0xff]
  %v571 = vld [vmem:[%s2] sm:$0x3]
  %v573 = vlaneseq
  %v574 = vshrl.u32 %v573, 7
  %v575 = vsub.s32 0, %v574
  %v576 = vrot.slane %v571, %v575
  %v577 = vlaneseq
  %v578 = vshrl.u32 %v577, 7
  %v579 = vsub.s32 1, %v578
  %v580 = vrot.slane %v571, %v579
  %583 = vmatprep.subr.mxu0 %v540
  %584 = vmatpush1.msra.mxu0 %v539
  %585 = vmatprep.subr.mxu0 %v542
  %586 = vmatpush1.msra.mxu0 %v541
  %587 = vmatprep.subr.mxu0 %v544
  %588 = vmatpush1.msra.mxu0 %v543
  %589 = vmatprep.subr.mxu0 %v546
  %590 = vmatpush1.msra.mxu0 %v545
  %591 = vmatprep.subr.mxu0 %v548
  %592 = vmatpush1.msra.mxu0 %v547
  %593 = vmatprep.subr.mxu0 %v550
  %594 = vmatpush1.msra.mxu0 %v549
  %595 = vmatprep.subr.mxu0 %v552
  %596 = vmatpush1.msra.mxu0 %v551
  %597 = vmatprep.subr.mxu0 %v554
  %598 = vmatpush1.msra.mxu0 %v553
  %599 = vmatprep.subr.mxu0 %v556
  %600 = vmatpush1.msra.mxu0 %v555
  %601 = vmatprep.subr.mxu0 %v558
  %602 = vmatpush1.msra.mxu0 %v557
  %603 = vmatprep.subr.mxu0 %v560
  %604 = vmatpush1.msra.mxu0 %v559
  %605 = vmatprep.subr.mxu0 %v562
  %606 = vmatpush1.msra.mxu0 %v561
  %607 = vmatprep.subr.mxu0 %v564
  %608 = vmatpush1.msra.mxu0 %v563
  %609 = vmatprep.subr.mxu0 %v566
  %610 = vmatpush1.msra.mxu0 %v565
  %611 = vmatprep.subr.mxu0 %v568
  %612 = vmatpush1.msra.mxu0 %v567
  %613 = vmatprep.subr.mxu0 %v570
  %614 = vmatpush1.msra.mxu0 %v569
  %615 = vmatprep.subr.mxu0 0.0
  %616 = vmatpush1.msra.mxu0 0.0
  %617 = vmatprep.subr.mxu0 0.0
  %618 = vmatpush1.msra.mxu0 0.0
  %619 = vmatprep.subr.mxu0 0.0
  %620 = vmatpush1.msra.mxu0 0.0
  %621 = vmatprep.subr.mxu0 0.0
  %622 = vmatpush1.msra.mxu0 0.0
  %623 = vmatprep.subr.mxu0 0.0
  %624 = vmatpush1.msra.mxu0 0.0
  %625 = vmatprep.subr.mxu0 0.0
  %626 = vmatpush1.msra.mxu0 0.0
  %627 = vmatprep.subr.mxu0 0.0
  %628 = vmatpush1.msra.mxu0 0.0
  %629 = vmatprep.subr.mxu0 0.0
  %630 = vmatpush1.msra.mxu0 0.0
  %631 = vmatprep.subr.mxu0 0.0
  %632 = vmatpush1.msra.mxu0 0.0
  %633 = vmatprep.subr.mxu0 0.0
  %634 = vmatpush1.msra.mxu0 0.0
  %635 = vmatprep.subr.mxu0 0.0
  %636 = vmatpush1.msra.mxu0 0.0
  %637 = vmatprep.subr.mxu0 0.0
  %638 = vmatpush1.msra.mxu0 0.0
  %639 = vmatprep.subr.mxu0 0.0
  %640 = vmatpush1.msra.mxu0 0.0
  %641 = vmatprep.subr.mxu0 0.0
  %642 = vmatpush1.msra.mxu0 0.0
  %643 = vmatprep.subr.mxu0 0.0
  %644 = vmatpush1.msra.mxu0 0.0
  %645 = vmatprep.subr.mxu0 0.0
  %646 = vmatpush1.msra.mxu0 0.0
  %647 = vmatprep.mubr.f32.mxu0 0.0
  %648 = vmatmul.mubr.f32.gmra.mrb[0].mxu0 %v538
  %v649 = vpop.f32.mrb[0].mxu0
  %v650 = vadd.f32 %v576, %v649
  %v651 = vpop.f32.mrb[0].mxu0
  %v652 = vadd.f32 %v580, %v651
  %653 = vdwg.mxu0
  %v654 = vxor.u32 %v650, 2147483648
  %v655 = vmul.f32 %v654, 1.442695
  %v656 = vpow.pop %v655
  %v657 = vadd.f32 %v656, 1.0
  %v658 = vrcp.pop %v657
  %v659 = vmul.f32 1.0, %v658
  %v660 = vtanh.pop %v652
  %v661 = vxor.u32 %v652, 2147483648
  %v662 = vmul.f32 %v661, 1.442695
  %v663 = vpow.pop %v662
  %v664 = vadd.f32 %v663, 1.0
  %v665 = vrcp.pop %v664
  %v666 = vmul.f32 1.0, %v665
  %v667 = vld [vmem:[#allocation3] sm:$0xff]
  %669 = vrot.lane.b32.xlu0 %v667, 64
  %v670 = vpop.permute.xlu0 %669
  %v672 = vmul.f32 %v659, %v670
  %v673 = vmul.f32 %v659, %v660
  %675 = vrot.lane.b32.xlu0 %v673, 64
  %v676 = vpop.permute.xlu0 %675
  %v678 = vadd.f32 %v672, %v676
  %v679 = vtanh.pop %v678
  %v680 = vmul.f32 %v666, %v679
  %682 = vrot.lane.b32.xlu0 %v678, 64
  %v683 = vpop.permute.xlu0 %682
  %685 = vst.msk [vmem:[#allocation3] sm:$0xff] %vm14, %v683
  %687 = vrot.lane.b32.xlu0 %v680, 64
  %v688 = vpop.permute.xlu0 %687
  %690 = vst.msk [vmem:[#allocation2] sm:$0xff] %vm14, %v688
  %691 = vst.msk [vmem:[%s185] sm:$0xff] %vm29, %v688
  %692 = vst.msk [vmem:[%s3] sm:$0xff] %vm186, %v688
  // Predicated region
  $region14: #{spectral_unit_forward.7} parent=0 // pred_check
    _
  $region15: #{spectral_unit_forward.7} parent=0 // pred_check_branch
    %694 = sbr.rel (0) target = $region17
  $region16: #{spectral_unit_forward.7} parent=0 // pred_region
    _
  $region17: #{spectral_unit_forward.7} parent=0 // pred_fallthru
    _
  // Predicated region
  $region18: #{spectral_unit_forward.7} parent=0 // pred_check
    _
  $region19: #{spectral_unit_forward.7} parent=0 // pred_check_branch
    %696 = sbr.rel (0) target = $region21
  $region20: #{spectral_unit_forward.7} parent=0 // pred_region
    _
  $region21: #{spectral_unit_forward.7} parent=0 // pred_fallthru
    _

// kernel: spectral_unit_forward.9
$region0: #{spectral_unit_forward.9}
  #allocation0 [shape = 'u32[]', space=smem, size = 0x4, offset = 0x4, fixed_abs, tag = 'smem constant byte address 0x4 - core index']
  #allocation1 [shape = 'u32[144,128]{1,0:T(1,128)}', space=vmem, size = 0x12000, scoped, tag = 'internal scratch']
  %s0 = inlined_call_operand.vmem [shape: f32[32,32], index: 0, kind: input, shape index: {}]
  %s1 = inlined_call_operand.vmem [shape: f32[1,32], index: 1, kind: input, shape index: {}]
  %s2 = inlined_call_operand.vmem [shape: f32[1,32], index: 2, kind: input, shape index: {}]
  %s3 = inlined_call_operand.vmem [shape: f32[32,128], index: 3, kind: input, shape index: {}]
  %s4 = inlined_call_operand.vmem [shape: f32[1,128], index: 4, kind: input, shape index: {}]
  %s5 = inlined_call_operand.vmem [shape: f32[128,32], index: 5, kind: input, shape index: {}]
  %s6 = inlined_call_operand.vmem [shape: f32[1,32], index: 6, kind: input, shape index: {}]
  %s7 = inlined_call_operand.hbm [shape: f32[32,32], index: 7, kind: output, shape index: {}]
  %s8 = sld [smem:[#allocation0]]
  $region38: #{spectral_unit_forward.9} parent=0
    _
  %s10 = ssub.s32 1, %s8
  %s11 = scalar_select 0, %s10, %s8
  $region1: #{spectral_unit_forward.9} parent=0
    #allocation2 [shape = 'u8[16384]{0}', space=vmem, size = 0x4000, scoped, tag = 'output window, operand 0, single buffered']
    #allocation3 [shape = 's32[1]{0}', space=sflag, size = 0x4, scoped, tag = 'scoped memory for spectral_unit_forward.9']
    %12 = vsyncpa [#allocation3], 0
    // Predicated region
    $region2: #{spectral_unit_forward.9} parent=1 // pred_check
      _
    $region3: #{spectral_unit_forward.9} parent=1 // pred_check_branch
      %14 = sbr.rel (0) target = $region5
    $region4: #{spectral_unit_forward.9} parent=1 // pred_region
      _
    $region5: #{spectral_unit_forward.9} parent=1 // pred_fallthru
      _
    // Predicated region
    $region6: #{spectral_unit_forward.9} parent=1 // pred_check
      _
    $region7: #{spectral_unit_forward.9} parent=1 // pred_check_branch
      %16 = sbr.rel (0) target = $region9
    $region8: #{spectral_unit_forward.9} parent=1 // pred_region
      _
    $region9: #{spectral_unit_forward.9} parent=1 // pred_fallthru
      _
    // Predicated region
    $region10: #{spectral_unit_forward.9} parent=1 // pred_check
      _
    $region11: #{spectral_unit_forward.9} parent=1 // pred_check_branch
      %18 = sbr.rel (0) target = $region13
    $region12: #{spectral_unit_forward.9} parent=1 // pred_region
      _
    $region13: #{spectral_unit_forward.9} parent=1 // pred_fallthru
      _
    // Predicated region
    $region14: #{spectral_unit_forward.9} parent=1 // pred_check
      _
    $region15: #{spectral_unit_forward.9} parent=1 // pred_check_branch
      %20 = sbr.rel (0) target = $region17
    $region16: #{spectral_unit_forward.9} parent=1 // pred_region
      _
    $region17: #{spectral_unit_forward.9} parent=1 // pred_fallthru
      _
    // Predicated region
    $region18: #{spectral_unit_forward.9} parent=1 // pred_check
      _
    $region19: #{spectral_unit_forward.9} parent=1 // pred_check_branch
      %22 = sbr.rel (0) target = $region21
    $region20: #{spectral_unit_forward.9} parent=1 // pred_region
      _
    $region21: #{spectral_unit_forward.9} parent=1 // pred_fallthru
      _
    // Predicated region
    $region22: #{spectral_unit_forward.9} parent=1 // pred_check
      _
    $region23: #{spectral_unit_forward.9} parent=1 // pred_check_branch
      %24 = sbr.rel (0) target = $region25
    $region24: #{spectral_unit_forward.9} parent=1 // pred_region
      _
    $region25: #{spectral_unit_forward.9} parent=1 // pred_fallthru
      _
    // Predicated region
    $region26: #{spectral_unit_forward.9} parent=1 // pred_check
      _
    $region27: #{spectral_unit_forward.9} parent=1 // pred_check_branch
      %26 = sbr.rel (0) target = $region29
    $region28: #{spectral_unit_forward.9} parent=1 // pred_region
      _
    $region29: #{spectral_unit_forward.9} parent=1 // pred_fallthru
      _
    %v27 = vld [vmem:[%s0] sm:$0xff]
    %v28 = vld [vmem:[%s0 + $0x8] sm:$0xff]
    %v29 = vld [vmem:[%s0 + $0x10] sm:$0xff]
    %v30 = vld [vmem:[%s0 + $0x18] sm:$0xff]
    %vm31 = vcmask 261120
    %v32 = vsel %vm31, %v27, 0.0
    %33 = vadd.xlane.f32.xlu0 %v32
    %v34 = vpop.xlane.xlu0 %33
    %v35 = vsel %vm31, %v28, 0.0
    %36 = vadd.xlane.f32.xlu0 %v35
    %v37 = vpop.xlane.xlu0 %36
    %v38 = vsel %vm31, %v29, 0.0
    %39 = vadd.xlane.f32.xlu0 %v38
    %v40 = vpop.xlane.xlu0 %39
    %v41 = vsel %vm31, %v30, 0.0
    %42 = vadd.xlane.f32.xlu0 %v41
    %v43 = vpop.xlane.xlu0 %42
    %v44 = vrcp.pop 32.0
    %v45 = vmul.f32 %v34, %v44
    %v46 = vmul.f32 %v37, %v44
    %v47 = vmul.f32 %v40, %v44
    %v48 = vmul.f32 %v43, %v44
    %v49 = vsub.f32 %v27, %v45
    %v50 = vsub.f32 %v28, %v46
    %v51 = vsub.f32 %v29, %v47
    %v52 = vsub.f32 %v30, %v48
    %v53 = vmul.f32 %v49, %v49
    %v54 = vmul.f32 %v50, %v50
    %v55 = vmul.f32 %v51, %v51
    %v56 = vmul.f32 %v52, %v52
    %v57 = vsel %vm31, %v53, 0.0
    %58 = vadd.xlane.f32.xlu0 %v57
    %v59 = vpop.xlane.xlu0 %58
    %v60 = vsel %vm31, %v54, 0.0
    %61 = vadd.xlane.f32.xlu0 %v60
    %v62 = vpop.xlane.xlu0 %61
    %v63 = vsel %vm31, %v55, 0.0
    %64 = vadd.xlane.f32.xlu0 %v63
    %v65 = vpop.xlane.xlu0 %64
    %v66 = vsel %vm31, %v56, 0.0
    %67 = vadd.xlane.f32.xlu0 %v66
    %v68 = vpop.xlane.xlu0 %67
    %v69 = vmul.f32 %v59, %v44
    %v70 = vmul.f32 %v62, %v44
    %v71 = vmul.f32 %v65, %v44
    %v72 = vmul.f32 %v68, %v44
    %v73 = vadd.f32 %v69, 1e-05
    %v74 = vadd.f32 %v70, 1e-05
    %v75 = vadd.f32 %v71, 1e-05
    %v76 = vadd.f32 %v72, 1e-05
    %v77 = vrsqrt.pop %v73
    %v78 = vrsqrt.pop %v74
    %v79 = vrsqrt.pop %v75
    %v80 = vrsqrt.pop %v76
    %v81 = vmul.f32 %v49, %v77
    %v82 = vmul.f32 %v50, %v78
    %v83 = vmul.f32 %v51, %v79
    %v84 = vmul.f32 %v52, %v80
    %v85 = vld [vmem:[%s1] sm:$0x1]
    %v87 = vlaneseq
    %v88 = vshrl.u32 %v87, 7
    %v89 = vsub.s32 0, %v88
    %v90 = vrot.slane %v85, %v89
    %v92 = vmul.f32 %v81, %v90
    %v93 = vmul.f32 %v82, %v90
    %v94 = vmul.f32 %v83, %v90
    %v95 = vmul.f32 %v84, %v90
    %v96 = vld [vmem:[%s2] sm:$0x1]
    %v98 = vlaneseq
    %v99 = vshrl.u32 %v98, 7
    %v100 = vsub.s32 0, %v99
    %v101 = vrot.slane %v96, %v100
    %v103 = vadd.f32 %v92, %v101
    %v104 = vadd.f32 %v93, %v101
    %v105 = vadd.f32 %v94, %v101
    %v106 = vadd.f32 %v95, %v101
    %v107 = vld [vmem:[%s3] sm:$0xff]
    %v108 = vld [vmem:[%s3 + $0x8] sm:$0xff]
    %v109 = vld [vmem:[%s3 + $0x10] sm:$0xff]
    %v110 = vld [vmem:[%s3 + $0x18] sm:$0xff]
    %v111 = vld [vmem:[%s4] sm:$0x1]
    %v113 = vlaneseq
    %v114 = vshrl.u32 %v113, 7
    %v115 = vsub.s32 0, %v114
    %v116 = vrot.slane %v111, %v115
    %v119 = vsel %vm31, %v103, 0
    %v122 = vsel %vm31, %v104, 0
    %v125 = vsel %vm31, %v105, 0
    %v128 = vsel %vm31, %v106, 0
    %130 = vmatprep.subr.mxu0 0.0
    %131 = vmatpush1.msra.mxu0 %v107
    %132 = vmatprep.subr.mxu0 0.0
    %133 = vmatpush1.msra.mxu0 %v108
    %134 = vmatprep.subr.mxu0 0.0
    %135 = vmatpush1.msra.mxu0 %v109
    %136 = vmatprep.subr.mxu0 0.0
    %137 = vmatpush1.msra.mxu0 %v110
    %138 = vmatprep.subr.mxu0 0.0
    %139 = vmatpush1.msra.mxu0 0.0
    %140 = vmatprep.subr.mxu0 0.0
    %141 = vmatpush1.msra.mxu0 0.0
    %142 = vmatprep.subr.mxu0 0.0
    %143 = vmatpush1.msra.mxu0 0.0
    %144 = vmatprep.subr.mxu0 0.0
    %145 = vmatpush1.msra.mxu0 0.0
    %146 = vmatprep.subr.mxu0 0.0
    %147 = vmatpush1.msra.mxu0 0.0
    %148 = vmatprep.subr.mxu0 0.0
    %149 = vmatpush1.msra.mxu0 0.0
    %150 = vmatprep.subr.mxu0 0.0
    %151 = vmatpush1.msra.mxu0 0.0
    %152 = vmatprep.subr.mxu0 0.0
    %153 = vmatpush1.msra.mxu0 0.0
    %154 = vmatprep.subr.mxu0 0.0
    %155 = vmatpush1.msra.mxu0 0.0
    %156 = vmatprep.subr.mxu0 0.0
    %157 = vmatpush1.msra.mxu0 0.0
    %158 = vmatprep.subr.mxu0 0.0
    %159 = vmatpush1.msra.mxu0 0.0
    %160 = vmatprep.subr.mxu0 0.0
    %161 = vmatpush1.msra.mxu0 0.0
    %162 = vmatprep.subr.mxu0 0.0
    %163 = vmatpush1.msra.mxu0 0.0
    %164 = vmatprep.subr.mxu0 0.0
    %165 = vmatpush1.msra.mxu0 0.0
    %166 = vmatprep.subr.mxu0 0.0
    %167 = vmatpush1.msra.mxu0 0.0
    %168 = vmatprep.subr.mxu0 0.0
    %169 = vmatpush1.msra.mxu0 0.0
    %170 = vmatprep.subr.mxu0 0.0
    %171 = vmatpush1.msra.mxu0 0.0
    %172 = vmatprep.subr.mxu0 0.0
    %173 = vmatpush1.msra.mxu0 0.0
    %174 = vmatprep.subr.mxu0 0.0
    %175 = vmatpush1.msra.mxu0 0.0
    %176 = vmatprep.subr.mxu0 0.0
    %177 = vmatpush1.msra.mxu0 0.0
    %178 = vmatprep.subr.mxu0 0.0
    %179 = vmatpush1.msra.mxu0 0.0
    %180 = vmatprep.subr.mxu0 0.0
    %181 = vmatpush1.msra.mxu0 0.0
    %182 = vmatprep.subr.mxu0 0.0
    %183 = vmatpush1.msra.mxu0 0.0
    %184 = vmatprep.subr.mxu0 0.0
    %185 = vmatpush1.msra.mxu0 0.0
    %186 = vmatprep.subr.mxu0 0.0
    %187 = vmatpush1.msra.mxu0 0.0
    %188 = vmatprep.subr.mxu0 0.0
    %189 = vmatpush1.msra.mxu0 0.0
    %190 = vmatprep.subr.mxu0 0.0
    %191 = vmatpush1.msra.mxu0 0.0
    %192 = vmatprep.subr.mxu0 0.0
    %193 = vmatpush1.msra.mxu0 0.0
    %194 = vmatprep.mubr.f32.mxu0 0.0
    %195 = vmatmul.mubr.f32.gmra.mrb[0].mxu0 %v119
    %v196 = vpop.f32.mrb[0].mxu0
    %v197 = vadd.f32 %v116, %v196
    %v198 = vpop.f32.mrb[0].mxu0
    %199 = vmatprep.mubr.f32.mxu0 0.0
    %200 = vmatmul.mubr.f32.gmra.mrb[0].mxu0 %v122
    %v201 = vpop.f32.mrb[0].mxu0
    %v202 = vadd.f32 %v116, %v201
    %v203 = vpop.f32.mrb[0].mxu0
    %204 = vmatprep.mubr.f32.mxu0 0.0
    %205 = vmatmul.mubr.f32.gmra.mrb[0].mxu0 %v125
    %v206 = vpop.f32.mrb[0].mxu0
    %v207 = vadd.f32 %v116, %v206
    %v208 = vpop.f32.mrb[0].mxu0
    %209 = vmatprep.mubr.f32.mxu0 0.0
    %210 = vmatmul.mubr.f32.gmra.mrb[0].mxu0 %v128
    %v211 = vpop.f32.mrb[0].mxu0
    %v212 = vadd.f32 %v116, %v211
    %v213 = vpop.f32.mrb[0].mxu0
    %214 = vdwg.mxu0
    %v215 = vmul.f32 %v197, 0.5
    %v216 = vmul.f32 %v202, 0.5
    %v217 = vmul.f32 %v207, 0.5
    %v218 = vmul.f32 %v212, 0.5
    %v219 = vmul.f32 %v197, 0.044715
    %v220 = vmul.f32 %v202, 0.044715
    %v221 = vmul.f32 %v207, 0.044715
    %v222 = vmul.f32 %v212, 0.044715
    %v223 = vmul.f32 %v219, %v197
    %v224 = vmul.f32 %v220, %v202
    %v225 = vmul.f32 %v221, %v207
    %v226 = vmul.f32 %v222, %v212
    %v227 = vmul.f32 %v223, %v197
    %v228 = vmul.f32 %v224, %v202
    %v229 = vmul.f32 %v225, %v207
    %v230 = vmul.f32 %v226, %v212
    %v231 = vadd.f32 %v197, %v227
    %v232 = vadd.f32 %v202, %v228
    %v233 = vadd.f32 %v207, %v229
    %v234 = vadd.f32 %v212, %v230
    %v235 = vmul.f32 %v231, 0.7978846
    %v236 = vmul.f32 %v232, 0.7978846
    %v237 = vmul.f32 %v233, 0.7978846
    %v238 = vmul.f32 %v234, 0.7978846
    %v239 = vtanh.pop %v235
    %v240 = vtanh.pop %v236
    %v241 = vtanh.pop %v237
    %v242 = vtanh.pop %v238
    %v243 = vadd.f32 %v239, 1.0
    %v244 = vadd.f32 %v240, 1.0
    %v245 = vadd.f32 %v241, 1.0
    %v246 = vadd.f32 %v242, 1.0
    %v247 = vmul.f32 %v215, %v243
    %v248 = vmul.f32 %v216, %v244
    %v249 = vmul.f32 %v217, %v245
    %v250 = vmul.f32 %v218, %v246
    %v251 = vld [vmem:[%s5] sm:$0xff]
    %v252 = vld [vmem:[%s5 + $0x8] sm:$0xff]
    %v253 = vld [vmem:[%s5 + $0x10] sm:$0xff]
    %v254 = vld [vmem:[%s5 + $0x18] sm:$0xff]
    %v255 = vld [vmem:[%s5 + $0x20] sm:$0xff]
    %v256 = vld [vmem:[%s5 + $0x28] sm:$0xff]
    %v257 = vld [vmem:[%s5 + $0x30] sm:$0xff]
    %v258 = vld [vmem:[%s5 + $0x38] sm:$0xff]
    %v259 = vld [vmem:[%s5 + $0x40] sm:$0xff]
    %v260 = vld [vmem:[%s5 + $0x48] sm:$0xff]
    %v261 = vld [vmem:[%s5 + $0x50] sm:$0xff]
    %v262 = vld [vmem:[%s5 + $0x58] sm:$0xff]
    %v263 = vld [vmem:[%s5 + $0x60] sm:$0xff]
    %v264 = vld [vmem:[%s5 + $0x68] sm:$0xff]
    %v265 = vld [vmem:[%s5 + $0x70] sm:$0xff]
    %v266 = vld [vmem:[%s5 + $0x78] sm:$0xff]
    %v267 = vld [vmem:[%s6] sm:$0x1]
    %v269 = vlaneseq
    %v270 = vshrl.u32 %v269, 7
    %v271 = vsub.s32 0, %v270
    %v272 = vrot.slane %v267, %v271
    %274 = vmatprep.subr.mxu0 0.0
    %275 = vmatpush1.msra.mxu0 %v251
    %276 = vmatprep.subr.mxu0 0.0
    %277 = vmatpush1.msra.mxu0 %v252
    %278 = vmatprep.subr.mxu0 0.0
    %279 = vmatpush1.msra.mxu0 %v253
    %280 = vmatprep.subr.mxu0 0.0
    %281 = vmatpush1.msra.mxu0 %v254
    %282 = vmatprep.subr.mxu0 0.0
    %283 = vmatpush1.msra.mxu0 %v255
    %284 = vmatprep.subr.mxu0 0.0
    %285 = vmatpush1.msra.mxu0 %v256
    %286 = vmatprep.subr.mxu0 0.0
    %287 = vmatpush1.msra.mxu0 %v257
    %288 = vmatprep.subr.mxu0 0.0
    %289 = vmatpush1.msra.mxu0 %v258
    %290 = vmatprep.subr.mxu0 0.0
    %291 = vmatpush1.msra.mxu0 %v259
    %292 = vmatprep.subr.mxu0 0.0
    %293 = vmatpush1.msra.mxu0 %v260
    %294 = vmatprep.subr.mxu0 0.0
    %295 = vmatpush1.msra.mxu0 %v261
    %296 = vmatprep.subr.mxu0 0.0
    %297 = vmatpush1.msra.mxu0 %v262
    %298 = vmatprep.subr.mxu0 0.0
    %299 = vmatpush1.msra.mxu0 %v263
    %300 = vmatprep.subr.mxu0 0.0
    %301 = vmatpush1.msra.mxu0 %v264
    %302 = vmatprep.subr.mxu0 0.0
    %303 = vmatpush1.msra.mxu0 %v265
    %304 = vmatprep.subr.mxu0 0.0
    %305 = vmatpush1.msra.mxu0 %v266
    %306 = vmatprep.subr.mxu0 0.0
    %307 = vmatpush1.msra.mxu0 0.0
    %308 = vmatprep.subr.mxu0 0.0
    %309 = vmatpush1.msra.mxu0 0.0
    %310 = vmatprep.subr.mxu0 0.0
    %311 = vmatpush1.msra.mxu0 0.0
    %312 = vmatprep.subr.mxu0 0.0
    %313 = vmatpush1.msra.mxu0 0.0
    %314 = vmatprep.subr.mxu0 0.0
    %315 = vmatpush1.msra.mxu0 0.0
    %316 = vmatprep.subr.mxu0 0.0
    %317 = vmatpush1.msra.mxu0 0.0
    %318 = vmatprep.subr.mxu0 0.0
    %319 = vmatpush1.msra.mxu0 0.0
    %320 = vmatprep.subr.mxu0 0.0
    %321 = vmatpush1.msra.mxu0 0.0
    %322 = vmatprep.subr.mxu0 0.0
    %323 = vmatpush1.msra.mxu0 0.0
    %324 = vmatprep.subr.mxu0 0.0
    %325 = vmatpush1.msra.mxu0 0.0
    %326 = vmatprep.subr.mxu0 0.0
    %327 = vmatpush1.msra.mxu0 0.0
    %328 = vmatprep.subr.mxu0 0.0
    %329 = vmatpush1.msra.mxu0 0.0
    %330 = vmatprep.subr.mxu0 0.0
    %331 = vmatpush1.msra.mxu0 0.0
    %332 = vmatprep.subr.mxu0 0.0
    %333 = vmatpush1.msra.mxu0 0.0
    %334 = vmatprep.subr.mxu0 0.0
    %335 = vmatpush1.msra.mxu0 0.0
    %336 = vmatprep.subr.mxu0 0.0
    %337 = vmatpush1.msra.mxu0 0.0
    %338 = vmatprep.mubr.f32.mxu0 0.0
    %339 = vmatmul.mubr.f32.gmra.mrb[0].mxu0 %v247
    %v340 = vpop.f32.mrb[0].mxu0
    %v341 = vadd.f32 %v272, %v340
    %v342 = vpop.f32.mrb[0].mxu0
    %343 = vmatprep.mubr.f32.mxu0 0.0
    %344 = vmatmul.mubr.f32.gmra.mrb[0].mxu0 %v248
    %v345 = vpop.f32.mrb[0].mxu0
    %v346 = vadd.f32 %v272, %v345
    %v347 = vpop.f32.mrb[0].mxu0
    %348 = vmatprep.mubr.f32.mxu0 0.0
    %349 = vmatmul.mubr.f32.gmra.mrb[0].mxu0 %v249
    %v350 = vpop.f32.mrb[0].mxu0
    %v351 = vadd.f32 %v272, %v350
    %v352 = vpop.f32.mrb[0].mxu0
    %353 = vmatprep.mubr.f32.mxu0 0.0
    %354 = vmatmul.mubr.f32.gmra.mrb[0].mxu0 %v250
    %v355 = vpop.f32.mrb[0].mxu0
    %v356 = vadd.f32 %v272, %v355
    %v357 = vpop.f32.mrb[0].mxu0
    %358 = vdwg.mxu0
    %v359 = vadd.f32 %v341, %v27
    %v360 = vadd.f32 %v346, %v28
    %v361 = vadd.f32 %v351, %v29
    %v362 = vadd.f32 %v356, %v30
    %363 = vst.msk [vmem:[#allocation2] sm:$0xff] %vm31, %v359
    %364 = vst.msk [vmem:[#allocation2 + $0x8] sm:$0xff] %vm31, %v360
    %365 = vst.msk [vmem:[#allocation2 + $0x10] sm:$0xff] %vm31, %v361
    %366 = vst.msk [vmem:[#allocation2 + $0x18] sm:$0xff] %vm31, %v362
    // Predicated region
    $region30: #{spectral_unit_forward.9} parent=1 // pred_check
      _
    $region31: #{spectral_unit_forward.9} parent=1 // pred_check_branch
      %368 = sbr.rel (0) target = $region33
    $region32: #{spectral_unit_forward.9} parent=1 // pred_region
      %s370 = ssub.s32 512, 512
      %371 = vsyncadd [#allocation3], %s370
      %s372 = sshll.u32 [#allocation2], 4
      %s373 = int_to_ptr.vmem [resolvable:$true] %s372
      %378 = dma.vmem_to_hbm [thread:$0]  %s373, 512, %s7, [#allocation3], 128, 128, 8
    $region33: #{spectral_unit_forward.9} parent=1 // pred_fallthru
      _
    // Predicated region
    $region34: #{spectral_unit_forward.9} parent=1 // pred_check
      _
    $region35: #{spectral_unit_forward.9} parent=1 // pred_check_branch
      %380 = sbr.rel (0) target = $region37
    $region36: #{spectral_unit_forward.9} parent=1 // pred_region
      %381 = dma.done [#allocation3], 512
    $region37: #{spectral_unit_forward.9} parent=1 // pred_fallthru
      _
    %382 = vsyncpa [#allocation3], 1

</llo_original>
